<compile_context>
chip_gen: v7x
topology: tpu7x:2x2x1
jax: 0.10.0
libtpu: 0.0.40
codegen_flags: <defaults>
</compile_context>

<pallas_src>
import jax
import jax.numpy as jnp
from jax.experimental import pallas as pl
from jax.experimental.pallas import tpu as pltpu


# ----------------------------------------------------------------------------
# Fully fused network kernel: conv1 -> pool -> conv2 -> pool -> conv3 -> pool
# -> flatten -> fc1 -> fc2, all in VMEM.
# ----------------------------------------------------------------------------
def _classifier_kernel(p1_ref, w1_ref, b1_ref, w2_ref, b2_ref, w3_ref, b3_ref,
                       wf1_ref, bf1_ref, wf2_ref, bf2_ref, o_ref):
    f32 = jnp.float32
    bf16 = jnp.bfloat16

    def dot(a, b):
        # bf16 MXU operands, f32 accumulation.
        return jnp.dot(a.astype(bf16), b.astype(bf16), preferred_element_type=f32)

    def maxpool2(y):
        # MaxPool1d(2) over adjacent rows.  Rows are (example, length)-major
        # and every per-example row count is even, so pairs never cross
        # example boundaries.
        m, n = y.shape
        return y.reshape(m // 2, 2, n).max(axis=1)

    def deinterleave2(h):
        # Even/odd rows (the two taps of a k=2, s=2 conv) via a sublane
        # regroup -- no O(B^2) gather matmuls.
        m, n = h.shape
        hr = h.reshape(m // 2, 2, n)
        return hr[:, 0, :], hr[:, 1, :]

    # ---- Conv1d(8, 64, k=3, s=1): one K=24 matmul on pre-built lane-dense
    #      im2col patches, then MaxPool(2) -> bias -> ReLU. ----
    y = dot(p1_ref[...], w1_ref[...])                               # (eb*96, 64)
    h = jnp.maximum(maxpool2(y) + b1_ref[...], 0.0)                 # (eb*48, 64)

    # ---- Conv1d(64, 128, k=2, s=2): accumulating per-tap matmuls on the
    #      even/odd pooled rows, then MaxPool(2) -> bias -> ReLU. ----
    he, ho = deinterleave2(h)                                       # (eb*24, 64) x2
    y = dot(he, w2_ref[0]) + dot(ho, w2_ref[1])                     # (eb*24, 128)
    h = jnp.maximum(maxpool2(y) + b2_ref[...], 0.0)                 # (eb*12, 128)

    # ---- Conv1d(128, 256, k=2, s=2). ----
    he, ho = deinterleave2(h)                                       # (eb*6, 128) x2
    y = dot(he, w3_ref[0]) + dot(ho, w3_ref[1])                     # (eb*6, 256)
    h = jnp.maximum(maxpool2(y) + b3_ref[...], 0.0)                 # (eb*3, 256)

    # ---- Flatten + Linear(768, 512): surviving position j of each example
    #      contracts against row-block j of wf1 (PyTorch's channel-major
    #      flatten order is folded into the wf1 layout -- no transpose). ----
    eb = o_ref.shape[0]
    n_pos = wf1_ref.shape[0]                                        # 3
    hr = h.reshape(eb, n_pos, h.shape[-1])                          # (eb, 3, 256)
    fc1 = dot(hr[:, 0, :], wf1_ref[0])
    for j in range(1, n_pos):
        fc1 = fc1 + dot(hr[:, j, :], wf1_ref[j])                    # (eb, 512)
    fc1 = jnp.maximum(fc1 + bf1_ref[...], 0.0)

    # ---- Linear(512, n_classes), zero-padded to 128 lanes -> dense store. ----
    o_ref[...] = dot(fc1, wf2_ref[...]) + bf2_ref[...]              # (eb, 128)


# ----------------------------------------------------------------------------
# Forward pass (inference; Dropout == identity)
# ----------------------------------------------------------------------------
@jax.jit
def forward(x, params):
    """x: (B, 8, L) float32 in PyTorch NCL layout.  Returns (B, n_classes) f32."""
    b, c, l = x.shape
    k1 = params["w1"].shape[0] // c                  # conv1 kernel size (3)
    l1 = l - (k1 - 1)                                # conv1 output length (96)
    n_pos = params["wf1"].shape[0]                   # flattened positions (3)
    n_classes = params["wf2"].shape[1]
    # Pool / stride-2 pairing must never cross an example boundary, and
    # Flatten must see exactly n_pos positions (96 -> 48 -> 24 -> 12 -> 6 -> 3).
    assert l1 % 32 == 0 and l1 // 32 == n_pos, (l, l1, n_pos)

    # Conv1 im2col (tap-major / channel-minor feature order), cast to bf16 so
    # the kernel's p1 DMA moves half the bytes.
    # TODO(synk): move im2col into the kernel (3 shifted-row matmuls) to drop
    # this small HBM round trip entirely.
    x_lc = jnp.transpose(x, (0, 2, 1))                                   # (B, L, C)
    p1 = jnp.concatenate([x_lc[:, t:t + l1, :] for t in range(k1)], -1)  # (B, l1, C*k1)
    p1 = p1.reshape(b * l1, c * k1).astype(jnp.bfloat16)                 # (B*96, 24)

    # Lane-pad fc2 to 128 outputs so the kernel's final store is lane-dense.
    wf2p = jnp.zeros((params["wf2"].shape[0], 128), jnp.bfloat16)
    wf2p = wf2p.at[:, :n_classes].set(params["wf2"])
    bf2p = jnp.zeros((1, 128), jnp.float32).at[:, :n_classes].set(params["bf2"])

    # Batch grid: whole-example blocks; "parallel" lets multi-TC chips (v7x)
    # split the batch.  eb*l1 rows are always a multiple of 8.
    eb = 8 if (b % 8 == 0 and b > 8) else b
    nb = b // eb

    def resident(a):
        # Weights/biases: constant index_map -> never re-DMA'd across steps.
        return pl.BlockSpec(a.shape, lambda i: (0,) * a.ndim)

    weights = (params["w1"], params["b1"], params["w2"], params["b2"],
               params["w3"], params["b3"], params["wf1"], params["bf1"],
               wf2p, bf2p)
    out = pl.pallas_call(
        _classifier_kernel,
        grid=(nb,),
        out_shape=jax.ShapeDtypeStruct((b, 128), jnp.float32),
        in_specs=[pl.BlockSpec((eb * l1, c * k1), lambda i: (i, 0))]
                 + [resident(a) for a in weights],
        out_specs=pl.BlockSpec((eb, 128), lambda i: (i, 0)),
        compiler_params=pltpu.CompilerParams(dimension_semantics=("parallel",)),
    )(p1, *weights)
    return out[:, :n_classes]


# ----------------------------------------------------------------------------
# Pure-JAX (f32) mirror of the fused kernel, for validation.
# ----------------------------------------------------------------------------
def _reference_forward(x, params):
    f32 = jnp.float32
    b, c, l = x.shape
    k1 = params["w1"].shape[0] // c
    l1 = l - (k1 - 1)
    n_pos = params["wf1"].shape[0]

    def pool(y):
        m, n = y.shape
        return y.reshape(m // 2, 2, n).max(axis=1)

    x_lc = jnp.transpose(x, (0, 2, 1))
    p1 = jnp.concatenate([x_lc[:, t:t + l1, :] for t in range(k1)], -1)
    h = p1.reshape(b * l1, c * k1).astype(f32)
    h = jnp.maximum(pool(h @ params["w1"].astype(f32)) + params["b1"], 0.0)
    for w, bias in ((params["w2"], params["b2"]), (params["w3"], params["b3"])):
        w = w.astype(f32)
        m, n = h.shape
        hr = h.reshape(m // 2, 2, n)
        y = hr[:, 0, :] @ w[0] + hr[:, 1, :] @ w[1]
        h = jnp.maximum(pool(y) + bias, 0.0)
    wf1 = params["wf1"].astype(f32)
    hr = h.reshape(b, n_pos, h.shape[-1])
    fc1 = sum(hr[:, j, :] @ wf1[j] for j in range(n_pos))
    fc1 = jnp.maximum(fc1 + params["bf1"], 0.0)
    return fc1 @ params["wf2"].astype(f32) + params["bf2"]


# ----------------------------------------------------------------------------
# Deterministic parameter init (PyTorch-style U(-1/sqrt(fan_in), 1/sqrt(fan_in)))
# stored directly in the matmul-friendly layouts the kernel consumes
# (weights bf16, biases f32).
#
# To import a real PyTorch checkpoint:
#   w1[t*C_in + c, o] = conv1.weight[o, c, t]        -> (24, 64)
#   w2[t, c, o]       = conv2.weight[o, c, t]        -> (2, 64, 128)
#   w3[t, c, o]       = conv3.weight[o, c, t]        -> (2, 128, 256)
#   wf1[j, c, o]      = fc1.weight[o, c*3 + j]       -> (3, 256, 512)
#   wf2[c, o]         = fc2.weight[o, c]             -> (512, n_classes)
#   biases reshaped to (1, N).
# ----------------------------------------------------------------------------
def init_params(key, channels=8, n_classes=3):
    def uni(k, shape, fan_in, dtype):
        bound = 1.0 / jnp.sqrt(float(fan_in))
        return jax.random.uniform(k, shape, jnp.float32, -bound, bound).astype(dtype)

    bf16, f32 = jnp.bfloat16, jnp.float32
    ks = jax.random.split(key, 10)
    return {
        "w1": uni(ks[0], (channels * 3, 64), channels * 3, bf16),
        "b1": uni(ks[1], (1, 64), channels * 3, f32),
        "w2": uni(ks[2], (2, 64, 128), 64 * 2, bf16),
        "b2": uni(ks[3], (1, 128), 64 * 2, f32),
        "w3": uni(ks[4], (2, 128, 256), 128 * 2, bf16),
        "b3": uni(ks[5], (1, 256), 128 * 2, f32),
        "wf1": uni(ks[6], (3, 256, 512), 768, bf16),
        "bf1": uni(ks[7], (1, 512), 768, f32),
        "wf2": uni(ks[8], (512, n_classes), 512, bf16),
        "bf2": uni(ks[9], (1, n_classes), 512, f32),
    }


if __name__ == "__main__":
    key = jax.random.PRNGKey(0)
    k_x, k_p = jax.random.split(key)

    B, C, L = 2, 8, 98   # L=98 so that Flatten yields 768 = 256*3 features
    x = jax.random.normal(k_x, (B, C, L), dtype=jnp.float32)
    params = init_params(k_p)

    out = jax.block_until_ready(forward(x, params))
    assert out.shape == (B, 3) and out.dtype == jnp.float32

    ref = jax.block_until_ready(_reference_forward(x, params))
    err = float(jnp.max(jnp.abs(out - jnp.asarray(ref, jnp.float32))))
    assert err < 5e-2, f"kernel/reference mismatch: max abs err = {err}"

    print("KERNEL_OK")
</pallas_src>

<mosaic_0001>
module attributes {stable_mosaic.version = 11 : i64} {
  func.func @_classifier_kernel(%arg0: i32, %arg1: memref<192x24xbf16, #tpu.memory_space<vmem>>, %arg2: memref<24x64xbf16, #tpu.memory_space<vmem>>, %arg3: memref<1x64xf32, #tpu.memory_space<vmem>>, %arg4: memref<2x64x128xbf16, #tpu.memory_space<vmem>>, %arg5: memref<1x128xf32, #tpu.memory_space<vmem>>, %arg6: memref<2x128x256xbf16, #tpu.memory_space<vmem>>, %arg7: memref<1x256xf32, #tpu.memory_space<vmem>>, %arg8: memref<3x256x512xbf16, #tpu.memory_space<vmem>>, %arg9: memref<1x512xf32, #tpu.memory_space<vmem>>, %arg10: memref<512x128xbf16, #tpu.memory_space<vmem>>, %arg11: memref<1x128xf32, #tpu.memory_space<vmem>>, %arg12: memref<2x128xf32, #tpu.memory_space<vmem>>) attributes {dimension_semantics = [#tpu.dimension_semantics<parallel>], iteration_bounds = array<i64: 1>, scalar_prefetch = 0 : i64, scratch_operands = 0 : i64, tpu.core_type = #tpu.core_type<tc>, window_params = [{transform_indices = @transform_0, window_bounds = array<i64: 192, 24>}, {pipeline_mode = #tpu.pipeline_mode<synchronous>, transform_indices = @transform_1, window_bounds = array<i64: 24, 64>}, {pipeline_mode = #tpu.pipeline_mode<synchronous>, transform_indices = @transform_2, window_bounds = array<i64: 1, 64>}, {pipeline_mode = #tpu.pipeline_mode<synchronous>, transform_indices = @transform_3, window_bounds = array<i64: 2, 64, 128>}, {pipeline_mode = #tpu.pipeline_mode<synchronous>, transform_indices = @transform_4, window_bounds = array<i64: 1, 128>}, {pipeline_mode = #tpu.pipeline_mode<synchronous>, transform_indices = @transform_5, window_bounds = array<i64: 2, 128, 256>}, {pipeline_mode = #tpu.pipeline_mode<synchronous>, transform_indices = @transform_6, window_bounds = array<i64: 1, 256>}, {pipeline_mode = #tpu.pipeline_mode<synchronous>, transform_indices = @transform_7, window_bounds = array<i64: 3, 256, 512>}, {pipeline_mode = #tpu.pipeline_mode<synchronous>, transform_indices = @transform_8, window_bounds = array<i64: 1, 512>}, {pipeline_mode = #tpu.pipeline_mode<synchronous>, transform_indices = @transform_9, window_bounds = array<i64: 512, 128>}, {pipeline_mode = #tpu.pipeline_mode<synchronous>, transform_indices = @transform_10, window_bounds = array<i64: 1, 128>}, {transform_indices = @transform_11, window_bounds = array<i64: 2, 128>}]} {
    %c0 = arith.constant 0 : index
    %c0_0 = arith.constant 0 : index
    %0 = vector.load %arg1[%c0, %c0_0] : memref<192x24xbf16, #tpu.memory_space<vmem>>, vector<192x24xbf16>
    %c0_1 = arith.constant 0 : index
    %c0_2 = arith.constant 0 : index
    %1 = vector.load %arg2[%c0_1, %c0_2] : memref<24x64xbf16, #tpu.memory_space<vmem>>, vector<24x64xbf16>
    %cst = arith.constant dense<0.000000e+00> : vector<192x64xf32>
    %2 = tpu.matmul %0, %1, %cst {dimension_numbers = #tpu.dot_dimension_numbers<[1], [0], [0], [1], [0, 0, 1, 1], [], []>} : vector<192x24xbf16>, vector<24x64xbf16>, vector<192x64xf32> -> vector<192x64xf32>
    %3 = vector.shape_cast %2 : vector<192x64xf32> to vector<96x2x64xf32>
    %cst_3 = arith.constant dense<0xFF800000> : vector<96x64xf32>
    %4 = vector.multi_reduction <maximumf>, %3, %cst_3 [1] : vector<96x2x64xf32> to vector<96x64xf32>
    %c0_4 = arith.constant 0 : index
    %c0_5 = arith.constant 0 : index
    %5 = vector.load %arg3[%c0_4, %c0_5] : memref<1x64xf32, #tpu.memory_space<vmem>>, vector<1x64xf32>
    %6 = vector.broadcast %5 : vector<1x64xf32> to vector<96x64xf32>
    %7 = arith.addf %4, %6 : vector<96x64xf32>
    %cst_6 = arith.constant 0.000000e+00 : f32
    %8 = vector.broadcast %cst_6 : f32 to vector<96x64xf32>
    %9 = arith.maximumf %7, %8 : vector<96x64xf32>
    %10 = vector.shape_cast %9 : vector<96x64xf32> to vector<48x2x64xf32>
    %11 = vector.extract_strided_slice %10 {offsets = [0, 0, 0], sizes = [48, 1, 64], strides = [1, 1, 1]} : vector<48x2x64xf32> to vector<48x1x64xf32>
    %12 = vector.shape_cast %11 : vector<48x1x64xf32> to vector<48x64xf32>
    %13 = vector.extract_strided_slice %10 {offsets = [0, 1, 0], sizes = [48, 1, 64], strides = [1, 1, 1]} : vector<48x2x64xf32> to vector<48x1x64xf32>
    %14 = vector.shape_cast %13 : vector<48x1x64xf32> to vector<48x64xf32>
    %c0_7 = arith.constant 0 : index
    %c0_8 = arith.constant 0 : index
    %c0_9 = arith.constant 0 : index
    %15 = vector.load %arg4[%c0_7, %c0_8, %c0_9] : memref<2x64x128xbf16, #tpu.memory_space<vmem>>, vector<1x64x128xbf16>
    %16 = vector.shape_cast %15 : vector<1x64x128xbf16> to vector<64x128xbf16>
    %17 = arith.truncf %12 : vector<48x64xf32> to vector<48x64xbf16>
    %cst_10 = arith.constant dense<0.000000e+00> : vector<48x128xf32>
    %18 = tpu.matmul %17, %16, %cst_10 {dimension_numbers = #tpu.dot_dimension_numbers<[1], [0], [0], [1], [0, 0, 1, 1], [], []>} : vector<48x64xbf16>, vector<64x128xbf16>, vector<48x128xf32> -> vector<48x128xf32>
    %c1 = arith.constant 1 : index
    %c0_11 = arith.constant 0 : index
    %c0_12 = arith.constant 0 : index
    %19 = vector.load %arg4[%c1, %c0_11, %c0_12] : memref<2x64x128xbf16, #tpu.memory_space<vmem>>, vector<1x64x128xbf16>
    %20 = vector.shape_cast %19 : vector<1x64x128xbf16> to vector<64x128xbf16>
    %21 = arith.truncf %14 : vector<48x64xf32> to vector<48x64xbf16>
    %cst_13 = arith.constant dense<0.000000e+00> : vector<48x128xf32>
    %22 = tpu.matmul %21, %20, %cst_13 {dimension_numbers = #tpu.dot_dimension_numbers<[1], [0], [0], [1], [0, 0, 1, 1], [], []>} : vector<48x64xbf16>, vector<64x128xbf16>, vector<48x128xf32> -> vector<48x128xf32>
    %23 = arith.addf %18, %22 : vector<48x128xf32>
    %24 = vector.shape_cast %23 : vector<48x128xf32> to vector<24x2x128xf32>
    %cst_14 = arith.constant dense<0xFF800000> : vector<24x128xf32>
    %25 = vector.multi_reduction <maximumf>, %24, %cst_14 [1] : vector<24x2x128xf32> to vector<24x128xf32>
    %c0_15 = arith.constant 0 : index
    %c0_16 = arith.constant 0 : index
    %26 = vector.load %arg5[%c0_15, %c0_16] : memref<1x128xf32, #tpu.memory_space<vmem>>, vector<1x128xf32>
    %27 = vector.broadcast %26 : vector<1x128xf32> to vector<24x128xf32>
    %28 = arith.addf %25, %27 : vector<24x128xf32>
    %cst_17 = arith.constant 0.000000e+00 : f32
    %29 = vector.broadcast %cst_17 : f32 to vector<24x128xf32>
    %30 = arith.maximumf %28, %29 : vector<24x128xf32>
    %31 = vector.shape_cast %30 : vector<24x128xf32> to vector<12x2x128xf32>
    %32 = vector.extract_strided_slice %31 {offsets = [0, 0, 0], sizes = [12, 1, 128], strides = [1, 1, 1]} : vector<12x2x128xf32> to vector<12x1x128xf32>
    %33 = vector.shape_cast %32 : vector<12x1x128xf32> to vector<12x128xf32>
    %34 = vector.extract_strided_slice %31 {offsets = [0, 1, 0], sizes = [12, 1, 128], strides = [1, 1, 1]} : vector<12x2x128xf32> to vector<12x1x128xf32>
    %35 = vector.shape_cast %34 : vector<12x1x128xf32> to vector<12x128xf32>
    %c0_18 = arith.constant 0 : index
    %c0_19 = arith.constant 0 : index
    %c0_20 = arith.constant 0 : index
    %36 = vector.load %arg6[%c0_18, %c0_19, %c0_20] : memref<2x128x256xbf16, #tpu.memory_space<vmem>>, vector<1x128x256xbf16>
    %37 = vector.shape_cast %36 : vector<1x128x256xbf16> to vector<128x256xbf16>
    %38 = arith.truncf %33 : vector<12x128xf32> to vector<12x128xbf16>
    %cst_21 = arith.constant dense<0.000000e+00> : vector<12x256xf32>
    %39 = tpu.matmul %38, %37, %cst_21 {dimension_numbers = #tpu.dot_dimension_numbers<[1], [0], [0], [1], [0, 0, 1, 1], [], []>} : vector<12x128xbf16>, vector<128x256xbf16>, vector<12x256xf32> -> vector<12x256xf32>
    %c1_22 = arith.constant 1 : index
    %c0_23 = arith.constant 0 : index
    %c0_24 = arith.constant 0 : index
    %40 = vector.load %arg6[%c1_22, %c0_23, %c0_24] : memref<2x128x256xbf16, #tpu.memory_space<vmem>>, vector<1x128x256xbf16>
    %41 = vector.shape_cast %40 : vector<1x128x256xbf16> to vector<128x256xbf16>
    %42 = arith.truncf %35 : vector<12x128xf32> to vector<12x128xbf16>
    %cst_25 = arith.constant dense<0.000000e+00> : vector<12x256xf32>
    %43 = tpu.matmul %42, %41, %cst_25 {dimension_numbers = #tpu.dot_dimension_numbers<[1], [0], [0], [1], [0, 0, 1, 1], [], []>} : vector<12x128xbf16>, vector<128x256xbf16>, vector<12x256xf32> -> vector<12x256xf32>
    %44 = arith.addf %39, %43 : vector<12x256xf32>
    %45 = vector.shape_cast %44 : vector<12x256xf32> to vector<6x2x256xf32>
    %cst_26 = arith.constant dense<0xFF800000> : vector<6x256xf32>
    %46 = vector.multi_reduction <maximumf>, %45, %cst_26 [1] : vector<6x2x256xf32> to vector<6x256xf32>
    %c0_27 = arith.constant 0 : index
    %c0_28 = arith.constant 0 : index
    %47 = vector.load %arg7[%c0_27, %c0_28] : memref<1x256xf32, #tpu.memory_space<vmem>>, vector<1x256xf32>
    %48 = vector.broadcast %47 : vector<1x256xf32> to vector<6x256xf32>
    %49 = arith.addf %46, %48 : vector<6x256xf32>
    %cst_29 = arith.constant 0.000000e+00 : f32
    %50 = vector.broadcast %cst_29 : f32 to vector<6x256xf32>
    %51 = arith.maximumf %49, %50 : vector<6x256xf32>
    %52 = vector.shape_cast %51 : vector<6x256xf32> to vector<2x3x256xf32>
    %53 = vector.extract_strided_slice %52 {offsets = [0, 0, 0], sizes = [2, 1, 256], strides = [1, 1, 1]} : vector<2x3x256xf32> to vector<2x1x256xf32>
    %54 = vector.shape_cast %53 : vector<2x1x256xf32> to vector<2x256xf32>
    %c0_30 = arith.constant 0 : index
    %c0_31 = arith.constant 0 : index
    %c0_32 = arith.constant 0 : index
    %55 = vector.load %arg8[%c0_30, %c0_31, %c0_32] : memref<3x256x512xbf16, #tpu.memory_space<vmem>>, vector<1x256x512xbf16>
    %56 = vector.shape_cast %55 : vector<1x256x512xbf16> to vector<256x512xbf16>
    %57 = arith.truncf %54 : vector<2x256xf32> to vector<2x256xbf16>
    %cst_33 = arith.constant dense<0.000000e+00> : vector<2x512xf32>
    %58 = tpu.matmul %57, %56, %cst_33 {dimension_numbers = #tpu.dot_dimension_numbers<[1], [0], [0], [1], [0, 0, 1, 1], [], []>} : vector<2x256xbf16>, vector<256x512xbf16>, vector<2x512xf32> -> vector<2x512xf32>
    %59 = vector.extract_strided_slice %52 {offsets = [0, 1, 0], sizes = [2, 1, 256], strides = [1, 1, 1]} : vector<2x3x256xf32> to vector<2x1x256xf32>
    %60 = vector.shape_cast %59 : vector<2x1x256xf32> to vector<2x256xf32>
    %c1_34 = arith.constant 1 : index
    %c0_35 = arith.constant 0 : index
    %c0_36 = arith.constant 0 : index
    %61 = vector.load %arg8[%c1_34, %c0_35, %c0_36] : memref<3x256x512xbf16, #tpu.memory_space<vmem>>, vector<1x256x512xbf16>
    %62 = vector.shape_cast %61 : vector<1x256x512xbf16> to vector<256x512xbf16>
    %63 = arith.truncf %60 : vector<2x256xf32> to vector<2x256xbf16>
    %cst_37 = arith.constant dense<0.000000e+00> : vector<2x512xf32>
    %64 = tpu.matmul %63, %62, %cst_37 {dimension_numbers = #tpu.dot_dimension_numbers<[1], [0], [0], [1], [0, 0, 1, 1], [], []>} : vector<2x256xbf16>, vector<256x512xbf16>, vector<2x512xf32> -> vector<2x512xf32>
    %65 = arith.addf %58, %64 : vector<2x512xf32>
    %66 = vector.extract_strided_slice %52 {offsets = [0, 2, 0], sizes = [2, 1, 256], strides = [1, 1, 1]} : vector<2x3x256xf32> to vector<2x1x256xf32>
    %67 = vector.shape_cast %66 : vector<2x1x256xf32> to vector<2x256xf32>
    %c2 = arith.constant 2 : index
    %c0_38 = arith.constant 0 : index
    %c0_39 = arith.constant 0 : index
    %68 = vector.load %arg8[%c2, %c0_38, %c0_39] : memref<3x256x512xbf16, #tpu.memory_space<vmem>>, vector<1x256x512xbf16>
    %69 = vector.shape_cast %68 : vector<1x256x512xbf16> to vector<256x512xbf16>
    %70 = arith.truncf %67 : vector<2x256xf32> to vector<2x256xbf16>
    %cst_40 = arith.constant dense<0.000000e+00> : vector<2x512xf32>
    %71 = tpu.matmul %70, %69, %cst_40 {dimension_numbers = #tpu.dot_dimension_numbers<[1], [0], [0], [1], [0, 0, 1, 1], [], []>} : vector<2x256xbf16>, vector<256x512xbf16>, vector<2x512xf32> -> vector<2x512xf32>
    %72 = arith.addf %65, %71 : vector<2x512xf32>
    %c0_41 = arith.constant 0 : index
    %c0_42 = arith.constant 0 : index
    %73 = vector.load %arg9[%c0_41, %c0_42] : memref<1x512xf32, #tpu.memory_space<vmem>>, vector<1x512xf32>
    %74 = vector.broadcast %73 : vector<1x512xf32> to vector<2x512xf32>
    %75 = arith.addf %72, %74 : vector<2x512xf32>
    %cst_43 = arith.constant 0.000000e+00 : f32
    %76 = vector.broadcast %cst_43 : f32 to vector<2x512xf32>
    %77 = arith.maximumf %75, %76 : vector<2x512xf32>
    %c0_44 = arith.constant 0 : index
    %c0_45 = arith.constant 0 : index
    %78 = vector.load %arg10[%c0_44, %c0_45] : memref<512x128xbf16, #tpu.memory_space<vmem>>, vector<512x128xbf16>
    %79 = arith.truncf %77 : vector<2x512xf32> to vector<2x512xbf16>
    %cst_46 = arith.constant dense<0.000000e+00> : vector<2x128xf32>
    %80 = tpu.matmul %79, %78, %cst_46 {dimension_numbers = #tpu.dot_dimension_numbers<[1], [0], [0], [1], [0, 0, 1, 1], [], []>} : vector<2x512xbf16>, vector<512x128xbf16>, vector<2x128xf32> -> vector<2x128xf32>
    %c0_47 = arith.constant 0 : index
    %c0_48 = arith.constant 0 : index
    %81 = vector.load %arg11[%c0_47, %c0_48] : memref<1x128xf32, #tpu.memory_space<vmem>>, vector<1x128xf32>
    %82 = vector.broadcast %81 : vector<1x128xf32> to vector<2x128xf32>
    %83 = arith.addf %80, %82 : vector<2x128xf32>
    %c0_49 = arith.constant 0 : index
    %c0_50 = arith.constant 0 : index
    %84 = vector.load %arg12[%c0_49, %c0_50] : memref<2x128xf32, #tpu.memory_space<vmem>>, vector<2x128xf32>
    tpu.vector_store %arg12[%c0_49, %c0_50], %83 {strides = array<i32>} : memref<2x128xf32, #tpu.memory_space<vmem>>, vector<2x128xf32>,
    return
  }
  func.func @transform_0(%arg0: i32) -> (i32, i32) {
    %c0_i32 = arith.constant 0 : i32
    %c0_i32_0 = arith.constant 0 : i32
    return %arg0, %c0_i32 : i32, i32
  }
  func.func @transform_1(%arg0: i32) -> (i32, i32) {
    %c0_i32 = arith.constant 0 : i32
    %c0_i32_0 = arith.constant 0 : i32
    %c0_i32_1 = arith.constant 0 : i32
    return %c0_i32, %c0_i32_0 : i32, i32
  }
  func.func @transform_2(%arg0: i32) -> (i32, i32) {
    %c0_i32 = arith.constant 0 : i32
    %c0_i32_0 = arith.constant 0 : i32
    %c0_i32_1 = arith.constant 0 : i32
    return %c0_i32, %c0_i32_0 : i32, i32
  }
  func.func @transform_3(%arg0: i32) -> (i32, i32, i32) {
    %c0_i32 = arith.constant 0 : i32
    %c0_i32_0 = arith.constant 0 : i32
    %c0_i32_1 = arith.constant 0 : i32
    %c0_i32_2 = arith.constant 0 : i32
    return %c0_i32, %c0_i32_0, %c0_i32_1 : i32, i32, i32
  }
  func.func @transform_4(%arg0: i32) -> (i32, i32) {
    %c0_i32 = arith.constant 0 : i32
    %c0_i32_0 = arith.constant 0 : i32
    %c0_i32_1 = arith.constant 0 : i32
    return %c0_i32, %c0_i32_0 : i32, i32
  }
  func.func @transform_5(%arg0: i32) -> (i32, i32, i32) {
    %c0_i32 = arith.constant 0 : i32
    %c0_i32_0 = arith.constant 0 : i32
    %c0_i32_1 = arith.constant 0 : i32
    %c0_i32_2 = arith.constant 0 : i32
    return %c0_i32, %c0_i32_0, %c0_i32_1 : i32, i32, i32
  }
  func.func @transform_6(%arg0: i32) -> (i32, i32) {
    %c0_i32 = arith.constant 0 : i32
    %c0_i32_0 = arith.constant 0 : i32
    %c0_i32_1 = arith.constant 0 : i32
    return %c0_i32, %c0_i32_0 : i32, i32
  }
  func.func @transform_7(%arg0: i32) -> (i32, i32, i32) {
    %c0_i32 = arith.constant 0 : i32
    %c0_i32_0 = arith.constant 0 : i32
    %c0_i32_1 = arith.constant 0 : i32
    %c0_i32_2 = arith.constant 0 : i32
    return %c0_i32, %c0_i32_0, %c0_i32_1 : i32, i32, i32
  }
  func.func @transform_8(%arg0: i32) -> (i32, i32) {
    %c0_i32 = arith.constant 0 : i32
    %c0_i32_0 = arith.constant 0 : i32
    %c0_i32_1 = arith.constant 0 : i32
    return %c0_i32, %c0_i32_0 : i32, i32
  }
  func.func @transform_9(%arg0: i32) -> (i32, i32) {
    %c0_i32 = arith.constant 0 : i32
    %c0_i32_0 = arith.constant 0 : i32
    %c0_i32_1 = arith.constant 0 : i32
    return %c0_i32, %c0_i32_0 : i32, i32
  }
  func.func @transform_10(%arg0: i32) -> (i32, i32) {
    %c0_i32 = arith.constant 0 : i32
    %c0_i32_0 = arith.constant 0 : i32
    %c0_i32_1 = arith.constant 0 : i32
    return %c0_i32, %c0_i32_0 : i32, i32
  }
  func.func @transform_11(%arg0: i32) -> (i32, i32) {
    %c0_i32 = arith.constant 0 : i32
    %c0_i32_0 = arith.constant 0 : i32
    return %arg0, %c0_i32 : i32, i32
  }
}

</mosaic_0001>

<llo_original>
// kernel: forward.1
$region0: #{forward.1}
  #allocation0 [shape = 'u32[]', space=smem, size = 0x4, offset = 0x4, fixed_abs, tag = 'smem constant byte address 0x4 - core index']
  #allocation1 [shape = 'u32[144,128]{1,0:T(1,128)}', space=vmem, size = 0x12000, scoped, tag = 'internal scratch']
  %s0 = inlined_call_operand.vmem [shape: bf16[192,24], index: 0, kind: input, shape index: {}]
  %s1 = inlined_call_operand.vmem [shape: bf16[24,64], index: 1, kind: input, shape index: {}]
  %s2 = inlined_call_operand.vmem [shape: f32[1,64], index: 2, kind: input, shape index: {}]
  %s3 = inlined_call_operand.hbm [shape: bf16[2,64,128], index: 3, kind: input, shape index: {}]
  %s4 = inlined_call_operand.vmem [shape: f32[1,128], index: 4, kind: input, shape index: {}]
  %s5 = inlined_call_operand.hbm [shape: bf16[2,128,256], index: 5, kind: input, shape index: {}]
  %s6 = inlined_call_operand.vmem [shape: f32[1,256], index: 6, kind: input, shape index: {}]
  %s7 = inlined_call_operand.vmem [shape: bf16[3,256,512], index: 7, kind: input, shape index: {}]
  %s8 = inlined_call_operand.vmem [shape: f32[1,512], index: 8, kind: input, shape index: {}]
  %s9 = inlined_call_operand.vmem [shape: bf16[512,128], index: 9, kind: input, shape index: {}]
  %s10 = inlined_call_operand.vmem [shape: f32[1,128], index: 10, kind: input, shape index: {}]
  %s11 = inlined_call_operand.hbm [shape: f32[2,128], index: 11, kind: output, shape index: {}]
  %s12 = sld [smem:[#allocation0]]
  $region62: #{forward.1} parent=0
    _
  %s14 = ssub.s32 1, %s12
  %s15 = scalar_select 0, %s14, %s12
  $region1: #{forward.1} parent=0
    #allocation2 [shape = 'u8[32768]{0}', space=vmem, size = 0x8000, scoped, tag = 'input window, operand 3, single buffered']
    #allocation3 [shape = 's32[1]{0}', space=sflag, size = 0x4, scoped, tag = 'scoped memory for forward.1']
    #allocation4 [shape = 's32[1]{0}', space=sflag, size = 0x4, scoped, tag = 'scoped memory for forward.1']
    #allocation5 [shape = 'u8[131072]{0}', space=vmem, size = 0x20000, scoped, tag = 'input window, operand 5, single buffered']
    #allocation6 [shape = 's32[1]{0}', space=sflag, size = 0x4, scoped, tag = 'scoped memory for forward.1']
    #allocation7 [shape = 'u8[1024]{0}', space=vmem, size = 0x400, scoped, tag = 'output window, operand 0, single buffered']
    %16 = vsyncpa [#allocation3], 0
    %17 = vsyncpa [#allocation6], 0
    %18 = vsyncpa [#allocation4], 0
    // Predicated region
    $region2: #{forward.1} parent=1 // pred_check
      _
    $region3: #{forward.1} parent=1 // pred_check_branch
      %20 = sbr.rel (0) target = $region5
    $region4: #{forward.1} parent=1 // pred_region
      _
    $region5: #{forward.1} parent=1 // pred_fallthru
      _
    // Predicated region
    $region6: #{forward.1} parent=1 // pred_check
      _
    $region7: #{forward.1} parent=1 // pred_check_branch
      %22 = sbr.rel (0) target = $region9
    $region8: #{forward.1} parent=1 // pred_region
      _
    $region9: #{forward.1} parent=1 // pred_fallthru
      _
    // Predicated region
    $region10: #{forward.1} parent=1 // pred_check
      _
    $region11: #{forward.1} parent=1 // pred_check_branch
      %24 = sbr.rel (0) target = $region13
    $region12: #{forward.1} parent=1 // pred_region
      _
    $region13: #{forward.1} parent=1 // pred_fallthru
      _
    // Predicated region
    $region14: #{forward.1} parent=1 // pred_check
      _
    $region15: #{forward.1} parent=1 // pred_check_branch
      %26 = sbr.rel (0) target = $region17
    $region16: #{forward.1} parent=1 // pred_region
      %s28 = ssub.s32 1024, 1024
      %29 = vsyncadd [#allocation3], %s28
      %s30 = sshll.u32 [#allocation2], 4
      %s31 = int_to_ptr.vmem [resolvable:$true] %s30
      %36 = dma.hbm_to_vmem [thread:$0]  %s3, 1024, %s31, [#allocation3], 64, 64, 4
    $region17: #{forward.1} parent=1 // pred_fallthru
      _
    // Predicated region
    $region18: #{forward.1} parent=1 // pred_check
      _
    $region19: #{forward.1} parent=1 // pred_check_branch
      %38 = sbr.rel (0) target = $region21
    $region20: #{forward.1} parent=1 // pred_region
      _
    $region21: #{forward.1} parent=1 // pred_fallthru
      _
    // Predicated region
    $region22: #{forward.1} parent=1 // pred_check
      _
    $region23: #{forward.1} parent=1 // pred_check_branch
      %40 = sbr.rel (0) target = $region25
    $region24: #{forward.1} parent=1 // pred_region
      %s42 = ssub.s32 4096, 4096
      %43 = vsyncadd [#allocation6], %s42
      %s44 = sshll.u32 [#allocation5], 4
      %s45 = int_to_ptr.vmem [resolvable:$true] %s44
      %50 = dma.hbm_to_vmem [thread:$0]  %s5, 4096, %s45, [#allocation6], 128, 128, 8
    $region25: #{forward.1} parent=1 // pred_fallthru
      _
    // Predicated region
    $region26: #{forward.1} parent=1 // pred_check
      _
    $region27: #{forward.1} parent=1 // pred_check_branch
      %52 = sbr.rel (0) target = $region29
    $region28: #{forward.1} parent=1 // pred_region
      _
    $region29: #{forward.1} parent=1 // pred_fallthru
      _
    // Predicated region
    $region30: #{forward.1} parent=1 // pred_check
      _
    $region31: #{forward.1} parent=1 // pred_check_branch
      %54 = sbr.rel (0) target = $region33
    $region32: #{forward.1} parent=1 // pred_region
      _
    $region33: #{forward.1} parent=1 // pred_fallthru
      _
    // Predicated region
    $region34: #{forward.1} parent=1 // pred_check
      _
    $region35: #{forward.1} parent=1 // pred_check_branch
      %56 = sbr.rel (0) target = $region37
    $region36: #{forward.1} parent=1 // pred_region
      _
    $region37: #{forward.1} parent=1 // pred_fallthru
      _
    // Predicated region
    $region38: #{forward.1} parent=1 // pred_check
      _
    $region39: #{forward.1} parent=1 // pred_check_branch
      %58 = sbr.rel (0) target = $region41
    $region40: #{forward.1} parent=1 // pred_region
      _
    $region41: #{forward.1} parent=1 // pred_fallthru
      _
    // Predicated region
    $region42: #{forward.1} parent=1 // pred_check
      _
    $region43: #{forward.1} parent=1 // pred_check_branch
      %60 = sbr.rel (0) target = $region45
    $region44: #{forward.1} parent=1 // pred_region
      _
    $region45: #{forward.1} parent=1 // pred_fallthru
      _
    // Predicated region
    $region46: #{forward.1} parent=1 // pred_check
      _
    $region47: #{forward.1} parent=1 // pred_check_branch
      %62 = sbr.rel (0) target = $region49
    $region48: #{forward.1} parent=1 // pred_region
      %63 = dma.done [#allocation3], 1024
    $region49: #{forward.1} parent=1 // pred_fallthru
      _
    // Predicated region
    $region50: #{forward.1} parent=1 // pred_check
      _
    $region51: #{forward.1} parent=1 // pred_check_branch
      %65 = sbr.rel (0) target = $region53
    $region52: #{forward.1} parent=1 // pred_region
      %66 = dma.done [#allocation6], 4096
    $region53: #{forward.1} parent=1 // pred_fallthru
      _
    %v68 = vld [vmem:[%s0] sm:$0xf]
    %v69 = vld [vmem:[%s0 + $0x4] sm:$0xf]
    %v70 = vld [vmem:[%s0 + $0x8] sm:$0xf]
    %v71 = vld [vmem:[%s0 + $0xc] sm:$0xf]
    %v72 = vld [vmem:[%s0 + $0x10] sm:$0xf]
    %v73 = vld [vmem:[%s0 + $0x14] sm:$0xf]
    %v74 = vld [vmem:[%s0 + $0x18] sm:$0xf]
    %v75 = vld [vmem:[%s0 + $0x1c] sm:$0xf]
    %v76 = vld [vmem:[%s0 + $0x20] sm:$0xf]
    %v77 = vld [vmem:[%s0 + $0x24] sm:$0xf]
    %v78 = vld [vmem:[%s0 + $0x28] sm:$0xf]
    %v79 = vld [vmem:[%s0 + $0x2c] sm:$0xf]
    %v80 = vld [vmem:[%s0 + $0x30] sm:$0xf]
    %v81 = vld [vmem:[%s0 + $0x34] sm:$0xf]
    %v82 = vld [vmem:[%s0 + $0x38] sm:$0xf]
    %v83 = vld [vmem:[%s0 + $0x3c] sm:$0xf]
    %v84 = vld [vmem:[%s0 + $0x40] sm:$0xf]
    %v85 = vld [vmem:[%s0 + $0x44] sm:$0xf]
    %v86 = vld [vmem:[%s0 + $0x48] sm:$0xf]
    %v87 = vld [vmem:[%s0 + $0x4c] sm:$0xf]
    %v88 = vld [vmem:[%s0 + $0x50] sm:$0xf]
    %v89 = vld [vmem:[%s0 + $0x54] sm:$0xf]
    %v90 = vld [vmem:[%s0 + $0x58] sm:$0xf]
    %v91 = vld [vmem:[%s0 + $0x5c] sm:$0xf]
    %v92 = vld [vmem:[%s1] sm:$0xf]
    %v93 = vld [vmem:[%s1 + $0x4] sm:$0xf]
    %v94 = vld [vmem:[%s1 + $0x8] sm:$0xf]
    %v119 = vunpack.c.l.b16 %v68
    %v120 = vunpack.c.l.b16 %v69
    %v121 = vunpack.c.l.b16 %v70
    %v122 = vunpack.c.l.b16 %v71
    %v123 = vunpack.c.l.b16 %v72
    %v124 = vunpack.c.l.b16 %v73
    %v125 = vunpack.c.l.b16 %v74
    %v126 = vunpack.c.l.b16 %v75
    %v127 = vunpack.c.l.b16 %v76
    %v128 = vunpack.c.l.b16 %v77
    %v129 = vunpack.c.l.b16 %v78
    %v130 = vunpack.c.l.b16 %v79
    %v131 = vunpack.c.l.b16 %v80
    %v132 = vunpack.c.l.b16 %v81
    %v133 = vunpack.c.l.b16 %v82
    %v134 = vunpack.c.l.b16 %v83
    %v135 = vunpack.c.l.b16 %v84
    %v136 = vunpack.c.l.b16 %v85
    %v137 = vunpack.c.l.b16 %v86
    %v138 = vunpack.c.l.b16 %v87
    %v139 = vunpack.c.l.b16 %v88
    %v140 = vunpack.c.l.b16 %v89
    %v141 = vunpack.c.l.b16 %v90
    %v142 = vunpack.c.l.b16 %v91
    %v143 = vpack.c.b16 %v120, %v119
    %v144 = vpack.c.b16 %v122, %v121
    %v145 = vpack.c.b16 %v124, %v123
    %v146 = vpack.c.b16 %v126, %v125
    %v147 = vpack.c.b16 %v128, %v127
    %v148 = vpack.c.b16 %v130, %v129
    %v149 = vpack.c.b16 %v132, %v131
    %v150 = vpack.c.b16 %v134, %v133
    %v151 = vpack.c.b16 %v136, %v135
    %v152 = vpack.c.b16 %v138, %v137
    %v153 = vpack.c.b16 %v140, %v139
    %v154 = vpack.c.b16 %v142, %v141
    %v158 = vunpack.c.l.b16 %v92
    %v159 = vunpack.c.l.b16 %v93
    %v160 = vunpack.c.l.b16 %v94
    %v161 = vpack.c.b16 %v159, %v158
    %v162 = vpack.c.b16 %v160, %v160
    %vm164 = vcmask 195584
    %v166 = vsel %vm164, %v143, 0
    %v169 = vsel %vm164, %v144, 0
    %v172 = vsel %vm164, %v145, 0
    %v175 = vsel %vm164, %v146, 0
    %v178 = vsel %vm164, %v147, 0
    %v181 = vsel %vm164, %v148, 0
    %v184 = vsel %vm164, %v149, 0
    %v187 = vsel %vm164, %v150, 0
    %v190 = vsel %vm164, %v151, 0
    %v193 = vsel %vm164, %v152, 0
    %v196 = vsel %vm164, %v153, 0
    %v199 = vsel %vm164, %v154, 0
    %vm201 = vcmask 1043456
    %v203 = vsel %vm201, %v162, 0
    %205 = vmatprep.subr.bf16.mxu0 0
    %206 = vmatpush1.bf16.msra.mxu0 %v161
    %207 = vmatprep.subr.bf16.mxu0 0
    %208 = vmatpush1.bf16.msra.mxu0 %v203
    %209 = vmatprep.subr.bf16.mxu0 0
    %210 = vmatpush1.bf16.msra.mxu0 0
    %211 = vmatprep.subr.bf16.mxu0 0
    %212 = vmatpush1.bf16.msra.mxu0 0
    %213 = vmatprep.subr.bf16.mxu0 0
    %214 = vmatpush1.bf16.msra.mxu0 0
    %215 = vmatprep.subr.bf16.mxu0 0
    %216 = vmatpush1.bf16.msra.mxu0 0
    %217 = vmatprep.subr.bf16.mxu0 0
    %218 = vmatpush1.bf16.msra.mxu0 0
    %219 = vmatprep.subr.bf16.mxu0 0
    %220 = vmatpush1.bf16.msra.mxu0 0
    %221 = vmatprep.subr.bf16.mxu0 0
    %222 = vmatpush1.bf16.msra.mxu0 0
    %223 = vmatprep.subr.bf16.mxu0 0
    %224 = vmatpush1.bf16.msra.mxu0 0
    %225 = vmatprep.subr.bf16.mxu0 0
    %226 = vmatpush1.bf16.msra.mxu0 0
    %227 = vmatprep.subr.bf16.mxu0 0
    %228 = vmatpush1.bf16.msra.mxu0 0
    %229 = vmatprep.subr.bf16.mxu0 0
    %230 = vmatpush1.bf16.msra.mxu0 0
    %231 = vmatprep.subr.bf16.mxu0 0
    %232 = vmatpush1.bf16.msra.mxu0 0
    %233 = vmatprep.subr.bf16.mxu0 0
    %234 = vmatpush1.bf16.msra.mxu0 0
    %235 = vmatprep.subr.bf16.mxu0 0
    %236 = vmatpush1.bf16.msra.mxu0 0
    %237 = vmatprep.mubr.bf16.mxu0 0
    %238 = vmatmul.mubr.bf16.gmra.mrb[0].mxu0 %v166
    %v239 = vpop.f32.mrb[0].mxu0
    %v240 = vadd.f32 0.0, %v239
    %v241 = vpop.f32.mrb[0].mxu0
    %v242 = vpop.f32.mrb[0].mxu0
    %v243 = vadd.f32 0.0, %v242
    %v244 = vpop.f32.mrb[0].mxu0
    %245 = vmatprep.mubr.bf16.mxu0 0
    %246 = vmatmul.mubr.bf16.gmra.mrb[0].mxu0 %v169
    %v247 = vpop.f32.mrb[0].mxu0
    %v248 = vadd.f32 0.0, %v247
    %v249 = vpop.f32.mrb[0].mxu0
    %v250 = vpop.f32.mrb[0].mxu0
    %v251 = vadd.f32 0.0, %v250
    %v252 = vpop.f32.mrb[0].mxu0
    %253 = vmatprep.mubr.bf16.mxu0 0
    %254 = vmatmul.mubr.bf16.gmra.mrb[0].mxu0 %v172
    %v255 = vpop.f32.mrb[0].mxu0
    %v256 = vadd.f32 0.0, %v255
    %v257 = vpop.f32.mrb[0].mxu0
    %v258 = vpop.f32.mrb[0].mxu0
    %v259 = vadd.f32 0.0, %v258
    %v260 = vpop.f32.mrb[0].mxu0
    %261 = vmatprep.mubr.bf16.mxu0 0
    %262 = vmatmul.mubr.bf16.gmra.mrb[0].mxu0 %v175
    %v263 = vpop.f32.mrb[0].mxu0
    %v264 = vadd.f32 0.0, %v263
    %v265 = vpop.f32.mrb[0].mxu0
    %v266 = vpop.f32.mrb[0].mxu0
    %v267 = vadd.f32 0.0, %v266
    %v268 = vpop.f32.mrb[0].mxu0
    %269 = vmatprep.mubr.bf16.mxu0 0
    %270 = vmatmul.mubr.bf16.gmra.mrb[0].mxu0 %v178
    %v271 = vpop.f32.mrb[0].mxu0
    %v272 = vadd.f32 0.0, %v271
    %v273 = vpop.f32.mrb[0].mxu0
    %v274 = vpop.f32.mrb[0].mxu0
    %v275 = vadd.f32 0.0, %v274
    %v276 = vpop.f32.mrb[0].mxu0
    %277 = vmatprep.mubr.bf16.mxu0 0
    %278 = vmatmul.mubr.bf16.gmra.mrb[0].mxu0 %v181
    %v279 = vpop.f32.mrb[0].mxu0
    %v280 = vadd.f32 0.0, %v279
    %v281 = vpop.f32.mrb[0].mxu0
    %v282 = vpop.f32.mrb[0].mxu0
    %v283 = vadd.f32 0.0, %v282
    %v284 = vpop.f32.mrb[0].mxu0
    %285 = vmatprep.mubr.bf16.mxu0 0
    %286 = vmatmul.mubr.bf16.gmra.mrb[0].mxu0 %v184
    %v287 = vpop.f32.mrb[0].mxu0
    %v288 = vadd.f32 0.0, %v287
    %v289 = vpop.f32.mrb[0].mxu0
    %v290 = vpop.f32.mrb[0].mxu0
    %v291 = vadd.f32 0.0, %v290
    %v292 = vpop.f32.mrb[0].mxu0
    %293 = vmatprep.mubr.bf16.mxu0 0
    %294 = vmatmul.mubr.bf16.gmra.mrb[0].mxu0 %v187
    %v295 = vpop.f32.mrb[0].mxu0
    %v296 = vadd.f32 0.0, %v295
    %v297 = vpop.f32.mrb[0].mxu0
    %v298 = vpop.f32.mrb[0].mxu0
    %v299 = vadd.f32 0.0, %v298
    %v300 = vpop.f32.mrb[0].mxu0
    %301 = vmatprep.mubr.bf16.mxu0 0
    %302 = vmatmul.mubr.bf16.gmra.mrb[0].mxu0 %v190
    %v303 = vpop.f32.mrb[0].mxu0
    %v304 = vadd.f32 0.0, %v303
    %v305 = vpop.f32.mrb[0].mxu0
    %v306 = vpop.f32.mrb[0].mxu0
    %v307 = vadd.f32 0.0, %v306
    %v308 = vpop.f32.mrb[0].mxu0
    %309 = vmatprep.mubr.bf16.mxu0 0
    %310 = vmatmul.mubr.bf16.gmra.mrb[0].mxu0 %v193
    %v311 = vpop.f32.mrb[0].mxu0
    %v312 = vadd.f32 0.0, %v311
    %v313 = vpop.f32.mrb[0].mxu0
    %v314 = vpop.f32.mrb[0].mxu0
    %v315 = vadd.f32 0.0, %v314
    %v316 = vpop.f32.mrb[0].mxu0
    %317 = vmatprep.mubr.bf16.mxu0 0
    %318 = vmatmul.mubr.bf16.gmra.mrb[0].mxu0 %v196
    %v319 = vpop.f32.mrb[0].mxu0
    %v320 = vadd.f32 0.0, %v319
    %v321 = vpop.f32.mrb[0].mxu0
    %v322 = vpop.f32.mrb[0].mxu0
    %v323 = vadd.f32 0.0, %v322
    %v324 = vpop.f32.mrb[0].mxu0
    %325 = vmatprep.mubr.bf16.mxu0 0
    %326 = vmatmul.mubr.bf16.gmra.mrb[0].mxu0 %v199
    %v327 = vpop.f32.mrb[0].mxu0
    %v328 = vadd.f32 0.0, %v327
    %v329 = vpop.f32.mrb[0].mxu0
    %v330 = vpop.f32.mrb[0].mxu0
    %v331 = vadd.f32 0.0, %v330
    %v332 = vpop.f32.mrb[0].mxu0
    %333 = vdwg.mxu0
    %v358 = vcombine.high %v240, %v240
    %v360 = vunpack.c.l.s4 1983009808
    %v361 = vunpack.c.0.s8 %v360
    %v362 = vlaneseq
    %v363 = vshrl.u32 %v362, 7
    %v364 = vsub.s32 %v361, %v363
    %v365 = vrot.slane %v240, %v364
    %v367 = vunpack.c.l.s4 1983009808
    %v368 = vunpack.c.0.s8 %v367
    %v369 = vlaneseq
    %v370 = vshrl.u32 %v369, 7
    %v371 = vsub.s32 %v368, %v370
    %v372 = vrot.slane %v358, %v371
    %v373 = vcombine.high %v365, %v365
    %v374 = vcombine.high %v372, %v372
    %v375 = vcombine.high %v243, %v243
    %v377 = vunpack.c.l.s4 1983009808
    %v378 = vunpack.c.0.s8 %v377
    %v379 = vlaneseq
    %v380 = vshrl.u32 %v379, 7
    %v381 = vsub.s32 %v378, %v380
    %v382 = vrot.slane %v243, %v381
    %v384 = vunpack.c.l.s4 1983009808
    %v385 = vunpack.c.0.s8 %v384
    %v386 = vlaneseq
    %v387 = vshrl.u32 %v386, 7
    %v388 = vsub.s32 %v385, %v387
    %v389 = vrot.slane %v375, %v388
    %v390 = vcombine.high %v382, %v382
    %v391 = vcombine.high %v389, %v389
    %v392 = vcombine.high %v248, %v248
    %v394 = vunpack.c.l.s4 1983009808
    %v395 = vunpack.c.0.s8 %v394
    %v396 = vlaneseq
    %v397 = vshrl.u32 %v396, 7
    %v398 = vsub.s32 %v395, %v397
    %v399 = vrot.slane %v248, %v398
    %v401 = vunpack.c.l.s4 1983009808
    %v402 = vunpack.c.0.s8 %v401
    %v403 = vlaneseq
    %v404 = vshrl.u32 %v403, 7
    %v405 = vsub.s32 %v402, %v404
    %v406 = vrot.slane %v392, %v405
    %v407 = vcombine.high %v399, %v399
    %v408 = vcombine.high %v406, %v406
    %v409 = vcombine.high %v251, %v251
    %v411 = vunpack.c.l.s4 1983009808
    %v412 = vunpack.c.0.s8 %v411
    %v413 = vlaneseq
    %v414 = vshrl.u32 %v413, 7
    %v415 = vsub.s32 %v412, %v414
    %v416 = vrot.slane %v251, %v415
    %v418 = vunpack.c.l.s4 1983009808
    %v419 = vunpack.c.0.s8 %v418
    %v420 = vlaneseq
    %v421 = vshrl.u32 %v420, 7
    %v422 = vsub.s32 %v419, %v421
    %v423 = vrot.slane %v409, %v422
    %v424 = vcombine.high %v416, %v416
    %v425 = vcombine.high %v423, %v423
    %v426 = vcombine.high %v256, %v256
    %v428 = vunpack.c.l.s4 1983009808
    %v429 = vunpack.c.0.s8 %v428
    %v430 = vlaneseq
    %v431 = vshrl.u32 %v430, 7
    %v432 = vsub.s32 %v429, %v431
    %v433 = vrot.slane %v256, %v432
    %v435 = vunpack.c.l.s4 1983009808
    %v436 = vunpack.c.0.s8 %v435
    %v437 = vlaneseq
    %v438 = vshrl.u32 %v437, 7
    %v439 = vsub.s32 %v436, %v438
    %v440 = vrot.slane %v426, %v439
    %v441 = vcombine.high %v433, %v433
    %v442 = vcombine.high %v440, %v440
    %v443 = vcombine.high %v259, %v259
    %v445 = vunpack.c.l.s4 1983009808
    %v446 = vunpack.c.0.s8 %v445
    %v447 = vlaneseq
    %v448 = vshrl.u32 %v447, 7
    %v449 = vsub.s32 %v446, %v448
    %v450 = vrot.slane %v259, %v449
    %v452 = vunpack.c.l.s4 1983009808
    %v453 = vunpack.c.0.s8 %v452
    %v454 = vlaneseq
    %v455 = vshrl.u32 %v454, 7
    %v456 = vsub.s32 %v453, %v455
    %v457 = vrot.slane %v443, %v456
    %v458 = vcombine.high %v450, %v450
    %v459 = vcombine.high %v457, %v457
    %v460 = vcombine.high %v264, %v264
    %v462 = vunpack.c.l.s4 1983009808
    %v463 = vunpack.c.0.s8 %v462
    %v464 = vlaneseq
    %v465 = vshrl.u32 %v464, 7
    %v466 = vsub.s32 %v463, %v465
    %v467 = vrot.slane %v264, %v466
    %v469 = vunpack.c.l.s4 1983009808
    %v470 = vunpack.c.0.s8 %v469
    %v471 = vlaneseq
    %v472 = vshrl.u32 %v471, 7
    %v473 = vsub.s32 %v470, %v472
    %v474 = vrot.slane %v460, %v473
    %v475 = vcombine.high %v467, %v467
    %v476 = vcombine.high %v474, %v474
    %v477 = vcombine.high %v267, %v267
    %v479 = vunpack.c.l.s4 1983009808
    %v480 = vunpack.c.0.s8 %v479
    %v481 = vlaneseq
    %v482 = vshrl.u32 %v481, 7
    %v483 = vsub.s32 %v480, %v482
    %v484 = vrot.slane %v267, %v483
    %v486 = vunpack.c.l.s4 1983009808
    %v487 = vunpack.c.0.s8 %v486
    %v488 = vlaneseq
    %v489 = vshrl.u32 %v488, 7
    %v490 = vsub.s32 %v487, %v489
    %v491 = vrot.slane %v477, %v490
    %v492 = vcombine.high %v484, %v484
    %v493 = vcombine.high %v491, %v491
    %v494 = vcombine.high %v272, %v272
    %v496 = vunpack.c.l.s4 1983009808
    %v497 = vunpack.c.0.s8 %v496
    %v498 = vlaneseq
    %v499 = vshrl.u32 %v498, 7
    %v500 = vsub.s32 %v497, %v499
    %v501 = vrot.slane %v272, %v500
    %v503 = vunpack.c.l.s4 1983009808
    %v504 = vunpack.c.0.s8 %v503
    %v505 = vlaneseq
    %v506 = vshrl.u32 %v505, 7
    %v507 = vsub.s32 %v504, %v506
    %v508 = vrot.slane %v494, %v507
    %v509 = vcombine.high %v501, %v501
    %v510 = vcombine.high %v508, %v508
    %v511 = vcombine.high %v275, %v275
    %v513 = vunpack.c.l.s4 1983009808
    %v514 = vunpack.c.0.s8 %v513
    %v515 = vlaneseq
    %v516 = vshrl.u32 %v515, 7
    %v517 = vsub.s32 %v514, %v516
    %v518 = vrot.slane %v275, %v517
    %v520 = vunpack.c.l.s4 1983009808
    %v521 = vunpack.c.0.s8 %v520
    %v522 = vlaneseq
    %v523 = vshrl.u32 %v522, 7
    %v524 = vsub.s32 %v521, %v523
    %v525 = vrot.slane %v511, %v524
    %v526 = vcombine.high %v518, %v518
    %v527 = vcombine.high %v525, %v525
    %v528 = vcombine.high %v280, %v280
    %v530 = vunpack.c.l.s4 1983009808
    %v531 = vunpack.c.0.s8 %v530
    %v532 = vlaneseq
    %v533 = vshrl.u32 %v532, 7
    %v534 = vsub.s32 %v531, %v533
    %v535 = vrot.slane %v280, %v534
    %v537 = vunpack.c.l.s4 1983009808
    %v538 = vunpack.c.0.s8 %v537
    %v539 = vlaneseq
    %v540 = vshrl.u32 %v539, 7
    %v541 = vsub.s32 %v538, %v540
    %v542 = vrot.slane %v528, %v541
    %v543 = vcombine.high %v535, %v535
    %v544 = vcombine.high %v542, %v542
    %v545 = vcombine.high %v283, %v283
    %v547 = vunpack.c.l.s4 1983009808
    %v548 = vunpack.c.0.s8 %v547
    %v549 = vlaneseq
    %v550 = vshrl.u32 %v549, 7
    %v551 = vsub.s32 %v548, %v550
    %v552 = vrot.slane %v283, %v551
    %v554 = vunpack.c.l.s4 1983009808
    %v555 = vunpack.c.0.s8 %v554
    %v556 = vlaneseq
    %v557 = vshrl.u32 %v556, 7
    %v558 = vsub.s32 %v555, %v557
    %v559 = vrot.slane %v545, %v558
    %v560 = vcombine.high %v552, %v552
    %v561 = vcombine.high %v559, %v559
    %v562 = vcombine.high %v288, %v288
    %v564 = vunpack.c.l.s4 1983009808
    %v565 = vunpack.c.0.s8 %v564
    %v566 = vlaneseq
    %v567 = vshrl.u32 %v566, 7
    %v568 = vsub.s32 %v565, %v567
    %v569 = vrot.slane %v288, %v568
    %v571 = vunpack.c.l.s4 1983009808
    %v572 = vunpack.c.0.s8 %v571
    %v573 = vlaneseq
    %v574 = vshrl.u32 %v573, 7
    %v575 = vsub.s32 %v572, %v574
    %v576 = vrot.slane %v562, %v575
    %v577 = vcombine.high %v569, %v569
    %v578 = vcombine.high %v576, %v576
    %v579 = vcombine.high %v291, %v291
    %v581 = vunpack.c.l.s4 1983009808
    %v582 = vunpack.c.0.s8 %v581
    %v583 = vlaneseq
    %v584 = vshrl.u32 %v583, 7
    %v585 = vsub.s32 %v582, %v584
    %v586 = vrot.slane %v291, %v585
    %v588 = vunpack.c.l.s4 1983009808
    %v589 = vunpack.c.0.s8 %v588
    %v590 = vlaneseq
    %v591 = vshrl.u32 %v590, 7
    %v592 = vsub.s32 %v589, %v591
    %v593 = vrot.slane %v579, %v592
    %v594 = vcombine.high %v586, %v586
    %v595 = vcombine.high %v593, %v593
    %v596 = vcombine.high %v296, %v296
    %v598 = vunpack.c.l.s4 1983009808
    %v599 = vunpack.c.0.s8 %v598
    %v600 = vlaneseq
    %v601 = vshrl.u32 %v600, 7
    %v602 = vsub.s32 %v599, %v601
    %v603 = vrot.slane %v296, %v602
    %v605 = vunpack.c.l.s4 1983009808
    %v606 = vunpack.c.0.s8 %v605
    %v607 = vlaneseq
    %v608 = vshrl.u32 %v607, 7
    %v609 = vsub.s32 %v606, %v608
    %v610 = vrot.slane %v596, %v609
    %v611 = vcombine.high %v603, %v603
    %v612 = vcombine.high %v610, %v610
    %v613 = vcombine.high %v299, %v299
    %v615 = vunpack.c.l.s4 1983009808
    %v616 = vunpack.c.0.s8 %v615
    %v617 = vlaneseq
    %v618 = vshrl.u32 %v617, 7
    %v619 = vsub.s32 %v616, %v618
    %v620 = vrot.slane %v299, %v619
    %v622 = vunpack.c.l.s4 1983009808
    %v623 = vunpack.c.0.s8 %v622
    %v624 = vlaneseq
    %v625 = vshrl.u32 %v624, 7
    %v626 = vsub.s32 %v623, %v625
    %v627 = vrot.slane %v613, %v626
    %v628 = vcombine.high %v620, %v620
    %v629 = vcombine.high %v627, %v627
    %v630 = vcombine.high %v304, %v304
    %v632 = vunpack.c.l.s4 1983009808
    %v633 = vunpack.c.0.s8 %v632
    %v634 = vlaneseq
    %v635 = vshrl.u32 %v634, 7
    %v636 = vsub.s32 %v633, %v635
    %v637 = vrot.slane %v304, %v636
    %v639 = vunpack.c.l.s4 1983009808
    %v640 = vunpack.c.0.s8 %v639
    %v641 = vlaneseq
    %v642 = vshrl.u32 %v641, 7
    %v643 = vsub.s32 %v640, %v642
    %v644 = vrot.slane %v630, %v643
    %v645 = vcombine.high %v637, %v637
    %v646 = vcombine.high %v644, %v644
    %v647 = vcombine.high %v307, %v307
    %v649 = vunpack.c.l.s4 1983009808
    %v650 = vunpack.c.0.s8 %v649
    %v651 = vlaneseq
    %v652 = vshrl.u32 %v651, 7
    %v653 = vsub.s32 %v650, %v652
    %v654 = vrot.slane %v307, %v653
    %v656 = vunpack.c.l.s4 1983009808
    %v657 = vunpack.c.0.s8 %v656
    %v658 = vlaneseq
    %v659 = vshrl.u32 %v658, 7
    %v660 = vsub.s32 %v657, %v659
    %v661 = vrot.slane %v647, %v660
    %v662 = vcombine.high %v654, %v654
    %v663 = vcombine.high %v661, %v661
    %v664 = vcombine.high %v312, %v312
    %v666 = vunpack.c.l.s4 1983009808
    %v667 = vunpack.c.0.s8 %v666
    %v668 = vlaneseq
    %v669 = vshrl.u32 %v668, 7
    %v670 = vsub.s32 %v667, %v669
    %v671 = vrot.slane %v312, %v670
    %v673 = vunpack.c.l.s4 1983009808
    %v674 = vunpack.c.0.s8 %v673
    %v675 = vlaneseq
    %v676 = vshrl.u32 %v675, 7
    %v677 = vsub.s32 %v674, %v676
    %v678 = vrot.slane %v664, %v677
    %v679 = vcombine.high %v671, %v671
    %v680 = vcombine.high %v678, %v678
    %v681 = vcombine.high %v315, %v315
    %v683 = vunpack.c.l.s4 1983009808
    %v684 = vunpack.c.0.s8 %v683
    %v685 = vlaneseq
    %v686 = vshrl.u32 %v685, 7
    %v687 = vsub.s32 %v684, %v686
    %v688 = vrot.slane %v315, %v687
    %v690 = vunpack.c.l.s4 1983009808
    %v691 = vunpack.c.0.s8 %v690
    %v692 = vlaneseq
    %v693 = vshrl.u32 %v692, 7
    %v694 = vsub.s32 %v691, %v693
    %v695 = vrot.slane %v681, %v694
    %v696 = vcombine.high %v688, %v688
    %v697 = vcombine.high %v695, %v695
    %v698 = vcombine.high %v320, %v320
    %v700 = vunpack.c.l.s4 1983009808
    %v701 = vunpack.c.0.s8 %v700
    %v702 = vlaneseq
    %v703 = vshrl.u32 %v702, 7
    %v704 = vsub.s32 %v701, %v703
    %v705 = vrot.slane %v320, %v704
    %v707 = vunpack.c.l.s4 1983009808
    %v708 = vunpack.c.0.s8 %v707
    %v709 = vlaneseq
    %v710 = vshrl.u32 %v709, 7
    %v711 = vsub.s32 %v708, %v710
    %v712 = vrot.slane %v698, %v711
    %v713 = vcombine.high %v705, %v705
    %v714 = vcombine.high %v712, %v712
    %v715 = vcombine.high %v323, %v323
    %v717 = vunpack.c.l.s4 1983009808
    %v718 = vunpack.c.0.s8 %v717
    %v719 = vlaneseq
    %v720 = vshrl.u32 %v719, 7
    %v721 = vsub.s32 %v718, %v720
    %v722 = vrot.slane %v323, %v721
    %v724 = vunpack.c.l.s4 1983009808
    %v725 = vunpack.c.0.s8 %v724
    %v726 = vlaneseq
    %v727 = vshrl.u32 %v726, 7
    %v728 = vsub.s32 %v725, %v727
    %v729 = vrot.slane %v715, %v728
    %v730 = vcombine.high %v722, %v722
    %v731 = vcombine.high %v729, %v729
    %v732 = vcombine.high %v328, %v328
    %v734 = vunpack.c.l.s4 1983009808
    %v735 = vunpack.c.0.s8 %v734
    %v736 = vlaneseq
    %v737 = vshrl.u32 %v736, 7
    %v738 = vsub.s32 %v735, %v737
    %v739 = vrot.slane %v328, %v738
    %v741 = vunpack.c.l.s4 1983009808
    %v742 = vunpack.c.0.s8 %v741
    %v743 = vlaneseq
    %v744 = vshrl.u32 %v743, 7
    %v745 = vsub.s32 %v742, %v744
    %v746 = vrot.slane %v732, %v745
    %v747 = vcombine.high %v739, %v739
    %v748 = vcombine.high %v746, %v746
    %v749 = vcombine.high %v331, %v331
    %v751 = vunpack.c.l.s4 1983009808
    %v752 = vunpack.c.0.s8 %v751
    %v753 = vlaneseq
    %v754 = vshrl.u32 %v753, 7
    %v755 = vsub.s32 %v752, %v754
    %v756 = vrot.slane %v331, %v755
    %v758 = vunpack.c.l.s4 1983009808
    %v759 = vunpack.c.0.s8 %v758
    %v760 = vlaneseq
    %v761 = vshrl.u32 %v760, 7
    %v762 = vsub.s32 %v759, %v761
    %v763 = vrot.slane %v749, %v762
    %v764 = vcombine.high %v756, %v756
    %v765 = vcombine.high %v763, %v763
    %vm862 = vcmask 517120
    %v863 = vsel %vm862, %v365, -inf
    %v864 = vrot.slane %v863, 4
    %v865 = vmax.f32 %v863, %v864
    %v866 = vrot.slane %v865, 2
    %v867 = vmax.f32 %v865, %v866
    %v868 = vrot.slane %v867, 1
    %v869 = vmax.f32 %v867, %v868
    %v870 = vsel %vm862, %v373, -inf
    %v871 = vrot.slane %v870, 4
    %v872 = vmax.f32 %v870, %v871
    %v873 = vrot.slane %v872, 2
    %v874 = vmax.f32 %v872, %v873
    %v875 = vrot.slane %v874, 1
    %v876 = vmax.f32 %v874, %v875
    %v877 = vsel %vm862, %v372, -inf
    %v878 = vrot.slane %v877, 4
    %v879 = vmax.f32 %v877, %v878
    %v880 = vrot.slane %v879, 2
    %v881 = vmax.f32 %v879, %v880
    %v882 = vrot.slane %v881, 1
    %v883 = vmax.f32 %v881, %v882
    %v884 = vsel %vm862, %v374, -inf
    %v885 = vrot.slane %v884, 4
    %v886 = vmax.f32 %v884, %v885
    %v887 = vrot.slane %v886, 2
    %v888 = vmax.f32 %v886, %v887
    %v889 = vrot.slane %v888, 1
    %v890 = vmax.f32 %v888, %v889
    %v891 = vsel %vm862, %v382, -inf
    %v892 = vrot.slane %v891, 4
    %v893 = vmax.f32 %v891, %v892
    %v894 = vrot.slane %v893, 2
    %v895 = vmax.f32 %v893, %v894
    %v896 = vrot.slane %v895, 1
    %v897 = vmax.f32 %v895, %v896
    %v898 = vsel %vm862, %v390, -inf
    %v899 = vrot.slane %v898, 4
    %v900 = vmax.f32 %v898, %v899
    %v901 = vrot.slane %v900, 2
    %v902 = vmax.f32 %v900, %v901
    %v903 = vrot.slane %v902, 1
    %v904 = vmax.f32 %v902, %v903
    %v905 = vsel %vm862, %v389, -inf
    %v906 = vrot.slane %v905, 4
    %v907 = vmax.f32 %v905, %v906
    %v908 = vrot.slane %v907, 2
    %v909 = vmax.f32 %v907, %v908
    %v910 = vrot.slane %v909, 1
    %v911 = vmax.f32 %v909, %v910
    %v912 = vsel %vm862, %v391, -inf
    %v913 = vrot.slane %v912, 4
    %v914 = vmax.f32 %v912, %v913
    %v915 = vrot.slane %v914, 2
    %v916 = vmax.f32 %v914, %v915
    %v917 = vrot.slane %v916, 1
    %v918 = vmax.f32 %v916, %v917
    %v919 = vsel %vm862, %v399, -inf
    %v920 = vrot.slane %v919, 4
    %v921 = vmax.f32 %v919, %v920
    %v922 = vrot.slane %v921, 2
    %v923 = vmax.f32 %v921, %v922
    %v924 = vrot.slane %v923, 1
    %v925 = vmax.f32 %v923, %v924
    %v926 = vsel %vm862, %v407, -inf
    %v927 = vrot.slane %v926, 4
    %v928 = vmax.f32 %v926, %v927
    %v929 = vrot.slane %v928, 2
    %v930 = vmax.f32 %v928, %v929
    %v931 = vrot.slane %v930, 1
    %v932 = vmax.f32 %v930, %v931
    %v933 = vsel %vm862, %v406, -inf
    %v934 = vrot.slane %v933, 4
    %v935 = vmax.f32 %v933, %v934
    %v936 = vrot.slane %v935, 2
    %v937 = vmax.f32 %v935, %v936
    %v938 = vrot.slane %v937, 1
    %v939 = vmax.f32 %v937, %v938
    %v940 = vsel %vm862, %v408, -inf
    %v941 = vrot.slane %v940, 4
    %v942 = vmax.f32 %v940, %v941
    %v943 = vrot.slane %v942, 2
    %v944 = vmax.f32 %v942, %v943
    %v945 = vrot.slane %v944, 1
    %v946 = vmax.f32 %v944, %v945
    %v947 = vsel %vm862, %v416, -inf
    %v948 = vrot.slane %v947, 4
    %v949 = vmax.f32 %v947, %v948
    %v950 = vrot.slane %v949, 2
    %v951 = vmax.f32 %v949, %v950
    %v952 = vrot.slane %v951, 1
    %v953 = vmax.f32 %v951, %v952
    %v954 = vsel %vm862, %v424, -inf
    %v955 = vrot.slane %v954, 4
    %v956 = vmax.f32 %v954, %v955
    %v957 = vrot.slane %v956, 2
    %v958 = vmax.f32 %v956, %v957
    %v959 = vrot.slane %v958, 1
    %v960 = vmax.f32 %v958, %v959
    %v961 = vsel %vm862, %v423, -inf
    %v962 = vrot.slane %v961, 4
    %v963 = vmax.f32 %v961, %v962
    %v964 = vrot.slane %v963, 2
    %v965 = vmax.f32 %v963, %v964
    %v966 = vrot.slane %v965, 1
    %v967 = vmax.f32 %v965, %v966
    %v968 = vsel %vm862, %v425, -inf
    %v969 = vrot.slane %v968, 4
    %v970 = vmax.f32 %v968, %v969
    %v971 = vrot.slane %v970, 2
    %v972 = vmax.f32 %v970, %v971
    %v973 = vrot.slane %v972, 1
    %v974 = vmax.f32 %v972, %v973
    %v975 = vsel %vm862, %v433, -inf
    %v976 = vrot.slane %v975, 4
    %v977 = vmax.f32 %v975, %v976
    %v978 = vrot.slane %v977, 2
    %v979 = vmax.f32 %v977, %v978
    %v980 = vrot.slane %v979, 1
    %v981 = vmax.f32 %v979, %v980
    %v982 = vsel %vm862, %v441, -inf
    %v983 = vrot.slane %v982, 4
    %v984 = vmax.f32 %v982, %v983
    %v985 = vrot.slane %v984, 2
    %v986 = vmax.f32 %v984, %v985
    %v987 = vrot.slane %v986, 1
    %v988 = vmax.f32 %v986, %v987
    %v989 = vsel %vm862, %v440, -inf
    %v990 = vrot.slane %v989, 4
    %v991 = vmax.f32 %v989, %v990
    %v992 = vrot.slane %v991, 2
    %v993 = vmax.f32 %v991, %v992
    %v994 = vrot.slane %v993, 1
    %v995 = vmax.f32 %v993, %v994
    %v996 = vsel %vm862, %v442, -inf
    %v997 = vrot.slane %v996, 4
    %v998 = vmax.f32 %v996, %v997
    %v999 = vrot.slane %v998, 2
    %v1000 = vmax.f32 %v998, %v999
    %v1001 = vrot.slane %v1000, 1
    %v1002 = vmax.f32 %v1000, %v1001
    %v1003 = vsel %vm862, %v450, -inf
    %v1004 = vrot.slane %v1003, 4
    %v1005 = vmax.f32 %v1003, %v1004
    %v1006 = vrot.slane %v1005, 2
    %v1007 = vmax.f32 %v1005, %v1006
    %v1008 = vrot.slane %v1007, 1
    %v1009 = vmax.f32 %v1007, %v1008
    %v1010 = vsel %vm862, %v458, -inf
    %v1011 = vrot.slane %v1010, 4
    %v1012 = vmax.f32 %v1010, %v1011
    %v1013 = vrot.slane %v1012, 2
    %v1014 = vmax.f32 %v1012, %v1013
    %v1015 = vrot.slane %v1014, 1
    %v1016 = vmax.f32 %v1014, %v1015
    %v1017 = vsel %vm862, %v457, -inf
    %v1018 = vrot.slane %v1017, 4
    %v1019 = vmax.f32 %v1017, %v1018
    %v1020 = vrot.slane %v1019, 2
    %v1021 = vmax.f32 %v1019, %v1020
    %v1022 = vrot.slane %v1021, 1
    %v1023 = vmax.f32 %v1021, %v1022
    %v1024 = vsel %vm862, %v459, -inf
    %v1025 = vrot.slane %v1024, 4
    %v1026 = vmax.f32 %v1024, %v1025
    %v1027 = vrot.slane %v1026, 2
    %v1028 = vmax.f32 %v1026, %v1027
    %v1029 = vrot.slane %v1028, 1
    %v1030 = vmax.f32 %v1028, %v1029
    %v1031 = vsel %vm862, %v467, -inf
    %v1032 = vrot.slane %v1031, 4
    %v1033 = vmax.f32 %v1031, %v1032
    %v1034 = vrot.slane %v1033, 2
    %v1035 = vmax.f32 %v1033, %v1034
    %v1036 = vrot.slane %v1035, 1
    %v1037 = vmax.f32 %v1035, %v1036
    %v1038 = vsel %vm862, %v475, -inf
    %v1039 = vrot.slane %v1038, 4
    %v1040 = vmax.f32 %v1038, %v1039
    %v1041 = vrot.slane %v1040, 2
    %v1042 = vmax.f32 %v1040, %v1041
    %v1043 = vrot.slane %v1042, 1
    %v1044 = vmax.f32 %v1042, %v1043
    %v1045 = vsel %vm862, %v474, -inf
    %v1046 = vrot.slane %v1045, 4
    %v1047 = vmax.f32 %v1045, %v1046
    %v1048 = vrot.slane %v1047, 2
    %v1049 = vmax.f32 %v1047, %v1048
    %v1050 = vrot.slane %v1049, 1
    %v1051 = vmax.f32 %v1049, %v1050
    %v1052 = vsel %vm862, %v476, -inf
    %v1053 = vrot.slane %v1052, 4
    %v1054 = vmax.f32 %v1052, %v1053
    %v1055 = vrot.slane %v1054, 2
    %v1056 = vmax.f32 %v1054, %v1055
    %v1057 = vrot.slane %v1056, 1
    %v1058 = vmax.f32 %v1056, %v1057
    %v1059 = vsel %vm862, %v484, -inf
    %v1060 = vrot.slane %v1059, 4
    %v1061 = vmax.f32 %v1059, %v1060
    %v1062 = vrot.slane %v1061, 2
    %v1063 = vmax.f32 %v1061, %v1062
    %v1064 = vrot.slane %v1063, 1
    %v1065 = vmax.f32 %v1063, %v1064
    %v1066 = vsel %vm862, %v492, -inf
    %v1067 = vrot.slane %v1066, 4
    %v1068 = vmax.f32 %v1066, %v1067
    %v1069 = vrot.slane %v1068, 2
    %v1070 = vmax.f32 %v1068, %v1069
    %v1071 = vrot.slane %v1070, 1
    %v1072 = vmax.f32 %v1070, %v1071
    %v1073 = vsel %vm862, %v491, -inf
    %v1074 = vrot.slane %v1073, 4
    %v1075 = vmax.f32 %v1073, %v1074
    %v1076 = vrot.slane %v1075, 2
    %v1077 = vmax.f32 %v1075, %v1076
    %v1078 = vrot.slane %v1077, 1
    %v1079 = vmax.f32 %v1077, %v1078
    %v1080 = vsel %vm862, %v493, -inf
    %v1081 = vrot.slane %v1080, 4
    %v1082 = vmax.f32 %v1080, %v1081
    %v1083 = vrot.slane %v1082, 2
    %v1084 = vmax.f32 %v1082, %v1083
    %v1085 = vrot.slane %v1084, 1
    %v1086 = vmax.f32 %v1084, %v1085
    %v1087 = vsel %vm862, %v501, -inf
    %v1088 = vrot.slane %v1087, 4
    %v1089 = vmax.f32 %v1087, %v1088
    %v1090 = vrot.slane %v1089, 2
    %v1091 = vmax.f32 %v1089, %v1090
    %v1092 = vrot.slane %v1091, 1
    %v1093 = vmax.f32 %v1091, %v1092
    %v1094 = vsel %vm862, %v509, -inf
    %v1095 = vrot.slane %v1094, 4
    %v1096 = vmax.f32 %v1094, %v1095
    %v1097 = vrot.slane %v1096, 2
    %v1098 = vmax.f32 %v1096, %v1097
    %v1099 = vrot.slane %v1098, 1
    %v1100 = vmax.f32 %v1098, %v1099
    %v1101 = vsel %vm862, %v508, -inf
    %v1102 = vrot.slane %v1101, 4
    %v1103 = vmax.f32 %v1101, %v1102
    %v1104 = vrot.slane %v1103, 2
    %v1105 = vmax.f32 %v1103, %v1104
    %v1106 = vrot.slane %v1105, 1
    %v1107 = vmax.f32 %v1105, %v1106
    %v1108 = vsel %vm862, %v510, -inf
    %v1109 = vrot.slane %v1108, 4
    %v1110 = vmax.f32 %v1108, %v1109
    %v1111 = vrot.slane %v1110, 2
    %v1112 = vmax.f32 %v1110, %v1111
    %v1113 = vrot.slane %v1112, 1
    %v1114 = vmax.f32 %v1112, %v1113
    %v1115 = vsel %vm862, %v518, -inf
    %v1116 = vrot.slane %v1115, 4
    %v1117 = vmax.f32 %v1115, %v1116
    %v1118 = vrot.slane %v1117, 2
    %v1119 = vmax.f32 %v1117, %v1118
    %v1120 = vrot.slane %v1119, 1
    %v1121 = vmax.f32 %v1119, %v1120
    %v1122 = vsel %vm862, %v526, -inf
    %v1123 = vrot.slane %v1122, 4
    %v1124 = vmax.f32 %v1122, %v1123
    %v1125 = vrot.slane %v1124, 2
    %v1126 = vmax.f32 %v1124, %v1125
    %v1127 = vrot.slane %v1126, 1
    %v1128 = vmax.f32 %v1126, %v1127
    %v1129 = vsel %vm862, %v525, -inf
    %v1130 = vrot.slane %v1129, 4
    %v1131 = vmax.f32 %v1129, %v1130
    %v1132 = vrot.slane %v1131, 2
    %v1133 = vmax.f32 %v1131, %v1132
    %v1134 = vrot.slane %v1133, 1
    %v1135 = vmax.f32 %v1133, %v1134
    %v1136 = vsel %vm862, %v527, -inf
    %v1137 = vrot.slane %v1136, 4
    %v1138 = vmax.f32 %v1136, %v1137
    %v1139 = vrot.slane %v1138, 2
    %v1140 = vmax.f32 %v1138, %v1139
    %v1141 = vrot.slane %v1140, 1
    %v1142 = vmax.f32 %v1140, %v1141
    %v1143 = vsel %vm862, %v535, -inf
    %v1144 = vrot.slane %v1143, 4
    %v1145 = vmax.f32 %v1143, %v1144
    %v1146 = vrot.slane %v1145, 2
    %v1147 = vmax.f32 %v1145, %v1146
    %v1148 = vrot.slane %v1147, 1
    %v1149 = vmax.f32 %v1147, %v1148
    %v1150 = vsel %vm862, %v543, -inf
    %v1151 = vrot.slane %v1150, 4
    %v1152 = vmax.f32 %v1150, %v1151
    %v1153 = vrot.slane %v1152, 2
    %v1154 = vmax.f32 %v1152, %v1153
    %v1155 = vrot.slane %v1154, 1
    %v1156 = vmax.f32 %v1154, %v1155
    %v1157 = vsel %vm862, %v542, -inf
    %v1158 = vrot.slane %v1157, 4
    %v1159 = vmax.f32 %v1157, %v1158
    %v1160 = vrot.slane %v1159, 2
    %v1161 = vmax.f32 %v1159, %v1160
    %v1162 = vrot.slane %v1161, 1
    %v1163 = vmax.f32 %v1161, %v1162
    %v1164 = vsel %vm862, %v544, -inf
    %v1165 = vrot.slane %v1164, 4
    %v1166 = vmax.f32 %v1164, %v1165
    %v1167 = vrot.slane %v1166, 2
    %v1168 = vmax.f32 %v1166, %v1167
    %v1169 = vrot.slane %v1168, 1
    %v1170 = vmax.f32 %v1168, %v1169
    %v1171 = vsel %vm862, %v552, -inf
    %v1172 = vrot.slane %v1171, 4
    %v1173 = vmax.f32 %v1171, %v1172
    %v1174 = vrot.slane %v1173, 2
    %v1175 = vmax.f32 %v1173, %v1174
    %v1176 = vrot.slane %v1175, 1
    %v1177 = vmax.f32 %v1175, %v1176
    %v1178 = vsel %vm862, %v560, -inf
    %v1179 = vrot.slane %v1178, 4
    %v1180 = vmax.f32 %v1178, %v1179
    %v1181 = vrot.slane %v1180, 2
    %v1182 = vmax.f32 %v1180, %v1181
    %v1183 = vrot.slane %v1182, 1
    %v1184 = vmax.f32 %v1182, %v1183
    %v1185 = vsel %vm862, %v559, -inf
    %v1186 = vrot.slane %v1185, 4
    %v1187 = vmax.f32 %v1185, %v1186
    %v1188 = vrot.slane %v1187, 2
    %v1189 = vmax.f32 %v1187, %v1188
    %v1190 = vrot.slane %v1189, 1
    %v1191 = vmax.f32 %v1189, %v1190
    %v1192 = vsel %vm862, %v561, -inf
    %v1193 = vrot.slane %v1192, 4
    %v1194 = vmax.f32 %v1192, %v1193
    %v1195 = vrot.slane %v1194, 2
    %v1196 = vmax.f32 %v1194, %v1195
    %v1197 = vrot.slane %v1196, 1
    %v1198 = vmax.f32 %v1196, %v1197
    %v1199 = vsel %vm862, %v569, -inf
    %v1200 = vrot.slane %v1199, 4
    %v1201 = vmax.f32 %v1199, %v1200
    %v1202 = vrot.slane %v1201, 2
    %v1203 = vmax.f32 %v1201, %v1202
    %v1204 = vrot.slane %v1203, 1
    %v1205 = vmax.f32 %v1203, %v1204
    %v1206 = vsel %vm862, %v577, -inf
    %v1207 = vrot.slane %v1206, 4
    %v1208 = vmax.f32 %v1206, %v1207
    %v1209 = vrot.slane %v1208, 2
    %v1210 = vmax.f32 %v1208, %v1209
    %v1211 = vrot.slane %v1210, 1
    %v1212 = vmax.f32 %v1210, %v1211
    %v1213 = vsel %vm862, %v576, -inf
    %v1214 = vrot.slane %v1213, 4
    %v1215 = vmax.f32 %v1213, %v1214
    %v1216 = vrot.slane %v1215, 2
    %v1217 = vmax.f32 %v1215, %v1216
    %v1218 = vrot.slane %v1217, 1
    %v1219 = vmax.f32 %v1217, %v1218
    %v1220 = vsel %vm862, %v578, -inf
    %v1221 = vrot.slane %v1220, 4
    %v1222 = vmax.f32 %v1220, %v1221
    %v1223 = vrot.slane %v1222, 2
    %v1224 = vmax.f32 %v1222, %v1223
    %v1225 = vrot.slane %v1224, 1
    %v1226 = vmax.f32 %v1224, %v1225
    %v1227 = vsel %vm862, %v586, -inf
    %v1228 = vrot.slane %v1227, 4
    %v1229 = vmax.f32 %v1227, %v1228
    %v1230 = vrot.slane %v1229, 2
    %v1231 = vmax.f32 %v1229, %v1230
    %v1232 = vrot.slane %v1231, 1
    %v1233 = vmax.f32 %v1231, %v1232
    %v1234 = vsel %vm862, %v594, -inf
    %v1235 = vrot.slane %v1234, 4
    %v1236 = vmax.f32 %v1234, %v1235
    %v1237 = vrot.slane %v1236, 2
    %v1238 = vmax.f32 %v1236, %v1237
    %v1239 = vrot.slane %v1238, 1
    %v1240 = vmax.f32 %v1238, %v1239
    %v1241 = vsel %vm862, %v593, -inf
    %v1242 = vrot.slane %v1241, 4
    %v1243 = vmax.f32 %v1241, %v1242
    %v1244 = vrot.slane %v1243, 2
    %v1245 = vmax.f32 %v1243, %v1244
    %v1246 = vrot.slane %v1245, 1
    %v1247 = vmax.f32 %v1245, %v1246
    %v1248 = vsel %vm862, %v595, -inf
    %v1249 = vrot.slane %v1248, 4
    %v1250 = vmax.f32 %v1248, %v1249
    %v1251 = vrot.slane %v1250, 2
    %v1252 = vmax.f32 %v1250, %v1251
    %v1253 = vrot.slane %v1252, 1
    %v1254 = vmax.f32 %v1252, %v1253
    %v1255 = vsel %vm862, %v603, -inf
    %v1256 = vrot.slane %v1255, 4
    %v1257 = vmax.f32 %v1255, %v1256
    %v1258 = vrot.slane %v1257, 2
    %v1259 = vmax.f32 %v1257, %v1258
    %v1260 = vrot.slane %v1259, 1
    %v1261 = vmax.f32 %v1259, %v1260
    %v1262 = vsel %vm862, %v611, -inf
    %v1263 = vrot.slane %v1262, 4
    %v1264 = vmax.f32 %v1262, %v1263
    %v1265 = vrot.slane %v1264, 2
    %v1266 = vmax.f32 %v1264, %v1265
    %v1267 = vrot.slane %v1266, 1
    %v1268 = vmax.f32 %v1266, %v1267
    %v1269 = vsel %vm862, %v610, -inf
    %v1270 = vrot.slane %v1269, 4
    %v1271 = vmax.f32 %v1269, %v1270
    %v1272 = vrot.slane %v1271, 2
    %v1273 = vmax.f32 %v1271, %v1272
    %v1274 = vrot.slane %v1273, 1
    %v1275 = vmax.f32 %v1273, %v1274
    %v1276 = vsel %vm862, %v612, -inf
    %v1277 = vrot.slane %v1276, 4
    %v1278 = vmax.f32 %v1276, %v1277
    %v1279 = vrot.slane %v1278, 2
    %v1280 = vmax.f32 %v1278, %v1279
    %v1281 = vrot.slane %v1280, 1
    %v1282 = vmax.f32 %v1280, %v1281
    %v1283 = vsel %vm862, %v620, -inf
    %v1284 = vrot.slane %v1283, 4
    %v1285 = vmax.f32 %v1283, %v1284
    %v1286 = vrot.slane %v1285, 2
    %v1287 = vmax.f32 %v1285, %v1286
    %v1288 = vrot.slane %v1287, 1
    %v1289 = vmax.f32 %v1287, %v1288
    %v1290 = vsel %vm862, %v628, -inf
    %v1291 = vrot.slane %v1290, 4
    %v1292 = vmax.f32 %v1290, %v1291
    %v1293 = vrot.slane %v1292, 2
    %v1294 = vmax.f32 %v1292, %v1293
    %v1295 = vrot.slane %v1294, 1
    %v1296 = vmax.f32 %v1294, %v1295
    %v1297 = vsel %vm862, %v627, -inf
    %v1298 = vrot.slane %v1297, 4
    %v1299 = vmax.f32 %v1297, %v1298
    %v1300 = vrot.slane %v1299, 2
    %v1301 = vmax.f32 %v1299, %v1300
    %v1302 = vrot.slane %v1301, 1
    %v1303 = vmax.f32 %v1301, %v1302
    %v1304 = vsel %vm862, %v629, -inf
    %v1305 = vrot.slane %v1304, 4
    %v1306 = vmax.f32 %v1304, %v1305
    %v1307 = vrot.slane %v1306, 2
    %v1308 = vmax.f32 %v1306, %v1307
    %v1309 = vrot.slane %v1308, 1
    %v1310 = vmax.f32 %v1308, %v1309
    %v1311 = vsel %vm862, %v637, -inf
    %v1312 = vrot.slane %v1311, 4
    %v1313 = vmax.f32 %v1311, %v1312
    %v1314 = vrot.slane %v1313, 2
    %v1315 = vmax.f32 %v1313, %v1314
    %v1316 = vrot.slane %v1315, 1
    %v1317 = vmax.f32 %v1315, %v1316
    %v1318 = vsel %vm862, %v645, -inf
    %v1319 = vrot.slane %v1318, 4
    %v1320 = vmax.f32 %v1318, %v1319
    %v1321 = vrot.slane %v1320, 2
    %v1322 = vmax.f32 %v1320, %v1321
    %v1323 = vrot.slane %v1322, 1
    %v1324 = vmax.f32 %v1322, %v1323
    %v1325 = vsel %vm862, %v644, -inf
    %v1326 = vrot.slane %v1325, 4
    %v1327 = vmax.f32 %v1325, %v1326
    %v1328 = vrot.slane %v1327, 2
    %v1329 = vmax.f32 %v1327, %v1328
    %v1330 = vrot.slane %v1329, 1
    %v1331 = vmax.f32 %v1329, %v1330
    %v1332 = vsel %vm862, %v646, -inf
    %v1333 = vrot.slane %v1332, 4
    %v1334 = vmax.f32 %v1332, %v1333
    %v1335 = vrot.slane %v1334, 2
    %v1336 = vmax.f32 %v1334, %v1335
    %v1337 = vrot.slane %v1336, 1
    %v1338 = vmax.f32 %v1336, %v1337
    %v1339 = vsel %vm862, %v654, -inf
    %v1340 = vrot.slane %v1339, 4
    %v1341 = vmax.f32 %v1339, %v1340
    %v1342 = vrot.slane %v1341, 2
    %v1343 = vmax.f32 %v1341, %v1342
    %v1344 = vrot.slane %v1343, 1
    %v1345 = vmax.f32 %v1343, %v1344
    %v1346 = vsel %vm862, %v662, -inf
    %v1347 = vrot.slane %v1346, 4
    %v1348 = vmax.f32 %v1346, %v1347
    %v1349 = vrot.slane %v1348, 2
    %v1350 = vmax.f32 %v1348, %v1349
    %v1351 = vrot.slane %v1350, 1
    %v1352 = vmax.f32 %v1350, %v1351
    %v1353 = vsel %vm862, %v661, -inf
    %v1354 = vrot.slane %v1353, 4
    %v1355 = vmax.f32 %v1353, %v1354
    %v1356 = vrot.slane %v1355, 2
    %v1357 = vmax.f32 %v1355, %v1356
    %v1358 = vrot.slane %v1357, 1
    %v1359 = vmax.f32 %v1357, %v1358
    %v1360 = vsel %vm862, %v663, -inf
    %v1361 = vrot.slane %v1360, 4
    %v1362 = vmax.f32 %v1360, %v1361
    %v1363 = vrot.slane %v1362, 2
    %v1364 = vmax.f32 %v1362, %v1363
    %v1365 = vrot.slane %v1364, 1
    %v1366 = vmax.f32 %v1364, %v1365
    %v1367 = vsel %vm862, %v671, -inf
    %v1368 = vrot.slane %v1367, 4
    %v1369 = vmax.f32 %v1367, %v1368
    %v1370 = vrot.slane %v1369, 2
    %v1371 = vmax.f32 %v1369, %v1370
    %v1372 = vrot.slane %v1371, 1
    %v1373 = vmax.f32 %v1371, %v1372
    %v1374 = vsel %vm862, %v679, -inf
    %v1375 = vrot.slane %v1374, 4
    %v1376 = vmax.f32 %v1374, %v1375
    %v1377 = vrot.slane %v1376, 2
    %v1378 = vmax.f32 %v1376, %v1377
    %v1379 = vrot.slane %v1378, 1
    %v1380 = vmax.f32 %v1378, %v1379
    %v1381 = vsel %vm862, %v678, -inf
    %v1382 = vrot.slane %v1381, 4
    %v1383 = vmax.f32 %v1381, %v1382
    %v1384 = vrot.slane %v1383, 2
    %v1385 = vmax.f32 %v1383, %v1384
    %v1386 = vrot.slane %v1385, 1
    %v1387 = vmax.f32 %v1385, %v1386
    %v1388 = vsel %vm862, %v680, -inf
    %v1389 = vrot.slane %v1388, 4
    %v1390 = vmax.f32 %v1388, %v1389
    %v1391 = vrot.slane %v1390, 2
    %v1392 = vmax.f32 %v1390, %v1391
    %v1393 = vrot.slane %v1392, 1
    %v1394 = vmax.f32 %v1392, %v1393
    %v1395 = vsel %vm862, %v688, -inf
    %v1396 = vrot.slane %v1395, 4
    %v1397 = vmax.f32 %v1395, %v1396
    %v1398 = vrot.slane %v1397, 2
    %v1399 = vmax.f32 %v1397, %v1398
    %v1400 = vrot.slane %v1399, 1
    %v1401 = vmax.f32 %v1399, %v1400
    %v1402 = vsel %vm862, %v696, -inf
    %v1403 = vrot.slane %v1402, 4
    %v1404 = vmax.f32 %v1402, %v1403
    %v1405 = vrot.slane %v1404, 2
    %v1406 = vmax.f32 %v1404, %v1405
    %v1407 = vrot.slane %v1406, 1
    %v1408 = vmax.f32 %v1406, %v1407
    %v1409 = vsel %vm862, %v695, -inf
    %v1410 = vrot.slane %v1409, 4
    %v1411 = vmax.f32 %v1409, %v1410
    %v1412 = vrot.slane %v1411, 2
    %v1413 = vmax.f32 %v1411, %v1412
    %v1414 = vrot.slane %v1413, 1
    %v1415 = vmax.f32 %v1413, %v1414
    %v1416 = vsel %vm862, %v697, -inf
    %v1417 = vrot.slane %v1416, 4
    %v1418 = vmax.f32 %v1416, %v1417
    %v1419 = vrot.slane %v1418, 2
    %v1420 = vmax.f32 %v1418, %v1419
    %v1421 = vrot.slane %v1420, 1
    %v1422 = vmax.f32 %v1420, %v1421
    %v1423 = vsel %vm862, %v705, -inf
    %v1424 = vrot.slane %v1423, 4
    %v1425 = vmax.f32 %v1423, %v1424
    %v1426 = vrot.slane %v1425, 2
    %v1427 = vmax.f32 %v1425, %v1426
    %v1428 = vrot.slane %v1427, 1
    %v1429 = vmax.f32 %v1427, %v1428
    %v1430 = vsel %vm862, %v713, -inf
    %v1431 = vrot.slane %v1430, 4
    %v1432 = vmax.f32 %v1430, %v1431
    %v1433 = vrot.slane %v1432, 2
    %v1434 = vmax.f32 %v1432, %v1433
    %v1435 = vrot.slane %v1434, 1
    %v1436 = vmax.f32 %v1434, %v1435
    %v1437 = vsel %vm862, %v712, -inf
    %v1438 = vrot.slane %v1437, 4
    %v1439 = vmax.f32 %v1437, %v1438
    %v1440 = vrot.slane %v1439, 2
    %v1441 = vmax.f32 %v1439, %v1440
    %v1442 = vrot.slane %v1441, 1
    %v1443 = vmax.f32 %v1441, %v1442
    %v1444 = vsel %vm862, %v714, -inf
    %v1445 = vrot.slane %v1444, 4
    %v1446 = vmax.f32 %v1444, %v1445
    %v1447 = vrot.slane %v1446, 2
    %v1448 = vmax.f32 %v1446, %v1447
    %v1449 = vrot.slane %v1448, 1
    %v1450 = vmax.f32 %v1448, %v1449
    %v1451 = vsel %vm862, %v722, -inf
    %v1452 = vrot.slane %v1451, 4
    %v1453 = vmax.f32 %v1451, %v1452
    %v1454 = vrot.slane %v1453, 2
    %v1455 = vmax.f32 %v1453, %v1454
    %v1456 = vrot.slane %v1455, 1
    %v1457 = vmax.f32 %v1455, %v1456
    %v1458 = vsel %vm862, %v730, -inf
    %v1459 = vrot.slane %v1458, 4
    %v1460 = vmax.f32 %v1458, %v1459
    %v1461 = vrot.slane %v1460, 2
    %v1462 = vmax.f32 %v1460, %v1461
    %v1463 = vrot.slane %v1462, 1
    %v1464 = vmax.f32 %v1462, %v1463
    %v1465 = vsel %vm862, %v729, -inf
    %v1466 = vrot.slane %v1465, 4
    %v1467 = vmax.f32 %v1465, %v1466
    %v1468 = vrot.slane %v1467, 2
    %v1469 = vmax.f32 %v1467, %v1468
    %v1470 = vrot.slane %v1469, 1
    %v1471 = vmax.f32 %v1469, %v1470
    %v1472 = vsel %vm862, %v731, -inf
    %v1473 = vrot.slane %v1472, 4
    %v1474 = vmax.f32 %v1472, %v1473
    %v1475 = vrot.slane %v1474, 2
    %v1476 = vmax.f32 %v1474, %v1475
    %v1477 = vrot.slane %v1476, 1
    %v1478 = vmax.f32 %v1476, %v1477
    %v1479 = vsel %vm862, %v739, -inf
    %v1480 = vrot.slane %v1479, 4
    %v1481 = vmax.f32 %v1479, %v1480
    %v1482 = vrot.slane %v1481, 2
    %v1483 = vmax.f32 %v1481, %v1482
    %v1484 = vrot.slane %v1483, 1
    %v1485 = vmax.f32 %v1483, %v1484
    %v1486 = vsel %vm862, %v747, -inf
    %v1487 = vrot.slane %v1486, 4
    %v1488 = vmax.f32 %v1486, %v1487
    %v1489 = vrot.slane %v1488, 2
    %v1490 = vmax.f32 %v1488, %v1489
    %v1491 = vrot.slane %v1490, 1
    %v1492 = vmax.f32 %v1490, %v1491
    %v1493 = vsel %vm862, %v746, -inf
    %v1494 = vrot.slane %v1493, 4
    %v1495 = vmax.f32 %v1493, %v1494
    %v1496 = vrot.slane %v1495, 2
    %v1497 = vmax.f32 %v1495, %v1496
    %v1498 = vrot.slane %v1497, 1
    %v1499 = vmax.f32 %v1497, %v1498
    %v1500 = vsel %vm862, %v748, -inf
    %v1501 = vrot.slane %v1500, 4
    %v1502 = vmax.f32 %v1500, %v1501
    %v1503 = vrot.slane %v1502, 2
    %v1504 = vmax.f32 %v1502, %v1503
    %v1505 = vrot.slane %v1504, 1
    %v1506 = vmax.f32 %v1504, %v1505
    %v1507 = vsel %vm862, %v756, -inf
    %v1508 = vrot.slane %v1507, 4
    %v1509 = vmax.f32 %v1507, %v1508
    %v1510 = vrot.slane %v1509, 2
    %v1511 = vmax.f32 %v1509, %v1510
    %v1512 = vrot.slane %v1511, 1
    %v1513 = vmax.f32 %v1511, %v1512
    %v1514 = vsel %vm862, %v764, -inf
    %v1515 = vrot.slane %v1514, 4
    %v1516 = vmax.f32 %v1514, %v1515
    %v1517 = vrot.slane %v1516, 2
    %v1518 = vmax.f32 %v1516, %v1517
    %v1519 = vrot.slane %v1518, 1
    %v1520 = vmax.f32 %v1518, %v1519
    %v1521 = vsel %vm862, %v763, -inf
    %v1522 = vrot.slane %v1521, 4
    %v1523 = vmax.f32 %v1521, %v1522
    %v1524 = vrot.slane %v1523, 2
    %v1525 = vmax.f32 %v1523, %v1524
    %v1526 = vrot.slane %v1525, 1
    %v1527 = vmax.f32 %v1525, %v1526
    %v1528 = vsel %vm862, %v765, -inf
    %v1529 = vrot.slane %v1528, 4
    %v1530 = vmax.f32 %v1528, %v1529
    %v1531 = vrot.slane %v1530, 2
    %v1532 = vmax.f32 %v1530, %v1531
    %v1533 = vrot.slane %v1532, 1
    %v1534 = vmax.f32 %v1532, %v1533
    %v1535 = vld [vmem:[%s2] sm:$0x1]
    %v1537 = vlaneseq
    %v1538 = vshrl.u32 %v1537, 7
    %v1539 = vsub.s32 0, %v1538
    %v1540 = vrot.slane %v1535, %v1539
    %v1542 = vadd.f32 %v869, %v1540
    %v1543 = vadd.f32 %v876, %v1540
    %v1544 = vadd.f32 %v883, %v1540
    %v1545 = vadd.f32 %v890, %v1540
    %v1546 = vadd.f32 %v897, %v1540
    %v1547 = vadd.f32 %v904, %v1540
    %v1548 = vadd.f32 %v911, %v1540
    %v1549 = vadd.f32 %v918, %v1540
    %v1550 = vadd.f32 %v925, %v1540
    %v1551 = vadd.f32 %v932, %v1540
    %v1552 = vadd.f32 %v939, %v1540
    %v1553 = vadd.f32 %v946, %v1540
    %v1554 = vadd.f32 %v953, %v1540
    %v1555 = vadd.f32 %v960, %v1540
    %v1556 = vadd.f32 %v967, %v1540
    %v1557 = vadd.f32 %v974, %v1540
    %v1558 = vadd.f32 %v981, %v1540
    %v1559 = vadd.f32 %v988, %v1540
    %v1560 = vadd.f32 %v995, %v1540
    %v1561 = vadd.f32 %v1002, %v1540
    %v1562 = vadd.f32 %v1009, %v1540
    %v1563 = vadd.f32 %v1016, %v1540
    %v1564 = vadd.f32 %v1023, %v1540
    %v1565 = vadd.f32 %v1030, %v1540
    %v1566 = vadd.f32 %v1037, %v1540
    %v1567 = vadd.f32 %v1044, %v1540
    %v1568 = vadd.f32 %v1051, %v1540
    %v1569 = vadd.f32 %v1058, %v1540
    %v1570 = vadd.f32 %v1065, %v1540
    %v1571 = vadd.f32 %v1072, %v1540
    %v1572 = vadd.f32 %v1079, %v1540
    %v1573 = vadd.f32 %v1086, %v1540
    %v1574 = vadd.f32 %v1093, %v1540
    %v1575 = vadd.f32 %v1100, %v1540
    %v1576 = vadd.f32 %v1107, %v1540
    %v1577 = vadd.f32 %v1114, %v1540
    %v1578 = vadd.f32 %v1121, %v1540
    %v1579 = vadd.f32 %v1128, %v1540
    %v1580 = vadd.f32 %v1135, %v1540
    %v1581 = vadd.f32 %v1142, %v1540
    %v1582 = vadd.f32 %v1149, %v1540
    %v1583 = vadd.f32 %v1156, %v1540
    %v1584 = vadd.f32 %v1163, %v1540
    %v1585 = vadd.f32 %v1170, %v1540
    %v1586 = vadd.f32 %v1177, %v1540
    %v1587 = vadd.f32 %v1184, %v1540
    %v1588 = vadd.f32 %v1191, %v1540
    %v1589 = vadd.f32 %v1198, %v1540
    %v1590 = vadd.f32 %v1205, %v1540
    %v1591 = vadd.f32 %v1212, %v1540
    %v1592 = vadd.f32 %v1219, %v1540
    %v1593 = vadd.f32 %v1226, %v1540
    %v1594 = vadd.f32 %v1233, %v1540
    %v1595 = vadd.f32 %v1240, %v1540
    %v1596 = vadd.f32 %v1247, %v1540
    %v1597 = vadd.f32 %v1254, %v1540
    %v1598 = vadd.f32 %v1261, %v1540
    %v1599 = vadd.f32 %v1268, %v1540
    %v1600 = vadd.f32 %v1275, %v1540
    %v1601 = vadd.f32 %v1282, %v1540
    %v1602 = vadd.f32 %v1289, %v1540
    %v1603 = vadd.f32 %v1296, %v1540
    %v1604 = vadd.f32 %v1303, %v1540
    %v1605 = vadd.f32 %v1310, %v1540
    %v1606 = vadd.f32 %v1317, %v1540
    %v1607 = vadd.f32 %v1324, %v1540
    %v1608 = vadd.f32 %v1331, %v1540
    %v1609 = vadd.f32 %v1338, %v1540
    %v1610 = vadd.f32 %v1345, %v1540
    %v1611 = vadd.f32 %v1352, %v1540
    %v1612 = vadd.f32 %v1359, %v1540
    %v1613 = vadd.f32 %v1366, %v1540
    %v1614 = vadd.f32 %v1373, %v1540
    %v1615 = vadd.f32 %v1380, %v1540
    %v1616 = vadd.f32 %v1387, %v1540
    %v1617 = vadd.f32 %v1394, %v1540
    %v1618 = vadd.f32 %v1401, %v1540
    %v1619 = vadd.f32 %v1408, %v1540
    %v1620 = vadd.f32 %v1415, %v1540
    %v1621 = vadd.f32 %v1422, %v1540
    %v1622 = vadd.f32 %v1429, %v1540
    %v1623 = vadd.f32 %v1436, %v1540
    %v1624 = vadd.f32 %v1443, %v1540
    %v1625 = vadd.f32 %v1450, %v1540
    %v1626 = vadd.f32 %v1457, %v1540
    %v1627 = vadd.f32 %v1464, %v1540
    %v1628 = vadd.f32 %v1471, %v1540
    %v1629 = vadd.f32 %v1478, %v1540
    %v1630 = vadd.f32 %v1485, %v1540
    %v1631 = vadd.f32 %v1492, %v1540
    %v1632 = vadd.f32 %v1499, %v1540
    %v1633 = vadd.f32 %v1506, %v1540
    %v1634 = vadd.f32 %v1513, %v1540
    %v1635 = vadd.f32 %v1520, %v1540
    %v1636 = vadd.f32 %v1527, %v1540
    %v1637 = vadd.f32 %v1534, %v1540
    %v1638 = vmax.f32 %v1542, 0.0
    %v1639 = vmax.f32 %v1543, 0.0
    %v1640 = vmax.f32 %v1544, 0.0
    %v1641 = vmax.f32 %v1545, 0.0
    %v1642 = vmax.f32 %v1546, 0.0
    %v1643 = vmax.f32 %v1547, 0.0
    %v1644 = vmax.f32 %v1548, 0.0
    %v1645 = vmax.f32 %v1549, 0.0
    %v1646 = vmax.f32 %v1550, 0.0
    %v1647 = vmax.f32 %v1551, 0.0
    %v1648 = vmax.f32 %v1552, 0.0
    %v1649 = vmax.f32 %v1553, 0.0
    %v1650 = vmax.f32 %v1554, 0.0
    %v1651 = vmax.f32 %v1555, 0.0
    %v1652 = vmax.f32 %v1556, 0.0
    %v1653 = vmax.f32 %v1557, 0.0
    %v1654 = vmax.f32 %v1558, 0.0
    %v1655 = vmax.f32 %v1559, 0.0
    %v1656 = vmax.f32 %v1560, 0.0
    %v1657 = vmax.f32 %v1561, 0.0
    %v1658 = vmax.f32 %v1562, 0.0
    %v1659 = vmax.f32 %v1563, 0.0
    %v1660 = vmax.f32 %v1564, 0.0
    %v1661 = vmax.f32 %v1565, 0.0
    %v1662 = vmax.f32 %v1566, 0.0
    %v1663 = vmax.f32 %v1567, 0.0
    %v1664 = vmax.f32 %v1568, 0.0
    %v1665 = vmax.f32 %v1569, 0.0
    %v1666 = vmax.f32 %v1570, 0.0
    %v1667 = vmax.f32 %v1571, 0.0
    %v1668 = vmax.f32 %v1572, 0.0
    %v1669 = vmax.f32 %v1573, 0.0
    %v1670 = vmax.f32 %v1574, 0.0
    %v1671 = vmax.f32 %v1575, 0.0
    %v1672 = vmax.f32 %v1576, 0.0
    %v1673 = vmax.f32 %v1577, 0.0
    %v1674 = vmax.f32 %v1578, 0.0
    %v1675 = vmax.f32 %v1579, 0.0
    %v1676 = vmax.f32 %v1580, 0.0
    %v1677 = vmax.f32 %v1581, 0.0
    %v1678 = vmax.f32 %v1582, 0.0
    %v1679 = vmax.f32 %v1583, 0.0
    %v1680 = vmax.f32 %v1584, 0.0
    %v1681 = vmax.f32 %v1585, 0.0
    %v1682 = vmax.f32 %v1586, 0.0
    %v1683 = vmax.f32 %v1587, 0.0
    %v1684 = vmax.f32 %v1588, 0.0
    %v1685 = vmax.f32 %v1589, 0.0
    %v1686 = vmax.f32 %v1590, 0.0
    %v1687 = vmax.f32 %v1591, 0.0
    %v1688 = vmax.f32 %v1592, 0.0
    %v1689 = vmax.f32 %v1593, 0.0
    %v1690 = vmax.f32 %v1594, 0.0
    %v1691 = vmax.f32 %v1595, 0.0
    %v1692 = vmax.f32 %v1596, 0.0
    %v1693 = vmax.f32 %v1597, 0.0
    %v1694 = vmax.f32 %v1598, 0.0
    %v1695 = vmax.f32 %v1599, 0.0
    %v1696 = vmax.f32 %v1600, 0.0
    %v1697 = vmax.f32 %v1601, 0.0
    %v1698 = vmax.f32 %v1602, 0.0
    %v1699 = vmax.f32 %v1603, 0.0
    %v1700 = vmax.f32 %v1604, 0.0
    %v1701 = vmax.f32 %v1605, 0.0
    %v1702 = vmax.f32 %v1606, 0.0
    %v1703 = vmax.f32 %v1607, 0.0
    %v1704 = vmax.f32 %v1608, 0.0
    %v1705 = vmax.f32 %v1609, 0.0
    %v1706 = vmax.f32 %v1610, 0.0
    %v1707 = vmax.f32 %v1611, 0.0
    %v1708 = vmax.f32 %v1612, 0.0
    %v1709 = vmax.f32 %v1613, 0.0
    %v1710 = vmax.f32 %v1614, 0.0
    %v1711 = vmax.f32 %v1615, 0.0
    %v1712 = vmax.f32 %v1616, 0.0
    %v1713 = vmax.f32 %v1617, 0.0
    %v1714 = vmax.f32 %v1618, 0.0
    %v1715 = vmax.f32 %v1619, 0.0
    %v1716 = vmax.f32 %v1620, 0.0
    %v1717 = vmax.f32 %v1621, 0.0
    %v1718 = vmax.f32 %v1622, 0.0
    %v1719 = vmax.f32 %v1623, 0.0
    %v1720 = vmax.f32 %v1624, 0.0
    %v1721 = vmax.f32 %v1625, 0.0
    %v1722 = vmax.f32 %v1626, 0.0
    %v1723 = vmax.f32 %v1627, 0.0
    %v1724 = vmax.f32 %v1628, 0.0
    %v1725 = vmax.f32 %v1629, 0.0
    %v1726 = vmax.f32 %v1630, 0.0
    %v1727 = vmax.f32 %v1631, 0.0
    %v1728 = vmax.f32 %v1632, 0.0
    %v1729 = vmax.f32 %v1633, 0.0
    %v1730 = vmax.f32 %v1634, 0.0
    %v1731 = vmax.f32 %v1635, 0.0
    %v1732 = vmax.f32 %v1636, 0.0
    %v1733 = vmax.f32 %v1637, 0.0
    %v1734 = vld [vmem:[#allocation2] sm:$0xf]
    %v1735 = vld [vmem:[#allocation2 + $0x4] sm:$0xf]
    %v1736 = vld [vmem:[#allocation2 + $0x8] sm:$0xf]
    %v1737 = vld [vmem:[#allocation2 + $0xc] sm:$0xf]
    %v1738 = vld [vmem:[#allocation2 + $0x10] sm:$0xf]
    %v1739 = vld [vmem:[#allocation2 + $0x14] sm:$0xf]
    %v1740 = vld [vmem:[#allocation2 + $0x18] sm:$0xf]
    %v1741 = vld [vmem:[#allocation2 + $0x1c] sm:$0xf]
    %v1742 = vpack.c.bf16 %v1638, %v1638
    %v1743 = vpack.c.bf16 %v1640, %v1640
    %v1744 = vpack.c.bf16 %v1642, %v1642
    %v1745 = vpack.c.bf16 %v1644, %v1644
    %v1746 = vpack.c.bf16 %v1646, %v1646
    %v1747 = vpack.c.bf16 %v1648, %v1648
    %v1748 = vpack.c.bf16 %v1650, %v1650
    %v1749 = vpack.c.bf16 %v1652, %v1652
    %v1750 = vpack.c.bf16 %v1654, %v1654
    %v1751 = vpack.c.bf16 %v1656, %v1656
    %v1752 = vpack.c.bf16 %v1658, %v1658
    %v1753 = vpack.c.bf16 %v1660, %v1660
    %v1754 = vpack.c.bf16 %v1662, %v1662
    %v1755 = vpack.c.bf16 %v1664, %v1664
    %v1756 = vpack.c.bf16 %v1666, %v1666
    %v1757 = vpack.c.bf16 %v1668, %v1668
    %v1758 = vpack.c.bf16 %v1670, %v1670
    %v1759 = vpack.c.bf16 %v1672, %v1672
    %v1760 = vpack.c.bf16 %v1674, %v1674
    %v1761 = vpack.c.bf16 %v1676, %v1676
    %v1762 = vpack.c.bf16 %v1678, %v1678
    %v1763 = vpack.c.bf16 %v1680, %v1680
    %v1764 = vpack.c.bf16 %v1682, %v1682
    %v1765 = vpack.c.bf16 %v1684, %v1684
    %v1766 = vpack.c.bf16 %v1686, %v1686
    %v1767 = vpack.c.bf16 %v1688, %v1688
    %v1768 = vpack.c.bf16 %v1690, %v1690
    %v1769 = vpack.c.bf16 %v1692, %v1692
    %v1770 = vpack.c.bf16 %v1694, %v1694
    %v1771 = vpack.c.bf16 %v1696, %v1696
    %v1772 = vpack.c.bf16 %v1698, %v1698
    %v1773 = vpack.c.bf16 %v1700, %v1700
    %v1774 = vpack.c.bf16 %v1702, %v1702
    %v1775 = vpack.c.bf16 %v1704, %v1704
    %v1776 = vpack.c.bf16 %v1706, %v1706
    %v1777 = vpack.c.bf16 %v1708, %v1708
    %v1778 = vpack.c.bf16 %v1710, %v1710
    %v1779 = vpack.c.bf16 %v1712, %v1712
    %v1780 = vpack.c.bf16 %v1714, %v1714
    %v1781 = vpack.c.bf16 %v1716, %v1716
    %v1782 = vpack.c.bf16 %v1718, %v1718
    %v1783 = vpack.c.bf16 %v1720, %v1720
    %v1784 = vpack.c.bf16 %v1722, %v1722
    %v1785 = vpack.c.bf16 %v1724, %v1724
    %v1786 = vpack.c.bf16 %v1726, %v1726
    %v1787 = vpack.c.bf16 %v1728, %v1728
    %v1788 = vpack.c.bf16 %v1730, %v1730
    %v1789 = vpack.c.bf16 %v1732, %v1732
    %s1790 = scalar_lea.vmem [#allocation2], 32
    %v1791 = vld [vmem:[%s1790] sm:$0xf]
    %v1792 = vld [vmem:[%s1790 + $0x4] sm:$0xf]
    %v1793 = vld [vmem:[%s1790 + $0x8] sm:$0xf]
    %v1794 = vld [vmem:[%s1790 + $0xc] sm:$0xf]
    %v1795 = vld [vmem:[%s1790 + $0x10] sm:$0xf]
    %v1796 = vld [vmem:[%s1790 + $0x14] sm:$0xf]
    %v1797 = vld [vmem:[%s1790 + $0x18] sm:$0xf]
    %v1798 = vld [vmem:[%s1790 + $0x1c] sm:$0xf]
    %v1799 = vpack.c.bf16 %v1639, %v1639
    %v1800 = vpack.c.bf16 %v1641, %v1641
    %v1801 = vpack.c.bf16 %v1643, %v1643
    %v1802 = vpack.c.bf16 %v1645, %v1645
    %v1803 = vpack.c.bf16 %v1647, %v1647
    %v1804 = vpack.c.bf16 %v1649, %v1649
    %v1805 = vpack.c.bf16 %v1651, %v1651
    %v1806 = vpack.c.bf16 %v1653, %v1653
    %v1807 = vpack.c.bf16 %v1655, %v1655
    %v1808 = vpack.c.bf16 %v1657, %v1657
    %v1809 = vpack.c.bf16 %v1659, %v1659
    %v1810 = vpack.c.bf16 %v1661, %v1661
    %v1811 = vpack.c.bf16 %v1663, %v1663
    %v1812 = vpack.c.bf16 %v1665, %v1665
    %v1813 = vpack.c.bf16 %v1667, %v1667
    %v1814 = vpack.c.bf16 %v1669, %v1669
    %v1815 = vpack.c.bf16 %v1671, %v1671
    %v1816 = vpack.c.bf16 %v1673, %v1673
    %v1817 = vpack.c.bf16 %v1675, %v1675
    %v1818 = vpack.c.bf16 %v1677, %v1677
    %v1819 = vpack.c.bf16 %v1679, %v1679
    %v1820 = vpack.c.bf16 %v1681, %v1681
    %v1821 = vpack.c.bf16 %v1683, %v1683
    %v1822 = vpack.c.bf16 %v1685, %v1685
    %v1823 = vpack.c.bf16 %v1687, %v1687
    %v1824 = vpack.c.bf16 %v1689, %v1689
    %v1825 = vpack.c.bf16 %v1691, %v1691
    %v1826 = vpack.c.bf16 %v1693, %v1693
    %v1827 = vpack.c.bf16 %v1695, %v1695
    %v1828 = vpack.c.bf16 %v1697, %v1697
    %v1829 = vpack.c.bf16 %v1699, %v1699
    %v1830 = vpack.c.bf16 %v1701, %v1701
    %v1831 = vpack.c.bf16 %v1703, %v1703
    %v1832 = vpack.c.bf16 %v1705, %v1705
    %v1833 = vpack.c.bf16 %v1707, %v1707
    %v1834 = vpack.c.bf16 %v1709, %v1709
    %v1835 = vpack.c.bf16 %v1711, %v1711
    %v1836 = vpack.c.bf16 %v1713, %v1713
    %v1837 = vpack.c.bf16 %v1715, %v1715
    %v1838 = vpack.c.bf16 %v1717, %v1717
    %v1839 = vpack.c.bf16 %v1719, %v1719
    %v1840 = vpack.c.bf16 %v1721, %v1721
    %v1841 = vpack.c.bf16 %v1723, %v1723
    %v1842 = vpack.c.bf16 %v1725, %v1725
    %v1843 = vpack.c.bf16 %v1727, %v1727
    %v1844 = vpack.c.bf16 %v1729, %v1729
    %v1845 = vpack.c.bf16 %v1731, %v1731
    %v1846 = vpack.c.bf16 %v1733, %v1733
    %v1895 = vunpack.c.l.b16 %v1799
    %v1896 = vunpack.c.l.b16 %v1800
    %v1897 = vunpack.c.l.b16 %v1801
    %v1898 = vunpack.c.l.b16 %v1802
    %v1899 = vunpack.c.l.b16 %v1803
    %v1900 = vunpack.c.l.b16 %v1804
    %v1901 = vunpack.c.l.b16 %v1805
    %v1902 = vunpack.c.l.b16 %v1806
    %v1903 = vunpack.c.l.b16 %v1807
    %v1904 = vunpack.c.l.b16 %v1808
    %v1905 = vunpack.c.l.b16 %v1809
    %v1906 = vunpack.c.l.b16 %v1810
    %v1907 = vunpack.c.l.b16 %v1811
    %v1908 = vunpack.c.l.b16 %v1812
    %v1909 = vunpack.c.l.b16 %v1813
    %v1910 = vunpack.c.l.b16 %v1814
    %v1911 = vunpack.c.l.b16 %v1815
    %v1912 = vunpack.c.l.b16 %v1816
    %v1913 = vunpack.c.l.b16 %v1817
    %v1914 = vunpack.c.l.b16 %v1818
    %v1915 = vunpack.c.l.b16 %v1819
    %v1916 = vunpack.c.l.b16 %v1820
    %v1917 = vunpack.c.l.b16 %v1821
    %v1918 = vunpack.c.l.b16 %v1822
    %v1919 = vunpack.c.l.b16 %v1823
    %v1920 = vunpack.c.l.b16 %v1824
    %v1921 = vunpack.c.l.b16 %v1825
    %v1922 = vunpack.c.l.b16 %v1826
    %v1923 = vunpack.c.l.b16 %v1827
    %v1924 = vunpack.c.l.b16 %v1828
    %v1925 = vunpack.c.l.b16 %v1829
    %v1926 = vunpack.c.l.b16 %v1830
    %v1927 = vunpack.c.l.b16 %v1831
    %v1928 = vunpack.c.l.b16 %v1832
    %v1929 = vunpack.c.l.b16 %v1833
    %v1930 = vunpack.c.l.b16 %v1834
    %v1931 = vunpack.c.l.b16 %v1835
    %v1932 = vunpack.c.l.b16 %v1836
    %v1933 = vunpack.c.l.b16 %v1837
    %v1934 = vunpack.c.l.b16 %v1838
    %v1935 = vunpack.c.l.b16 %v1839
    %v1936 = vunpack.c.l.b16 %v1840
    %v1937 = vunpack.c.l.b16 %v1841
    %v1938 = vunpack.c.l.b16 %v1842
    %v1939 = vunpack.c.l.b16 %v1843
    %v1940 = vunpack.c.l.b16 %v1844
    %v1941 = vunpack.c.l.b16 %v1845
    %v1942 = vunpack.c.l.b16 %v1846
    %v1943 = vrot.slane %v1896, 7
    %vm1944 = vcmask 1041409
    %v1945 = vsel %vm1944, %v1943, %v1895
    %v1946 = vrot.slane %v1897, 6
    %vm1947 = vcmask 1042434
    %v1948 = vsel %vm1947, %v1946, %v1945
    %v1949 = vrot.slane %v1898, 5
    %vm1950 = vcmask 1043459
    %v1951 = vsel %vm1950, %v1949, %v1948
    %v1952 = vrot.slane %v1899, 4
    %vm1953 = vcmask 1044484
    %v1954 = vsel %vm1953, %v1952, %v1951
    %v1955 = vrot.slane %v1900, 3
    %vm1956 = vcmask 1045509
    %v1957 = vsel %vm1956, %v1955, %v1954
    %v1958 = vrot.slane %v1901, 2
    %vm1959 = vcmask 1046534
    %v1960 = vsel %vm1959, %v1958, %v1957
    %v1961 = vrot.slane %v1902, 1
    %vm1962 = vcmask 1047559
    %v1963 = vsel %vm1962, %v1961, %v1960
    %v1964 = vrot.slane %v1904, 7
    %v1965 = vsel %vm1944, %v1964, %v1903
    %v1966 = vrot.slane %v1905, 6
    %v1967 = vsel %vm1947, %v1966, %v1965
    %v1968 = vrot.slane %v1906, 5
    %v1969 = vsel %vm1950, %v1968, %v1967
    %v1970 = vrot.slane %v1907, 4
    %v1971 = vsel %vm1953, %v1970, %v1969
    %v1972 = vrot.slane %v1908, 3
    %v1973 = vsel %vm1956, %v1972, %v1971
    %v1974 = vrot.slane %v1909, 2
    %v1975 = vsel %vm1959, %v1974, %v1973
    %v1976 = vrot.slane %v1910, 1
    %v1977 = vsel %vm1962, %v1976, %v1975
    %v1978 = vrot.slane %v1912, 7
    %v1979 = vsel %vm1944, %v1978, %v1911
    %v1980 = vrot.slane %v1913, 6
    %v1981 = vsel %vm1947, %v1980, %v1979
    %v1982 = vrot.slane %v1914, 5
    %v1983 = vsel %vm1950, %v1982, %v1981
    %v1984 = vrot.slane %v1915, 4
    %v1985 = vsel %vm1953, %v1984, %v1983
    %v1986 = vrot.slane %v1916, 3
    %v1987 = vsel %vm1956, %v1986, %v1985
    %v1988 = vrot.slane %v1917, 2
    %v1989 = vsel %vm1959, %v1988, %v1987
    %v1990 = vrot.slane %v1918, 1
    %v1991 = vsel %vm1962, %v1990, %v1989
    %v1992 = vrot.slane %v1920, 7
    %v1993 = vsel %vm1944, %v1992, %v1919
    %v1994 = vrot.slane %v1921, 6
    %v1995 = vsel %vm1947, %v1994, %v1993
    %v1996 = vrot.slane %v1922, 5
    %v1997 = vsel %vm1950, %v1996, %v1995
    %v1998 = vrot.slane %v1923, 4
    %v1999 = vsel %vm1953, %v1998, %v1997
    %v2000 = vrot.slane %v1924, 3
    %v2001 = vsel %vm1956, %v2000, %v1999
    %v2002 = vrot.slane %v1925, 2
    %v2003 = vsel %vm1959, %v2002, %v2001
    %v2004 = vrot.slane %v1926, 1
    %v2005 = vsel %vm1962, %v2004, %v2003
    %v2006 = vrot.slane %v1928, 7
    %v2007 = vsel %vm1944, %v2006, %v1927
    %v2008 = vrot.slane %v1929, 6
    %v2009 = vsel %vm1947, %v2008, %v2007
    %v2010 = vrot.slane %v1930, 5
    %v2011 = vsel %vm1950, %v2010, %v2009
    %v2012 = vrot.slane %v1931, 4
    %v2013 = vsel %vm1953, %v2012, %v2011
    %v2014 = vrot.slane %v1932, 3
    %v2015 = vsel %vm1956, %v2014, %v2013
    %v2016 = vrot.slane %v1933, 2
    %v2017 = vsel %vm1959, %v2016, %v2015
    %v2018 = vrot.slane %v1934, 1
    %v2019 = vsel %vm1962, %v2018, %v2017
    %v2020 = vrot.slane %v1936, 7
    %v2021 = vsel %vm1944, %v2020, %v1935
    %v2022 = vrot.slane %v1937, 6
    %v2023 = vsel %vm1947, %v2022, %v2021
    %v2024 = vrot.slane %v1938, 5
    %v2025 = vsel %vm1950, %v2024, %v2023
    %v2026 = vrot.slane %v1939, 4
    %v2027 = vsel %vm1953, %v2026, %v2025
    %v2028 = vrot.slane %v1940, 3
    %v2029 = vsel %vm1956, %v2028, %v2027
    %v2030 = vrot.slane %v1941, 2
    %v2031 = vsel %vm1959, %v2030, %v2029
    %v2032 = vrot.slane %v1942, 1
    %v2033 = vsel %vm1962, %v2032, %v2031
    %v2034 = vpack.c.b16 %v1977, %v1963
    %v2035 = vpack.c.b16 %v2005, %v1991
    %v2036 = vpack.c.b16 %v2033, %v2019
    %v2045 = vunpack.c.l.b16 %v1791
    %v2046 = vunpack.c.l.b16 %v1792
    %v2047 = vunpack.c.l.b16 %v1793
    %v2048 = vunpack.c.l.b16 %v1794
    %v2049 = vunpack.c.l.b16 %v1795
    %v2050 = vunpack.c.l.b16 %v1796
    %v2051 = vunpack.c.l.b16 %v1797
    %v2052 = vunpack.c.l.b16 %v1798
    %v2053 = vpack.c.b16 %v2046, %v2045
    %v2054 = vpack.c.b16 %v2048, %v2047
    %v2055 = vpack.c.b16 %v2050, %v2049
    %v2056 = vpack.c.b16 %v2052, %v2051
    %vm2061 = vcmask 523264
    %v2063 = vsel %vm2061, %v2034, 0
    %v2066 = vsel %vm2061, %v2035, 0
    %v2069 = vsel %vm2061, %v2036, 0
    %2071 = vmatprep.subr.bf16.mxu0 0
    %2072 = vmatpush1.bf16.msra.mxu0 %v2053
    %2073 = vmatprep.subr.bf16.mxu0 0
    %2074 = vmatpush1.bf16.msra.mxu0 %v2054
    %2075 = vmatprep.subr.bf16.mxu0 0
    %2076 = vmatpush1.bf16.msra.mxu0 %v2055
    %2077 = vmatprep.subr.bf16.mxu0 0
    %2078 = vmatpush1.bf16.msra.mxu0 %v2056
    %2079 = vmatprep.subr.bf16.mxu0 0
    %2080 = vmatpush1.bf16.msra.mxu0 0
    %2081 = vmatprep.subr.bf16.mxu0 0
    %2082 = vmatpush1.bf16.msra.mxu0 0
    %2083 = vmatprep.subr.bf16.mxu0 0
    %2084 = vmatpush1.bf16.msra.mxu0 0
    %2085 = vmatprep.subr.bf16.mxu0 0
    %2086 = vmatpush1.bf16.msra.mxu0 0
    %2087 = vmatprep.subr.bf16.mxu0 0
    %2088 = vmatpush1.bf16.msra.mxu0 0
    %2089 = vmatprep.subr.bf16.mxu0 0
    %2090 = vmatpush1.bf16.msra.mxu0 0
    %2091 = vmatprep.subr.bf16.mxu0 0
    %2092 = vmatpush1.bf16.msra.mxu0 0
    %2093 = vmatprep.subr.bf16.mxu0 0
    %2094 = vmatpush1.bf16.msra.mxu0 0
    %2095 = vmatprep.subr.bf16.mxu0 0
    %2096 = vmatpush1.bf16.msra.mxu0 0
    %2097 = vmatprep.subr.bf16.mxu0 0
    %2098 = vmatpush1.bf16.msra.mxu0 0
    %2099 = vmatprep.subr.bf16.mxu0 0
    %2100 = vmatpush1.bf16.msra.mxu0 0
    %2101 = vmatprep.subr.bf16.mxu0 0
    %2102 = vmatpush1.bf16.msra.mxu0 0
    %2103 = vmatprep.mubr.bf16.mxu0 0
    %2104 = vmatmul.mubr.bf16.gmra.mrb[0].mxu0 %v2063
    %v2105 = vpop.f32.mrb[0].mxu0
    %v2106 = vadd.f32 0.0, %v2105
    %v2107 = vpop.f32.mrb[0].mxu0
    %v2108 = vpop.f32.mrb[0].mxu0
    %v2109 = vadd.f32 0.0, %v2108
    %v2110 = vpop.f32.mrb[0].mxu0
    %2111 = vmatprep.mubr.bf16.mxu0 0
    %2112 = vmatmul.mubr.bf16.gmra.mrb[0].mxu0 %v2066
    %v2113 = vpop.f32.mrb[0].mxu0
    %v2114 = vadd.f32 0.0, %v2113
    %v2115 = vpop.f32.mrb[0].mxu0
    %v2116 = vpop.f32.mrb[0].mxu0
    %v2117 = vadd.f32 0.0, %v2116
    %v2118 = vpop.f32.mrb[0].mxu0
    %2119 = vmatprep.mubr.bf16.mxu0 0
    %2120 = vmatmul.mubr.bf16.gmra.mrb[0].mxu0 %v2069
    %v2121 = vpop.f32.mrb[0].mxu0
    %v2122 = vadd.f32 0.0, %v2121
    %v2123 = vpop.f32.mrb[0].mxu0
    %v2124 = vpop.f32.mrb[0].mxu0
    %v2125 = vadd.f32 0.0, %v2124
    %v2126 = vpop.f32.mrb[0].mxu0
    %2127 = vdwg.mxu0
    %v2176 = vunpack.c.l.b16 %v1742
    %v2177 = vunpack.c.l.b16 %v1743
    %v2178 = vunpack.c.l.b16 %v1744
    %v2179 = vunpack.c.l.b16 %v1745
    %v2180 = vunpack.c.l.b16 %v1746
    %v2181 = vunpack.c.l.b16 %v1747
    %v2182 = vunpack.c.l.b16 %v1748
    %v2183 = vunpack.c.l.b16 %v1749
    %v2184 = vunpack.c.l.b16 %v1750
    %v2185 = vunpack.c.l.b16 %v1751
    %v2186 = vunpack.c.l.b16 %v1752
    %v2187 = vunpack.c.l.b16 %v1753
    %v2188 = vunpack.c.l.b16 %v1754
    %v2189 = vunpack.c.l.b16 %v1755
    %v2190 = vunpack.c.l.b16 %v1756
    %v2191 = vunpack.c.l.b16 %v1757
    %v2192 = vunpack.c.l.b16 %v1758
    %v2193 = vunpack.c.l.b16 %v1759
    %v2194 = vunpack.c.l.b16 %v1760
    %v2195 = vunpack.c.l.b16 %v1761
    %v2196 = vunpack.c.l.b16 %v1762
    %v2197 = vunpack.c.l.b16 %v1763
    %v2198 = vunpack.c.l.b16 %v1764
    %v2199 = vunpack.c.l.b16 %v1765
    %v2200 = vunpack.c.l.b16 %v1766
    %v2201 = vunpack.c.l.b16 %v1767
    %v2202 = vunpack.c.l.b16 %v1768
    %v2203 = vunpack.c.l.b16 %v1769
    %v2204 = vunpack.c.l.b16 %v1770
    %v2205 = vunpack.c.l.b16 %v1771
    %v2206 = vunpack.c.l.b16 %v1772
    %v2207 = vunpack.c.l.b16 %v1773
    %v2208 = vunpack.c.l.b16 %v1774
    %v2209 = vunpack.c.l.b16 %v1775
    %v2210 = vunpack.c.l.b16 %v1776
    %v2211 = vunpack.c.l.b16 %v1777
    %v2212 = vunpack.c.l.b16 %v1778
    %v2213 = vunpack.c.l.b16 %v1779
    %v2214 = vunpack.c.l.b16 %v1780
    %v2215 = vunpack.c.l.b16 %v1781
    %v2216 = vunpack.c.l.b16 %v1782
    %v2217 = vunpack.c.l.b16 %v1783
    %v2218 = vunpack.c.l.b16 %v1784
    %v2219 = vunpack.c.l.b16 %v1785
    %v2220 = vunpack.c.l.b16 %v1786
    %v2221 = vunpack.c.l.b16 %v1787
    %v2222 = vunpack.c.l.b16 %v1788
    %v2223 = vunpack.c.l.b16 %v1789
    %v2224 = vrot.slane %v2177, 7
    %v2225 = vsel %vm1944, %v2224, %v2176
    %v2226 = vrot.slane %v2178, 6
    %v2227 = vsel %vm1947, %v2226, %v2225
    %v2228 = vrot.slane %v2179, 5
    %v2229 = vsel %vm1950, %v2228, %v2227
    %v2230 = vrot.slane %v2180, 4
    %v2231 = vsel %vm1953, %v2230, %v2229
    %v2232 = vrot.slane %v2181, 3
    %v2233 = vsel %vm1956, %v2232, %v2231
    %v2234 = vrot.slane %v2182, 2
    %v2235 = vsel %vm1959, %v2234, %v2233
    %v2236 = vrot.slane %v2183, 1
    %v2237 = vsel %vm1962, %v2236, %v2235
    %v2238 = vrot.slane %v2185, 7
    %v2239 = vsel %vm1944, %v2238, %v2184
    %v2240 = vrot.slane %v2186, 6
    %v2241 = vsel %vm1947, %v2240, %v2239
    %v2242 = vrot.slane %v2187, 5
    %v2243 = vsel %vm1950, %v2242, %v2241
    %v2244 = vrot.slane %v2188, 4
    %v2245 = vsel %vm1953, %v2244, %v2243
    %v2246 = vrot.slane %v2189, 3
    %v2247 = vsel %vm1956, %v2246, %v2245
    %v2248 = vrot.slane %v2190, 2
    %v2249 = vsel %vm1959, %v2248, %v2247
    %v2250 = vrot.slane %v2191, 1
    %v2251 = vsel %vm1962, %v2250, %v2249
    %v2252 = vrot.slane %v2193, 7
    %v2253 = vsel %vm1944, %v2252, %v2192
    %v2254 = vrot.slane %v2194, 6
    %v2255 = vsel %vm1947, %v2254, %v2253
    %v2256 = vrot.slane %v2195, 5
    %v2257 = vsel %vm1950, %v2256, %v2255
    %v2258 = vrot.slane %v2196, 4
    %v2259 = vsel %vm1953, %v2258, %v2257
    %v2260 = vrot.slane %v2197, 3
    %v2261 = vsel %vm1956, %v2260, %v2259
    %v2262 = vrot.slane %v2198, 2
    %v2263 = vsel %vm1959, %v2262, %v2261
    %v2264 = vrot.slane %v2199, 1
    %v2265 = vsel %vm1962, %v2264, %v2263
    %v2266 = vrot.slane %v2201, 7
    %v2267 = vsel %vm1944, %v2266, %v2200
    %v2268 = vrot.slane %v2202, 6
    %v2269 = vsel %vm1947, %v2268, %v2267
    %v2270 = vrot.slane %v2203, 5
    %v2271 = vsel %vm1950, %v2270, %v2269
    %v2272 = vrot.slane %v2204, 4
    %v2273 = vsel %vm1953, %v2272, %v2271
    %v2274 = vrot.slane %v2205, 3
    %v2275 = vsel %vm1956, %v2274, %v2273
    %v2276 = vrot.slane %v2206, 2
    %v2277 = vsel %vm1959, %v2276, %v2275
    %v2278 = vrot.slane %v2207, 1
    %v2279 = vsel %vm1962, %v2278, %v2277
    %v2280 = vrot.slane %v2209, 7
    %v2281 = vsel %vm1944, %v2280, %v2208
    %v2282 = vrot.slane %v2210, 6
    %v2283 = vsel %vm1947, %v2282, %v2281
    %v2284 = vrot.slane %v2211, 5
    %v2285 = vsel %vm1950, %v2284, %v2283
    %v2286 = vrot.slane %v2212, 4
    %v2287 = vsel %vm1953, %v2286, %v2285
    %v2288 = vrot.slane %v2213, 3
    %v2289 = vsel %vm1956, %v2288, %v2287
    %v2290 = vrot.slane %v2214, 2
    %v2291 = vsel %vm1959, %v2290, %v2289
    %v2292 = vrot.slane %v2215, 1
    %v2293 = vsel %vm1962, %v2292, %v2291
    %v2294 = vrot.slane %v2217, 7
    %v2295 = vsel %vm1944, %v2294, %v2216
    %v2296 = vrot.slane %v2218, 6
    %v2297 = vsel %vm1947, %v2296, %v2295
    %v2298 = vrot.slane %v2219, 5
    %v2299 = vsel %vm1950, %v2298, %v2297
    %v2300 = vrot.slane %v2220, 4
    %v2301 = vsel %vm1953, %v2300, %v2299
    %v2302 = vrot.slane %v2221, 3
    %v2303 = vsel %vm1956, %v2302, %v2301
    %v2304 = vrot.slane %v2222, 2
    %v2305 = vsel %vm1959, %v2304, %v2303
    %v2306 = vrot.slane %v2223, 1
    %v2307 = vsel %vm1962, %v2306, %v2305
    %v2308 = vpack.c.b16 %v2251, %v2237
    %v2309 = vpack.c.b16 %v2279, %v2265
    %v2310 = vpack.c.b16 %v2307, %v2293
    %v2319 = vunpack.c.l.b16 %v1734
    %v2320 = vunpack.c.l.b16 %v1735
    %v2321 = vunpack.c.l.b16 %v1736
    %v2322 = vunpack.c.l.b16 %v1737
    %v2323 = vunpack.c.l.b16 %v1738
    %v2324 = vunpack.c.l.b16 %v1739
    %v2325 = vunpack.c.l.b16 %v1740
    %v2326 = vunpack.c.l.b16 %v1741
    %v2327 = vpack.c.b16 %v2320, %v2319
    %v2328 = vpack.c.b16 %v2322, %v2321
    %v2329 = vpack.c.b16 %v2324, %v2323
    %v2330 = vpack.c.b16 %v2326, %v2325
    %v2336 = vsel %vm2061, %v2308, 0
    %v2339 = vsel %vm2061, %v2309, 0
    %v2342 = vsel %vm2061, %v2310, 0
    %2344 = vmatprep.subr.bf16.mxu0 0
    %2345 = vmatpush1.bf16.msra.mxu0 %v2327
    %2346 = vmatprep.subr.bf16.mxu0 0
    %2347 = vmatpush1.bf16.msra.mxu0 %v2328
    %2348 = vmatprep.subr.bf16.mxu0 0
    %2349 = vmatpush1.bf16.msra.mxu0 %v2329
    %2350 = vmatprep.subr.bf16.mxu0 0
    %2351 = vmatpush1.bf16.msra.mxu0 %v2330
    %2352 = vmatprep.subr.bf16.mxu0 0
    %2353 = vmatpush1.bf16.msra.mxu0 0
    %2354 = vmatprep.subr.bf16.mxu0 0
    %2355 = vmatpush1.bf16.msra.mxu0 0
    %2356 = vmatprep.subr.bf16.mxu0 0
    %2357 = vmatpush1.bf16.msra.mxu0 0
    %2358 = vmatprep.subr.bf16.mxu0 0
    %2359 = vmatpush1.bf16.msra.mxu0 0
    %2360 = vmatprep.subr.bf16.mxu0 0
    %2361 = vmatpush1.bf16.msra.mxu0 0
    %2362 = vmatprep.subr.bf16.mxu0 0
    %2363 = vmatpush1.bf16.msra.mxu0 0
    %2364 = vmatprep.subr.bf16.mxu0 0
    %2365 = vmatpush1.bf16.msra.mxu0 0
    %2366 = vmatprep.subr.bf16.mxu0 0
    %2367 = vmatpush1.bf16.msra.mxu0 0
    %2368 = vmatprep.subr.bf16.mxu0 0
    %2369 = vmatpush1.bf16.msra.mxu0 0
    %2370 = vmatprep.subr.bf16.mxu0 0
    %2371 = vmatpush1.bf16.msra.mxu0 0
    %2372 = vmatprep.subr.bf16.mxu0 0
    %2373 = vmatpush1.bf16.msra.mxu0 0
    %2374 = vmatprep.subr.bf16.mxu0 0
    %2375 = vmatpush1.bf16.msra.mxu0 0
    %2376 = vmatprep.mubr.bf16.mxu0 0
    %2377 = vmatmul.mubr.bf16.gmra.mrb[0].mxu0 %v2336
    %v2378 = vpop.f32.mrb[0].mxu0
    %v2379 = vadd.f32 %v2106, %v2378
    %v2380 = vpop.f32.mrb[0].mxu0
    %v2381 = vpop.f32.mrb[0].mxu0
    %v2382 = vadd.f32 %v2109, %v2381
    %v2383 = vpop.f32.mrb[0].mxu0
    %2384 = vmatprep.mubr.bf16.mxu0 0
    %2385 = vmatmul.mubr.bf16.gmra.mrb[0].mxu0 %v2339
    %v2386 = vpop.f32.mrb[0].mxu0
    %v2387 = vadd.f32 %v2114, %v2386
    %v2388 = vpop.f32.mrb[0].mxu0
    %v2389 = vpop.f32.mrb[0].mxu0
    %v2390 = vadd.f32 %v2117, %v2389
    %v2391 = vpop.f32.mrb[0].mxu0
    %2392 = vmatprep.mubr.bf16.mxu0 0
    %2393 = vmatmul.mubr.bf16.gmra.mrb[0].mxu0 %v2342
    %v2394 = vpop.f32.mrb[0].mxu0
    %v2395 = vadd.f32 %v2122, %v2394
    %v2396 = vpop.f32.mrb[0].mxu0
    %v2397 = vpop.f32.mrb[0].mxu0
    %v2398 = vadd.f32 %v2125, %v2397
    %v2399 = vpop.f32.mrb[0].mxu0
    %2400 = vdwg.mxu0
    %v2407 = vcombine.high %v2379, %v2379
    %v2409 = vunpack.c.l.s4 1983009808
    %v2410 = vunpack.c.0.s8 %v2409
    %v2411 = vlaneseq
    %v2412 = vshrl.u32 %v2411, 7
    %v2413 = vsub.s32 %v2410, %v2412
    %v2414 = vrot.slane %v2379, %v2413
    %v2416 = vunpack.c.l.s4 1983009808
    %v2417 = vunpack.c.0.s8 %v2416
    %v2418 = vlaneseq
    %v2419 = vshrl.u32 %v2418, 7
    %v2420 = vsub.s32 %v2417, %v2419
    %v2421 = vrot.slane %v2407, %v2420
    %v2422 = vcombine.high %v2414, %v2414
    %v2423 = vcombine.high %v2421, %v2421
    %v2424 = vcombine.high %v2382, %v2382
    %v2426 = vunpack.c.l.s4 1983009808
    %v2427 = vunpack.c.0.s8 %v2426
    %v2428 = vlaneseq
    %v2429 = vshrl.u32 %v2428, 7
    %v2430 = vsub.s32 %v2427, %v2429
    %v2431 = vrot.slane %v2382, %v2430
    %v2433 = vunpack.c.l.s4 1983009808
    %v2434 = vunpack.c.0.s8 %v2433
    %v2435 = vlaneseq
    %v2436 = vshrl.u32 %v2435, 7
    %v2437 = vsub.s32 %v2434, %v2436
    %v2438 = vrot.slane %v2424, %v2437
    %v2439 = vcombine.high %v2431, %v2431
    %v2440 = vcombine.high %v2438, %v2438
    %v2441 = vcombine.high %v2387, %v2387
    %v2443 = vunpack.c.l.s4 1983009808
    %v2444 = vunpack.c.0.s8 %v2443
    %v2445 = vlaneseq
    %v2446 = vshrl.u32 %v2445, 7
    %v2447 = vsub.s32 %v2444, %v2446
    %v2448 = vrot.slane %v2387, %v2447
    %v2450 = vunpack.c.l.s4 1983009808
    %v2451 = vunpack.c.0.s8 %v2450
    %v2452 = vlaneseq
    %v2453 = vshrl.u32 %v2452, 7
    %v2454 = vsub.s32 %v2451, %v2453
    %v2455 = vrot.slane %v2441, %v2454
    %v2456 = vcombine.high %v2448, %v2448
    %v2457 = vcombine.high %v2455, %v2455
    %v2458 = vcombine.high %v2390, %v2390
    %v2460 = vunpack.c.l.s4 1983009808
    %v2461 = vunpack.c.0.s8 %v2460
    %v2462 = vlaneseq
    %v2463 = vshrl.u32 %v2462, 7
    %v2464 = vsub.s32 %v2461, %v2463
    %v2465 = vrot.slane %v2390, %v2464
    %v2467 = vunpack.c.l.s4 1983009808
    %v2468 = vunpack.c.0.s8 %v2467
    %v2469 = vlaneseq
    %v2470 = vshrl.u32 %v2469, 7
    %v2471 = vsub.s32 %v2468, %v2470
    %v2472 = vrot.slane %v2458, %v2471
    %v2473 = vcombine.high %v2465, %v2465
    %v2474 = vcombine.high %v2472, %v2472
    %v2475 = vcombine.high %v2395, %v2395
    %v2477 = vunpack.c.l.s4 1983009808
    %v2478 = vunpack.c.0.s8 %v2477
    %v2479 = vlaneseq
    %v2480 = vshrl.u32 %v2479, 7
    %v2481 = vsub.s32 %v2478, %v2480
    %v2482 = vrot.slane %v2395, %v2481
    %v2484 = vunpack.c.l.s4 1983009808
    %v2485 = vunpack.c.0.s8 %v2484
    %v2486 = vlaneseq
    %v2487 = vshrl.u32 %v2486, 7
    %v2488 = vsub.s32 %v2485, %v2487
    %v2489 = vrot.slane %v2475, %v2488
    %v2490 = vcombine.high %v2482, %v2482
    %v2491 = vcombine.high %v2489, %v2489
    %v2492 = vcombine.high %v2398, %v2398
    %v2494 = vunpack.c.l.s4 1983009808
    %v2495 = vunpack.c.0.s8 %v2494
    %v2496 = vlaneseq
    %v2497 = vshrl.u32 %v2496, 7
    %v2498 = vsub.s32 %v2495, %v2497
    %v2499 = vrot.slane %v2398, %v2498
    %v2501 = vunpack.c.l.s4 1983009808
    %v2502 = vunpack.c.0.s8 %v2501
    %v2503 = vlaneseq
    %v2504 = vshrl.u32 %v2503, 7
    %v2505 = vsub.s32 %v2502, %v2504
    %v2506 = vrot.slane %v2492, %v2505
    %v2507 = vcombine.high %v2499, %v2499
    %v2508 = vcombine.high %v2506, %v2506
    %vm2533 = vcmask 1041408
    %v2534 = vsel %vm2533, %v2414, -inf
    %v2535 = vrot.slane %v2534, 4
    %v2536 = vmax.f32 %v2534, %v2535
    %v2537 = vrot.slane %v2536, 2
    %v2538 = vmax.f32 %v2536, %v2537
    %v2539 = vrot.slane %v2538, 1
    %v2540 = vmax.f32 %v2538, %v2539
    %v2541 = vsel %vm2533, %v2422, -inf
    %v2542 = vrot.slane %v2541, 4
    %v2543 = vmax.f32 %v2541, %v2542
    %v2544 = vrot.slane %v2543, 2
    %v2545 = vmax.f32 %v2543, %v2544
    %v2546 = vrot.slane %v2545, 1
    %v2547 = vmax.f32 %v2545, %v2546
    %v2548 = vsel %vm2533, %v2421, -inf
    %v2549 = vrot.slane %v2548, 4
    %v2550 = vmax.f32 %v2548, %v2549
    %v2551 = vrot.slane %v2550, 2
    %v2552 = vmax.f32 %v2550, %v2551
    %v2553 = vrot.slane %v2552, 1
    %v2554 = vmax.f32 %v2552, %v2553
    %v2555 = vsel %vm2533, %v2423, -inf
    %v2556 = vrot.slane %v2555, 4
    %v2557 = vmax.f32 %v2555, %v2556
    %v2558 = vrot.slane %v2557, 2
    %v2559 = vmax.f32 %v2557, %v2558
    %v2560 = vrot.slane %v2559, 1
    %v2561 = vmax.f32 %v2559, %v2560
    %v2562 = vsel %vm2533, %v2431, -inf
    %v2563 = vrot.slane %v2562, 4
    %v2564 = vmax.f32 %v2562, %v2563
    %v2565 = vrot.slane %v2564, 2
    %v2566 = vmax.f32 %v2564, %v2565
    %v2567 = vrot.slane %v2566, 1
    %v2568 = vmax.f32 %v2566, %v2567
    %v2569 = vsel %vm2533, %v2439, -inf
    %v2570 = vrot.slane %v2569, 4
    %v2571 = vmax.f32 %v2569, %v2570
    %v2572 = vrot.slane %v2571, 2
    %v2573 = vmax.f32 %v2571, %v2572
    %v2574 = vrot.slane %v2573, 1
    %v2575 = vmax.f32 %v2573, %v2574
    %v2576 = vsel %vm2533, %v2438, -inf
    %v2577 = vrot.slane %v2576, 4
    %v2578 = vmax.f32 %v2576, %v2577
    %v2579 = vrot.slane %v2578, 2
    %v2580 = vmax.f32 %v2578, %v2579
    %v2581 = vrot.slane %v2580, 1
    %v2582 = vmax.f32 %v2580, %v2581
    %v2583 = vsel %vm2533, %v2440, -inf
    %v2584 = vrot.slane %v2583, 4
    %v2585 = vmax.f32 %v2583, %v2584
    %v2586 = vrot.slane %v2585, 2
    %v2587 = vmax.f32 %v2585, %v2586
    %v2588 = vrot.slane %v2587, 1
    %v2589 = vmax.f32 %v2587, %v2588
    %v2590 = vsel %vm2533, %v2448, -inf
    %v2591 = vrot.slane %v2590, 4
    %v2592 = vmax.f32 %v2590, %v2591
    %v2593 = vrot.slane %v2592, 2
    %v2594 = vmax.f32 %v2592, %v2593
    %v2595 = vrot.slane %v2594, 1
    %v2596 = vmax.f32 %v2594, %v2595
    %v2597 = vsel %vm2533, %v2456, -inf
    %v2598 = vrot.slane %v2597, 4
    %v2599 = vmax.f32 %v2597, %v2598
    %v2600 = vrot.slane %v2599, 2
    %v2601 = vmax.f32 %v2599, %v2600
    %v2602 = vrot.slane %v2601, 1
    %v2603 = vmax.f32 %v2601, %v2602
    %v2604 = vsel %vm2533, %v2455, -inf
    %v2605 = vrot.slane %v2604, 4
    %v2606 = vmax.f32 %v2604, %v2605
    %v2607 = vrot.slane %v2606, 2
    %v2608 = vmax.f32 %v2606, %v2607
    %v2609 = vrot.slane %v2608, 1
    %v2610 = vmax.f32 %v2608, %v2609
    %v2611 = vsel %vm2533, %v2457, -inf
    %v2612 = vrot.slane %v2611, 4
    %v2613 = vmax.f32 %v2611, %v2612
    %v2614 = vrot.slane %v2613, 2
    %v2615 = vmax.f32 %v2613, %v2614
    %v2616 = vrot.slane %v2615, 1
    %v2617 = vmax.f32 %v2615, %v2616
    %v2618 = vsel %vm2533, %v2465, -inf
    %v2619 = vrot.slane %v2618, 4
    %v2620 = vmax.f32 %v2618, %v2619
    %v2621 = vrot.slane %v2620, 2
    %v2622 = vmax.f32 %v2620, %v2621
    %v2623 = vrot.slane %v2622, 1
    %v2624 = vmax.f32 %v2622, %v2623
    %v2625 = vsel %vm2533, %v2473, -inf
    %v2626 = vrot.slane %v2625, 4
    %v2627 = vmax.f32 %v2625, %v2626
    %v2628 = vrot.slane %v2627, 2
    %v2629 = vmax.f32 %v2627, %v2628
    %v2630 = vrot.slane %v2629, 1
    %v2631 = vmax.f32 %v2629, %v2630
    %v2632 = vsel %vm2533, %v2472, -inf
    %v2633 = vrot.slane %v2632, 4
    %v2634 = vmax.f32 %v2632, %v2633
    %v2635 = vrot.slane %v2634, 2
    %v2636 = vmax.f32 %v2634, %v2635
    %v2637 = vrot.slane %v2636, 1
    %v2638 = vmax.f32 %v2636, %v2637
    %v2639 = vsel %vm2533, %v2474, -inf
    %v2640 = vrot.slane %v2639, 4
    %v2641 = vmax.f32 %v2639, %v2640
    %v2642 = vrot.slane %v2641, 2
    %v2643 = vmax.f32 %v2641, %v2642
    %v2644 = vrot.slane %v2643, 1
    %v2645 = vmax.f32 %v2643, %v2644
    %v2646 = vsel %vm2533, %v2482, -inf
    %v2647 = vrot.slane %v2646, 4
    %v2648 = vmax.f32 %v2646, %v2647
    %v2649 = vrot.slane %v2648, 2
    %v2650 = vmax.f32 %v2648, %v2649
    %v2651 = vrot.slane %v2650, 1
    %v2652 = vmax.f32 %v2650, %v2651
    %v2653 = vsel %vm2533, %v2490, -inf
    %v2654 = vrot.slane %v2653, 4
    %v2655 = vmax.f32 %v2653, %v2654
    %v2656 = vrot.slane %v2655, 2
    %v2657 = vmax.f32 %v2655, %v2656
    %v2658 = vrot.slane %v2657, 1
    %v2659 = vmax.f32 %v2657, %v2658
    %v2660 = vsel %vm2533, %v2489, -inf
    %v2661 = vrot.slane %v2660, 4
    %v2662 = vmax.f32 %v2660, %v2661
    %v2663 = vrot.slane %v2662, 2
    %v2664 = vmax.f32 %v2662, %v2663
    %v2665 = vrot.slane %v2664, 1
    %v2666 = vmax.f32 %v2664, %v2665
    %v2667 = vsel %vm2533, %v2491, -inf
    %v2668 = vrot.slane %v2667, 4
    %v2669 = vmax.f32 %v2667, %v2668
    %v2670 = vrot.slane %v2669, 2
    %v2671 = vmax.f32 %v2669, %v2670
    %v2672 = vrot.slane %v2671, 1
    %v2673 = vmax.f32 %v2671, %v2672
    %v2674 = vsel %vm2533, %v2499, -inf
    %v2675 = vrot.slane %v2674, 4
    %v2676 = vmax.f32 %v2674, %v2675
    %v2677 = vrot.slane %v2676, 2
    %v2678 = vmax.f32 %v2676, %v2677
    %v2679 = vrot.slane %v2678, 1
    %v2680 = vmax.f32 %v2678, %v2679
    %v2681 = vsel %vm2533, %v2507, -inf
    %v2682 = vrot.slane %v2681, 4
    %v2683 = vmax.f32 %v2681, %v2682
    %v2684 = vrot.slane %v2683, 2
    %v2685 = vmax.f32 %v2683, %v2684
    %v2686 = vrot.slane %v2685, 1
    %v2687 = vmax.f32 %v2685, %v2686
    %v2688 = vsel %vm2533, %v2506, -inf
    %v2689 = vrot.slane %v2688, 4
    %v2690 = vmax.f32 %v2688, %v2689
    %v2691 = vrot.slane %v2690, 2
    %v2692 = vmax.f32 %v2690, %v2691
    %v2693 = vrot.slane %v2692, 1
    %v2694 = vmax.f32 %v2692, %v2693
    %v2695 = vsel %vm2533, %v2508, -inf
    %v2696 = vrot.slane %v2695, 4
    %v2697 = vmax.f32 %v2695, %v2696
    %v2698 = vrot.slane %v2697, 2
    %v2699 = vmax.f32 %v2697, %v2698
    %v2700 = vrot.slane %v2699, 1
    %v2701 = vmax.f32 %v2699, %v2700
    %v2702 = vld [vmem:[%s4] sm:$0x1]
    %v2704 = vlaneseq
    %v2705 = vshrl.u32 %v2704, 7
    %v2706 = vsub.s32 0, %v2705
    %v2707 = vrot.slane %v2702, %v2706
    %v2709 = vadd.f32 %v2540, %v2707
    %v2710 = vadd.f32 %v2547, %v2707
    %v2711 = vadd.f32 %v2554, %v2707
    %v2712 = vadd.f32 %v2561, %v2707
    %v2713 = vadd.f32 %v2568, %v2707
    %v2714 = vadd.f32 %v2575, %v2707
    %v2715 = vadd.f32 %v2582, %v2707
    %v2716 = vadd.f32 %v2589, %v2707
    %v2717 = vadd.f32 %v2596, %v2707
    %v2718 = vadd.f32 %v2603, %v2707
    %v2719 = vadd.f32 %v2610, %v2707
    %v2720 = vadd.f32 %v2617, %v2707
    %v2721 = vadd.f32 %v2624, %v2707
    %v2722 = vadd.f32 %v2631, %v2707
    %v2723 = vadd.f32 %v2638, %v2707
    %v2724 = vadd.f32 %v2645, %v2707
    %v2725 = vadd.f32 %v2652, %v2707
    %v2726 = vadd.f32 %v2659, %v2707
    %v2727 = vadd.f32 %v2666, %v2707
    %v2728 = vadd.f32 %v2673, %v2707
    %v2729 = vadd.f32 %v2680, %v2707
    %v2730 = vadd.f32 %v2687, %v2707
    %v2731 = vadd.f32 %v2694, %v2707
    %v2732 = vadd.f32 %v2701, %v2707
    %v2733 = vmax.f32 %v2709, 0.0
    %v2734 = vmax.f32 %v2710, 0.0
    %v2735 = vmax.f32 %v2711, 0.0
    %v2736 = vmax.f32 %v2712, 0.0
    %v2737 = vmax.f32 %v2713, 0.0
    %v2738 = vmax.f32 %v2714, 0.0
    %v2739 = vmax.f32 %v2715, 0.0
    %v2740 = vmax.f32 %v2716, 0.0
    %v2741 = vmax.f32 %v2717, 0.0
    %v2742 = vmax.f32 %v2718, 0.0
    %v2743 = vmax.f32 %v2719, 0.0
    %v2744 = vmax.f32 %v2720, 0.0
    %v2745 = vmax.f32 %v2721, 0.0
    %v2746 = vmax.f32 %v2722, 0.0
    %v2747 = vmax.f32 %v2723, 0.0
    %v2748 = vmax.f32 %v2724, 0.0
    %v2749 = vmax.f32 %v2725, 0.0
    %v2750 = vmax.f32 %v2726, 0.0
    %v2751 = vmax.f32 %v2727, 0.0
    %v2752 = vmax.f32 %v2728, 0.0
    %v2753 = vmax.f32 %v2729, 0.0
    %v2754 = vmax.f32 %v2730, 0.0
    %v2755 = vmax.f32 %v2731, 0.0
    %v2756 = vmax.f32 %v2732, 0.0
    %v2757 = vld [vmem:[#allocation5] sm:$0xff]
    %v2758 = vld [vmem:[#allocation5 + $0x8] sm:$0xff]
    %v2759 = vld [vmem:[#allocation5 + $0x10] sm:$0xff]
    %v2760 = vld [vmem:[#allocation5 + $0x18] sm:$0xff]
    %v2761 = vld [vmem:[#allocation5 + $0x20] sm:$0xff]
    %v2762 = vld [vmem:[#allocation5 + $0x28] sm:$0xff]
    %v2763 = vld [vmem:[#allocation5 + $0x30] sm:$0xff]
    %v2764 = vld [vmem:[#allocation5 + $0x38] sm:$0xff]
    %v2765 = vld [vmem:[#allocation5 + $0x40] sm:$0xff]
    %v2766 = vld [vmem:[#allocation5 + $0x48] sm:$0xff]
    %v2767 = vld [vmem:[#allocation5 + $0x50] sm:$0xff]
    %v2768 = vld [vmem:[#allocation5 + $0x58] sm:$0xff]
    %v2769 = vld [vmem:[#allocation5 + $0x60] sm:$0xff]
    %v2770 = vld [vmem:[#allocation5 + $0x68] sm:$0xff]
    %v2771 = vld [vmem:[#allocation5 + $0x70] sm:$0xff]
    %v2772 = vld [vmem:[#allocation5 + $0x78] sm:$0xff]
    %v2773 = vpack.c.bf16 %v2733, %v2733
    %v2774 = vpack.c.bf16 %v2735, %v2735
    %v2775 = vpack.c.bf16 %v2737, %v2737
    %v2776 = vpack.c.bf16 %v2739, %v2739
    %v2777 = vpack.c.bf16 %v2741, %v2741
    %v2778 = vpack.c.bf16 %v2743, %v2743
    %v2779 = vpack.c.bf16 %v2745, %v2745
    %v2780 = vpack.c.bf16 %v2747, %v2747
    %v2781 = vpack.c.bf16 %v2749, %v2749
    %v2782 = vpack.c.bf16 %v2751, %v2751
    %v2783 = vpack.c.bf16 %v2753, %v2753
    %v2784 = vpack.c.bf16 %v2755, %v2755
    %s2785 = scalar_lea.vmem [#allocation5], 128
    %v2786 = vld [vmem:[%s2785] sm:$0xff]
    %v2787 = vld [vmem:[%s2785 + $0x8] sm:$0xff]
    %v2788 = vld [vmem:[%s2785 + $0x10] sm:$0xff]
    %v2789 = vld [vmem:[%s2785 + $0x18] sm:$0xff]
    %v2790 = vld [vmem:[%s2785 + $0x20] sm:$0xff]
    %v2791 = vld [vmem:[%s2785 + $0x28] sm:$0xff]
    %v2792 = vld [vmem:[%s2785 + $0x30] sm:$0xff]
    %v2793 = vld [vmem:[%s2785 + $0x38] sm:$0xff]
    %v2794 = vld [vmem:[%s2785 + $0x40] sm:$0xff]
    %v2795 = vld [vmem:[%s2785 + $0x48] sm:$0xff]
    %v2796 = vld [vmem:[%s2785 + $0x50] sm:$0xff]
    %v2797 = vld [vmem:[%s2785 + $0x58] sm:$0xff]
    %v2798 = vld [vmem:[%s2785 + $0x60] sm:$0xff]
    %v2799 = vld [vmem:[%s2785 + $0x68] sm:$0xff]
    %v2800 = vld [vmem:[%s2785 + $0x70] sm:$0xff]
    %v2801 = vld [vmem:[%s2785 + $0x78] sm:$0xff]
    %v2802 = vpack.c.bf16 %v2734, %v2734
    %v2803 = vpack.c.bf16 %v2736, %v2736
    %v2804 = vpack.c.bf16 %v2738, %v2738
    %v2805 = vpack.c.bf16 %v2740, %v2740
    %v2806 = vpack.c.bf16 %v2742, %v2742
    %v2807 = vpack.c.bf16 %v2744, %v2744
    %v2808 = vpack.c.bf16 %v2746, %v2746
    %v2809 = vpack.c.bf16 %v2748, %v2748
    %v2810 = vpack.c.bf16 %v2750, %v2750
    %v2811 = vpack.c.bf16 %v2752, %v2752
    %v2812 = vpack.c.bf16 %v2754, %v2754
    %v2813 = vpack.c.bf16 %v2756, %v2756
    %v2826 = vunpack.c.l.b16 %v2802
    %v2827 = vunpack.c.l.b16 %v2803
    %v2828 = vunpack.c.l.b16 %v2804
    %v2829 = vunpack.c.l.b16 %v2805
    %v2830 = vunpack.c.l.b16 %v2806
    %v2831 = vunpack.c.l.b16 %v2807
    %v2832 = vunpack.c.l.b16 %v2808
    %v2833 = vunpack.c.l.b16 %v2809
    %v2834 = vunpack.c.l.b16 %v2810
    %v2835 = vunpack.c.l.b16 %v2811
    %v2836 = vunpack.c.l.b16 %v2812
    %v2837 = vunpack.c.l.b16 %v2813
    %v2838 = vrot.slane %v2827, 7
    %v2839 = vsel %vm1944, %v2838, %v2826
    %v2840 = vrot.slane %v2828, 6
    %v2841 = vsel %vm1947, %v2840, %v2839
    %v2842 = vrot.slane %v2829, 5
    %v2843 = vsel %vm1950, %v2842, %v2841
    %v2844 = vrot.slane %v2830, 4
    %v2845 = vsel %vm1953, %v2844, %v2843
    %v2846 = vrot.slane %v2831, 3
    %v2847 = vsel %vm1956, %v2846, %v2845
    %v2848 = vrot.slane %v2832, 2
    %v2849 = vsel %vm1959, %v2848, %v2847
    %v2850 = vrot.slane %v2833, 1
    %v2851 = vsel %vm1962, %v2850, %v2849
    %v2852 = vrot.slane %v2835, 7
    %v2853 = vsel %vm1944, %v2852, %v2834
    %v2854 = vrot.slane %v2836, 6
    %v2855 = vsel %vm1947, %v2854, %v2853
    %v2856 = vrot.slane %v2837, 5
    %v2857 = vsel %vm1950, %v2856, %v2855
    %v2858 = vpack.c.b16 %v2857, %v2851
    %v2876 = vunpack.c.l.b16 %v2786
    %v2877 = vunpack.c.h.b16 %v2786
    %v2878 = vunpack.c.l.b16 %v2787
    %v2879 = vunpack.c.h.b16 %v2787
    %v2880 = vunpack.c.l.b16 %v2788
    %v2881 = vunpack.c.h.b16 %v2788
    %v2882 = vunpack.c.l.b16 %v2789
    %v2883 = vunpack.c.h.b16 %v2789
    %v2884 = vunpack.c.l.b16 %v2790
    %v2885 = vunpack.c.h.b16 %v2790
    %v2886 = vunpack.c.l.b16 %v2791
    %v2887 = vunpack.c.h.b16 %v2791
    %v2888 = vunpack.c.l.b16 %v2792
    %v2889 = vunpack.c.h.b16 %v2792
    %v2890 = vunpack.c.l.b16 %v2793
    %v2891 = vunpack.c.h.b16 %v2793
    %v2892 = vunpack.c.l.b16 %v2794
    %v2893 = vunpack.c.h.b16 %v2794
    %v2894 = vunpack.c.l.b16 %v2795
    %v2895 = vunpack.c.h.b16 %v2795
    %v2896 = vunpack.c.l.b16 %v2796
    %v2897 = vunpack.c.h.b16 %v2796
    %v2898 = vunpack.c.l.b16 %v2797
    %v2899 = vunpack.c.h.b16 %v2797
    %v2900 = vunpack.c.l.b16 %v2798
    %v2901 = vunpack.c.h.b16 %v2798
    %v2902 = vunpack.c.l.b16 %v2799
    %v2903 = vunpack.c.h.b16 %v2799
    %v2904 = vunpack.c.l.b16 %v2800
    %v2905 = vunpack.c.h.b16 %v2800
    %v2906 = vunpack.c.l.b16 %v2801
    %v2907 = vunpack.c.h.b16 %v2801
    %v2908 = vpack.c.b16 %v2878, %v2876
    %v2909 = vpack.c.b16 %v2879, %v2877
    %v2910 = vpack.c.b16 %v2882, %v2880
    %v2911 = vpack.c.b16 %v2883, %v2881
    %v2912 = vpack.c.b16 %v2886, %v2884
    %v2913 = vpack.c.b16 %v2887, %v2885
    %v2914 = vpack.c.b16 %v2890, %v2888
    %v2915 = vpack.c.b16 %v2891, %v2889
    %v2916 = vpack.c.b16 %v2894, %v2892
    %v2917 = vpack.c.b16 %v2895, %v2893
    %v2918 = vpack.c.b16 %v2898, %v2896
    %v2919 = vpack.c.b16 %v2899, %v2897
    %v2920 = vpack.c.b16 %v2902, %v2900
    %v2921 = vpack.c.b16 %v2903, %v2901
    %v2922 = vpack.c.b16 %v2906, %v2904
    %v2923 = vpack.c.b16 %v2907, %v2905
    %2940 = vmatprep.subr.bf16.mxu0 %v2909
    %2941 = vmatpush1.bf16.msra.mxu0 %v2908
    %2942 = vmatprep.subr.bf16.mxu0 %v2911
    %2943 = vmatpush1.bf16.msra.mxu0 %v2910
    %2944 = vmatprep.subr.bf16.mxu0 %v2913
    %2945 = vmatpush1.bf16.msra.mxu0 %v2912
    %2946 = vmatprep.subr.bf16.mxu0 %v2915
    %2947 = vmatpush1.bf16.msra.mxu0 %v2914
    %2948 = vmatprep.subr.bf16.mxu0 %v2917
    %2949 = vmatpush1.bf16.msra.mxu0 %v2916
    %2950 = vmatprep.subr.bf16.mxu0 %v2919
    %2951 = vmatpush1.bf16.msra.mxu0 %v2918
    %2952 = vmatprep.subr.bf16.mxu0 %v2921
    %2953 = vmatpush1.bf16.msra.mxu0 %v2920
    %2954 = vmatprep.subr.bf16.mxu0 %v2923
    %2955 = vmatpush1.bf16.msra.mxu0 %v2922
    %2956 = vmatprep.subr.bf16.mxu0 0
    %2957 = vmatpush1.bf16.msra.mxu0 0
    %2958 = vmatprep.subr.bf16.mxu0 0
    %2959 = vmatpush1.bf16.msra.mxu0 0
    %2960 = vmatprep.subr.bf16.mxu0 0
    %2961 = vmatpush1.bf16.msra.mxu0 0
    %2962 = vmatprep.subr.bf16.mxu0 0
    %2963 = vmatpush1.bf16.msra.mxu0 0
    %2964 = vmatprep.subr.bf16.mxu0 0
    %2965 = vmatpush1.bf16.msra.mxu0 0
    %2966 = vmatprep.subr.bf16.mxu0 0
    %2967 = vmatpush1.bf16.msra.mxu0 0
    %2968 = vmatprep.subr.bf16.mxu0 0
    %2969 = vmatpush1.bf16.msra.mxu0 0
    %2970 = vmatprep.subr.bf16.mxu0 0
    %2971 = vmatpush1.bf16.msra.mxu0 0
    %2972 = vmatprep.mubr.bf16.mxu0 0
    %2973 = vmatmul.mubr.bf16.gmra.mrb[0].mxu0 %v2858
    %v2974 = vpop.f32.mrb[0].mxu0
    %v2975 = vadd.f32 0.0, %v2974
    %v2976 = vpop.f32.mrb[0].mxu0
    %v2977 = vadd.f32 0.0, %v2976
    %v2978 = vpop.f32.mrb[0].mxu0
    %v2979 = vadd.f32 0.0, %v2978
    %v2980 = vpop.f32.mrb[0].mxu0
    %v2981 = vadd.f32 0.0, %v2980
    %2982 = vdwg.mxu0
    %v2995 = vunpack.c.l.b16 %v2773
    %v2996 = vunpack.c.l.b16 %v2774
    %v2997 = vunpack.c.l.b16 %v2775
    %v2998 = vunpack.c.l.b16 %v2776
    %v2999 = vunpack.c.l.b16 %v2777
    %v3000 = vunpack.c.l.b16 %v2778
    %v3001 = vunpack.c.l.b16 %v2779
    %v3002 = vunpack.c.l.b16 %v2780
    %v3003 = vunpack.c.l.b16 %v2781
    %v3004 = vunpack.c.l.b16 %v2782
    %v3005 = vunpack.c.l.b16 %v2783
    %v3006 = vunpack.c.l.b16 %v2784
    %v3007 = vrot.slane %v2996, 7
    %v3008 = vsel %vm1944, %v3007, %v2995
    %v3009 = vrot.slane %v2997, 6
    %v3010 = vsel %vm1947, %v3009, %v3008
    %v3011 = vrot.slane %v2998, 5
    %v3012 = vsel %vm1950, %v3011, %v3010
    %v3013 = vrot.slane %v2999, 4
    %v3014 = vsel %vm1953, %v3013, %v3012
    %v3015 = vrot.slane %v3000, 3
    %v3016 = vsel %vm1956, %v3015, %v3014
    %v3017 = vrot.slane %v3001, 2
    %v3018 = vsel %vm1959, %v3017, %v3016
    %v3019 = vrot.slane %v3002, 1
    %v3020 = vsel %vm1962, %v3019, %v3018
    %v3021 = vrot.slane %v3004, 7
    %v3022 = vsel %vm1944, %v3021, %v3003
    %v3023 = vrot.slane %v3005, 6
    %v3024 = vsel %vm1947, %v3023, %v3022
    %v3025 = vrot.slane %v3006, 5
    %v3026 = vsel %vm1950, %v3025, %v3024
    %v3027 = vpack.c.b16 %v3026, %v3020
    %v3045 = vunpack.c.l.b16 %v2757
    %v3046 = vunpack.c.h.b16 %v2757
    %v3047 = vunpack.c.l.b16 %v2758
    %v3048 = vunpack.c.h.b16 %v2758
    %v3049 = vunpack.c.l.b16 %v2759
    %v3050 = vunpack.c.h.b16 %v2759
    %v3051 = vunpack.c.l.b16 %v2760
    %v3052 = vunpack.c.h.b16 %v2760
    %v3053 = vunpack.c.l.b16 %v2761
    %v3054 = vunpack.c.h.b16 %v2761
    %v3055 = vunpack.c.l.b16 %v2762
    %v3056 = vunpack.c.h.b16 %v2762
    %v3057 = vunpack.c.l.b16 %v2763
    %v3058 = vunpack.c.h.b16 %v2763
    %v3059 = vunpack.c.l.b16 %v2764
    %v3060 = vunpack.c.h.b16 %v2764
    %v3061 = vunpack.c.l.b16 %v2765
    %v3062 = vunpack.c.h.b16 %v2765
    %v3063 = vunpack.c.l.b16 %v2766
    %v3064 = vunpack.c.h.b16 %v2766
    %v3065 = vunpack.c.l.b16 %v2767
    %v3066 = vunpack.c.h.b16 %v2767
    %v3067 = vunpack.c.l.b16 %v2768
    %v3068 = vunpack.c.h.b16 %v2768
    %v3069 = vunpack.c.l.b16 %v2769
    %v3070 = vunpack.c.h.b16 %v2769
    %v3071 = vunpack.c.l.b16 %v2770
    %v3072 = vunpack.c.h.b16 %v2770
    %v3073 = vunpack.c.l.b16 %v2771
    %v3074 = vunpack.c.h.b16 %v2771
    %v3075 = vunpack.c.l.b16 %v2772
    %v3076 = vunpack.c.h.b16 %v2772
    %v3077 = vpack.c.b16 %v3047, %v3045
    %v3078 = vpack.c.b16 %v3048, %v3046
    %v3079 = vpack.c.b16 %v3051, %v3049
    %v3080 = vpack.c.b16 %v3052, %v3050
    %v3081 = vpack.c.b16 %v3055, %v3053
    %v3082 = vpack.c.b16 %v3056, %v3054
    %v3083 = vpack.c.b16 %v3059, %v3057
    %v3084 = vpack.c.b16 %v3060, %v3058
    %v3085 = vpack.c.b16 %v3063, %v3061
    %v3086 = vpack.c.b16 %v3064, %v3062
    %v3087 = vpack.c.b16 %v3067, %v3065
    %v3088 = vpack.c.b16 %v3068, %v3066
    %v3089 = vpack.c.b16 %v3071, %v3069
    %v3090 = vpack.c.b16 %v3072, %v3070
    %v3091 = vpack.c.b16 %v3075, %v3073
    %v3092 = vpack.c.b16 %v3076, %v3074
    %3109 = vmatprep.subr.bf16.mxu0 %v3078
    %3110 = vmatpush1.bf16.msra.mxu0 %v3077
    %3111 = vmatprep.subr.bf16.mxu0 %v3080
    %3112 = vmatpush1.bf16.msra.mxu0 %v3079
    %3113 = vmatprep.subr.bf16.mxu0 %v3082
    %3114 = vmatpush1.bf16.msra.mxu0 %v3081
    %3115 = vmatprep.subr.bf16.mxu0 %v3084
    %3116 = vmatpush1.bf16.msra.mxu0 %v3083
    %3117 = vmatprep.subr.bf16.mxu0 %v3086
    %3118 = vmatpush1.bf16.msra.mxu0 %v3085
    %3119 = vmatprep.subr.bf16.mxu0 %v3088
    %3120 = vmatpush1.bf16.msra.mxu0 %v3087
    %3121 = vmatprep.subr.bf16.mxu0 %v3090
    %3122 = vmatpush1.bf16.msra.mxu0 %v3089
    %3123 = vmatprep.subr.bf16.mxu0 %v3092
    %3124 = vmatpush1.bf16.msra.mxu0 %v3091
    %3125 = vmatprep.subr.bf16.mxu0 0
    %3126 = vmatpush1.bf16.msra.mxu0 0
    %3127 = vmatprep.subr.bf16.mxu0 0
    %3128 = vmatpush1.bf16.msra.mxu0 0
    %3129 = vmatprep.subr.bf16.mxu0 0
    %3130 = vmatpush1.bf16.msra.mxu0 0
    %3131 = vmatprep.subr.bf16.mxu0 0
    %3132 = vmatpush1.bf16.msra.mxu0 0
    %3133 = vmatprep.subr.bf16.mxu0 0
    %3134 = vmatpush1.bf16.msra.mxu0 0
    %3135 = vmatprep.subr.bf16.mxu0 0
    %3136 = vmatpush1.bf16.msra.mxu0 0
    %3137 = vmatprep.subr.bf16.mxu0 0
    %3138 = vmatpush1.bf16.msra.mxu0 0
    %3139 = vmatprep.subr.bf16.mxu0 0
    %3140 = vmatpush1.bf16.msra.mxu0 0
    %3141 = vmatprep.mubr.bf16.mxu0 0
    %3142 = vmatmul.mubr.bf16.gmra.mrb[0].mxu0 %v3027
    %v3143 = vpop.f32.mrb[0].mxu0
    %v3144 = vadd.f32 %v2975, %v3143
    %v3145 = vpop.f32.mrb[0].mxu0
    %v3146 = vadd.f32 %v2977, %v3145
    %v3147 = vpop.f32.mrb[0].mxu0
    %v3148 = vadd.f32 %v2979, %v3147
    %v3149 = vpop.f32.mrb[0].mxu0
    %v3150 = vadd.f32 %v2981, %v3149
    %3151 = vdwg.mxu0
    %v3156 = vcombine.low %v3144, %v3146
    %v3157 = vcombine.high %v3144, %v3146
    %v3159 = vunpack.c.l.s4 1983009808
    %v3160 = vunpack.c.0.s8 %v3159
    %v3161 = vlaneseq
    %v3162 = vshrl.u32 %v3161, 7
    %v3163 = vsub.s32 %v3160, %v3162
    %v3164 = vrot.slane %v3156, %v3163
    %v3166 = vunpack.c.l.s4 1983009808
    %v3167 = vunpack.c.0.s8 %v3166
    %v3168 = vlaneseq
    %v3169 = vshrl.u32 %v3168, 7
    %v3170 = vsub.s32 %v3167, %v3169
    %v3171 = vrot.slane %v3157, %v3170
    %v3172 = vcombine.high %v3164, %v3164
    %v3173 = vcombine.high %v3171, %v3171
    %v3174 = vcombine.low %v3148, %v3150
    %v3176 = vunpack.c.l.s4 1983009808
    %v3177 = vunpack.c.0.s8 %v3176
    %v3178 = vlaneseq
    %v3179 = vshrl.u32 %v3178, 7
    %v3180 = vsub.s32 %v3177, %v3179
    %v3181 = vrot.slane %v3174, %v3180
    %v3182 = vcombine.high %v3181, %v3181
    %v3184 = vunpack.c.l.s4 1983009808
    %v3185 = vunpack.c.0.s8 %v3184
    %v3186 = vlaneseq
    %v3187 = vshrl.u32 %v3186, 7
    %v3188 = vsub.s32 %v3185, %v3187
    %v3189 = vrot.slane %v3164, %v3188
    %v3190 = vcombine.high %v3189, %v3189
    %v3192 = vunpack.c.l.s4 1983009808
    %v3193 = vunpack.c.0.s8 %v3192
    %v3194 = vlaneseq
    %v3195 = vshrl.u32 %v3194, 7
    %v3196 = vsub.s32 %v3193, %v3195
    %v3197 = vrot.slane %v3172, %v3196
    %v3198 = vcombine.high %v3197, %v3197
    %v3200 = vunpack.c.l.s4 1983009808
    %v3201 = vunpack.c.0.s8 %v3200
    %v3202 = vlaneseq
    %v3203 = vshrl.u32 %v3202, 7
    %v3204 = vsub.s32 %v3201, %v3203
    %v3205 = vrot.slane %v3171, %v3204
    %v3206 = vcombine.high %v3205, %v3205
    %v3208 = vunpack.c.l.s4 1983009808
    %v3209 = vunpack.c.0.s8 %v3208
    %v3210 = vlaneseq
    %v3211 = vshrl.u32 %v3210, 7
    %v3212 = vsub.s32 %v3209, %v3211
    %v3213 = vrot.slane %v3173, %v3212
    %v3214 = vcombine.high %v3213, %v3213
    %v3216 = vunpack.c.l.s4 1983009808
    %v3217 = vunpack.c.0.s8 %v3216
    %v3218 = vlaneseq
    %v3219 = vshrl.u32 %v3218, 7
    %v3220 = vsub.s32 %v3217, %v3219
    %v3221 = vrot.slane %v3181, %v3220
    %v3222 = vcombine.high %v3221, %v3221
    %v3224 = vunpack.c.l.s4 1983009808
    %v3225 = vunpack.c.0.s8 %v3224
    %v3226 = vlaneseq
    %v3227 = vshrl.u32 %v3226, 7
    %v3228 = vsub.s32 %v3225, %v3227
    %v3229 = vrot.slane %v3182, %v3228
    %v3230 = vcombine.high %v3229, %v3229
    %v3243 = vsel %vm2533, %v3189, -inf
    %v3244 = vrot.slane %v3243, 4
    %v3245 = vmax.f32 %v3243, %v3244
    %v3246 = vrot.slane %v3245, 2
    %v3247 = vmax.f32 %v3245, %v3246
    %v3248 = vrot.slane %v3247, 1
    %v3249 = vmax.f32 %v3247, %v3248
    %v3250 = vsel %vm2533, %v3190, -inf
    %v3251 = vrot.slane %v3250, 4
    %v3252 = vmax.f32 %v3250, %v3251
    %v3253 = vrot.slane %v3252, 2
    %v3254 = vmax.f32 %v3252, %v3253
    %v3255 = vrot.slane %v3254, 1
    %v3256 = vmax.f32 %v3254, %v3255
    %v3257 = vsel %vm2533, %v3197, -inf
    %v3258 = vrot.slane %v3257, 4
    %v3259 = vmax.f32 %v3257, %v3258
    %v3260 = vrot.slane %v3259, 2
    %v3261 = vmax.f32 %v3259, %v3260
    %v3262 = vrot.slane %v3261, 1
    %v3263 = vmax.f32 %v3261, %v3262
    %v3264 = vsel %vm2533, %v3198, -inf
    %v3265 = vrot.slane %v3264, 4
    %v3266 = vmax.f32 %v3264, %v3265
    %v3267 = vrot.slane %v3266, 2
    %v3268 = vmax.f32 %v3266, %v3267
    %v3269 = vrot.slane %v3268, 1
    %v3270 = vmax.f32 %v3268, %v3269
    %v3271 = vsel %vm2533, %v3205, -inf
    %v3272 = vrot.slane %v3271, 4
    %v3273 = vmax.f32 %v3271, %v3272
    %v3274 = vrot.slane %v3273, 2
    %v3275 = vmax.f32 %v3273, %v3274
    %v3276 = vrot.slane %v3275, 1
    %v3277 = vmax.f32 %v3275, %v3276
    %v3278 = vsel %vm2533, %v3206, -inf
    %v3279 = vrot.slane %v3278, 4
    %v3280 = vmax.f32 %v3278, %v3279
    %v3281 = vrot.slane %v3280, 2
    %v3282 = vmax.f32 %v3280, %v3281
    %v3283 = vrot.slane %v3282, 1
    %v3284 = vmax.f32 %v3282, %v3283
    %v3285 = vsel %vm2533, %v3213, -inf
    %v3286 = vrot.slane %v3285, 4
    %v3287 = vmax.f32 %v3285, %v3286
    %v3288 = vrot.slane %v3287, 2
    %v3289 = vmax.f32 %v3287, %v3288
    %v3290 = vrot.slane %v3289, 1
    %v3291 = vmax.f32 %v3289, %v3290
    %v3292 = vsel %vm2533, %v3214, -inf
    %v3293 = vrot.slane %v3292, 4
    %v3294 = vmax.f32 %v3292, %v3293
    %v3295 = vrot.slane %v3294, 2
    %v3296 = vmax.f32 %v3294, %v3295
    %v3297 = vrot.slane %v3296, 1
    %v3298 = vmax.f32 %v3296, %v3297
    %v3299 = vsel %vm2533, %v3221, -inf
    %v3300 = vrot.slane %v3299, 4
    %v3301 = vmax.f32 %v3299, %v3300
    %v3302 = vrot.slane %v3301, 2
    %v3303 = vmax.f32 %v3301, %v3302
    %v3304 = vrot.slane %v3303, 1
    %v3305 = vmax.f32 %v3303, %v3304
    %v3306 = vsel %vm2533, %v3222, -inf
    %v3307 = vrot.slane %v3306, 4
    %v3308 = vmax.f32 %v3306, %v3307
    %v3309 = vrot.slane %v3308, 2
    %v3310 = vmax.f32 %v3308, %v3309
    %v3311 = vrot.slane %v3310, 1
    %v3312 = vmax.f32 %v3310, %v3311
    %v3313 = vsel %vm2533, %v3229, -inf
    %v3314 = vrot.slane %v3313, 4
    %v3315 = vmax.f32 %v3313, %v3314
    %v3316 = vrot.slane %v3315, 2
    %v3317 = vmax.f32 %v3315, %v3316
    %v3318 = vrot.slane %v3317, 1
    %v3319 = vmax.f32 %v3317, %v3318
    %v3320 = vsel %vm2533, %v3230, -inf
    %v3321 = vrot.slane %v3320, 4
    %v3322 = vmax.f32 %v3320, %v3321
    %v3323 = vrot.slane %v3322, 2
    %v3324 = vmax.f32 %v3322, %v3323
    %v3325 = vrot.slane %v3324, 1
    %v3326 = vmax.f32 %v3324, %v3325
    %v3327 = vld [vmem:[%s6] sm:$0x3]
    %v3329 = vlaneseq
    %v3330 = vshrl.u32 %v3329, 7
    %v3331 = vsub.s32 0, %v3330
    %v3332 = vrot.slane %v3327, %v3331
    %v3333 = vlaneseq
    %v3334 = vshrl.u32 %v3333, 7
    %v3335 = vsub.s32 1, %v3334
    %v3336 = vrot.slane %v3327, %v3335
    %v3339 = vadd.f32 %v3249, %v3332
    %v3340 = vadd.f32 %v3256, %v3336
    %v3341 = vadd.f32 %v3263, %v3332
    %v3342 = vadd.f32 %v3270, %v3336
    %v3343 = vadd.f32 %v3277, %v3332
    %v3344 = vadd.f32 %v3284, %v3336
    %v3345 = vadd.f32 %v3291, %v3332
    %v3346 = vadd.f32 %v3298, %v3336
    %v3347 = vadd.f32 %v3305, %v3332
    %v3348 = vadd.f32 %v3312, %v3336
    %v3349 = vadd.f32 %v3319, %v3332
    %v3350 = vadd.f32 %v3326, %v3336
    %v3351 = vmax.f32 %v3339, 0.0
    %v3352 = vmax.f32 %v3340, 0.0
    %v3353 = vmax.f32 %v3341, 0.0
    %v3354 = vmax.f32 %v3342, 0.0
    %v3355 = vmax.f32 %v3343, 0.0
    %v3356 = vmax.f32 %v3344, 0.0
    %v3357 = vmax.f32 %v3345, 0.0
    %v3358 = vmax.f32 %v3346, 0.0
    %v3359 = vmax.f32 %v3347, 0.0
    %v3360 = vmax.f32 %v3348, 0.0
    %v3361 = vmax.f32 %v3349, 0.0
    %v3362 = vmax.f32 %v3350, 0.0
    %v3363 = vld [vmem:[%s7] sm:$0xff]
    %v3364 = vld [vmem:[%s7 + $0x8] sm:$0xff]
    %v3365 = vld [vmem:[%s7 + $0x10] sm:$0xff]
    %v3366 = vld [vmem:[%s7 + $0x18] sm:$0xff]
    %v3367 = vld [vmem:[%s7 + $0x20] sm:$0xff]
    %v3368 = vld [vmem:[%s7 + $0x28] sm:$0xff]
    %v3369 = vld [vmem:[%s7 + $0x30] sm:$0xff]
    %v3370 = vld [vmem:[%s7 + $0x38] sm:$0xff]
    %v3371 = vld [vmem:[%s7 + $0x40] sm:$0xff]
    %v3372 = vld [vmem:[%s7 + $0x48] sm:$0xff]
    %v3373 = vld [vmem:[%s7 + $0x50] sm:$0xff]
    %v3374 = vld [vmem:[%s7 + $0x58] sm:$0xff]
    %v3375 = vld [vmem:[%s7 + $0x60] sm:$0xff]
    %v3376 = vld [vmem:[%s7 + $0x68] sm:$0xff]
    %v3377 = vld [vmem:[%s7 + $0x70] sm:$0xff]
    %v3378 = vld [vmem:[%s7 + $0x78] sm:$0xff]
    %v3379 = vld [vmem:[%s7 + $0x80] sm:$0xff]
    %v3380 = vld [vmem:[%s7 + $0x88] sm:$0xff]
    %v3381 = vld [vmem:[%s7 + $0x90] sm:$0xff]
    %v3382 = vld [vmem:[%s7 + $0x98] sm:$0xff]
    %v3383 = vld [vmem:[%s7 + $0xa0] sm:$0xff]
    %v3384 = vld [vmem:[%s7 + $0xa8] sm:$0xff]
    %v3385 = vld [vmem:[%s7 + $0xb0] sm:$0xff]
    %v3386 = vld [vmem:[%s7 + $0xb8] sm:$0xff]
    %v3387 = vld [vmem:[%s7 + $0xc0] sm:$0xff]
    %v3388 = vld [vmem:[%s7 + $0xc8] sm:$0xff]
    %v3389 = vld [vmem:[%s7 + $0xd0] sm:$0xff]
    %v3390 = vld [vmem:[%s7 + $0xd8] sm:$0xff]
    %v3391 = vld [vmem:[%s7 + $0xe0] sm:$0xff]
    %v3392 = vld [vmem:[%s7 + $0xe8] sm:$0xff]
    %v3393 = vld [vmem:[%s7 + $0xf0] sm:$0xff]
    %v3394 = vld [vmem:[%s7 + $0xf8] sm:$0xff]
    %v3395 = vld [vmem:[%s7 + $0x100] sm:$0xff]
    %v3396 = vld [vmem:[%s7 + $0x108] sm:$0xff]
    %v3397 = vld [vmem:[%s7 + $0x110] sm:$0xff]
    %v3398 = vld [vmem:[%s7 + $0x118] sm:$0xff]
    %v3399 = vld [vmem:[%s7 + $0x120] sm:$0xff]
    %v3400 = vld [vmem:[%s7 + $0x128] sm:$0xff]
    %v3401 = vld [vmem:[%s7 + $0x130] sm:$0xff]
    %v3402 = vld [vmem:[%s7 + $0x138] sm:$0xff]
    %v3403 = vld [vmem:[%s7 + $0x140] sm:$0xff]
    %v3404 = vld [vmem:[%s7 + $0x148] sm:$0xff]
    %v3405 = vld [vmem:[%s7 + $0x150] sm:$0xff]
    %v3406 = vld [vmem:[%s7 + $0x158] sm:$0xff]
    %v3407 = vld [vmem:[%s7 + $0x160] sm:$0xff]
    %v3408 = vld [vmem:[%s7 + $0x168] sm:$0xff]
    %v3409 = vld [vmem:[%s7 + $0x170] sm:$0xff]
    %v3410 = vld [vmem:[%s7 + $0x178] sm:$0xff]
    %v3411 = vld [vmem:[%s7 + $0x180] sm:$0xff]
    %v3412 = vld [vmem:[%s7 + $0x188] sm:$0xff]
    %v3413 = vld [vmem:[%s7 + $0x190] sm:$0xff]
    %v3414 = vld [vmem:[%s7 + $0x198] sm:$0xff]
    %v3415 = vld [vmem:[%s7 + $0x1a0] sm:$0xff]
    %v3416 = vld [vmem:[%s7 + $0x1a8] sm:$0xff]
    %v3417 = vld [vmem:[%s7 + $0x1b0] sm:$0xff]
    %v3418 = vld [vmem:[%s7 + $0x1b8] sm:$0xff]
    %v3419 = vld [vmem:[%s7 + $0x1c0] sm:$0xff]
    %v3420 = vld [vmem:[%s7 + $0x1c8] sm:$0xff]
    %v3421 = vld [vmem:[%s7 + $0x1d0] sm:$0xff]
    %v3422 = vld [vmem:[%s7 + $0x1d8] sm:$0xff]
    %v3423 = vld [vmem:[%s7 + $0x1e0] sm:$0xff]
    %v3424 = vld [vmem:[%s7 + $0x1e8] sm:$0xff]
    %v3425 = vld [vmem:[%s7 + $0x1f0] sm:$0xff]
    %v3426 = vld [vmem:[%s7 + $0x1f8] sm:$0xff]
    %v3427 = vpack.c.bf16 %v3351, %v3351
    %v3428 = vpack.c.bf16 %v3352, %v3352
    %v3429 = vpack.c.bf16 %v3357, %v3357
    %v3430 = vpack.c.bf16 %v3358, %v3358
    %s3431 = scalar_lea.vmem %s7, 512
    %v3432 = vld [vmem:[%s3431] sm:$0xff]
    %v3433 = vld [vmem:[%s3431 + $0x8] sm:$0xff]
    %v3434 = vld [vmem:[%s3431 + $0x10] sm:$0xff]
    %v3435 = vld [vmem:[%s3431 + $0x18] sm:$0xff]
    %v3436 = vld [vmem:[%s3431 + $0x20] sm:$0xff]
    %v3437 = vld [vmem:[%s3431 + $0x28] sm:$0xff]
    %v3438 = vld [vmem:[%s3431 + $0x30] sm:$0xff]
    %v3439 = vld [vmem:[%s3431 + $0x38] sm:$0xff]
    %v3440 = vld [vmem:[%s3431 + $0x40] sm:$0xff]
    %v3441 = vld [vmem:[%s3431 + $0x48] sm:$0xff]
    %v3442 = vld [vmem:[%s3431 + $0x50] sm:$0xff]
    %v3443 = vld [vmem:[%s3431 + $0x58] sm:$0xff]
    %v3444 = vld [vmem:[%s3431 + $0x60] sm:$0xff]
    %v3445 = vld [vmem:[%s3431 + $0x68] sm:$0xff]
    %v3446 = vld [vmem:[%s3431 + $0x70] sm:$0xff]
    %v3447 = vld [vmem:[%s3431 + $0x78] sm:$0xff]
    %v3448 = vld [vmem:[%s3431 + $0x80] sm:$0xff]
    %v3449 = vld [vmem:[%s3431 + $0x88] sm:$0xff]
    %v3450 = vld [vmem:[%s3431 + $0x90] sm:$0xff]
    %v3451 = vld [vmem:[%s3431 + $0x98] sm:$0xff]
    %v3452 = vld [vmem:[%s3431 + $0xa0] sm:$0xff]
    %v3453 = vld [vmem:[%s3431 + $0xa8] sm:$0xff]
    %v3454 = vld [vmem:[%s3431 + $0xb0] sm:$0xff]
    %v3455 = vld [vmem:[%s3431 + $0xb8] sm:$0xff]
    %v3456 = vld [vmem:[%s3431 + $0xc0] sm:$0xff]
    %v3457 = vld [vmem:[%s3431 + $0xc8] sm:$0xff]
    %v3458 = vld [vmem:[%s3431 + $0xd0] sm:$0xff]
    %v3459 = vld [vmem:[%s3431 + $0xd8] sm:$0xff]
    %v3460 = vld [vmem:[%s3431 + $0xe0] sm:$0xff]
    %v3461 = vld [vmem:[%s3431 + $0xe8] sm:$0xff]
    %v3462 = vld [vmem:[%s3431 + $0xf0] sm:$0xff]
    %v3463 = vld [vmem:[%s3431 + $0xf8] sm:$0xff]
    %v3464 = vld [vmem:[%s3431 + $0x100] sm:$0xff]
    %v3465 = vld [vmem:[%s3431 + $0x108] sm:$0xff]
    %v3466 = vld [vmem:[%s3431 + $0x110] sm:$0xff]
    %v3467 = vld [vmem:[%s3431 + $0x118] sm:$0xff]
    %v3468 = vld [vmem:[%s3431 + $0x120] sm:$0xff]
    %v3469 = vld [vmem:[%s3431 + $0x128] sm:$0xff]
    %v3470 = vld [vmem:[%s3431 + $0x130] sm:$0xff]
    %v3471 = vld [vmem:[%s3431 + $0x138] sm:$0xff]
    %v3472 = vld [vmem:[%s3431 + $0x140] sm:$0xff]
    %v3473 = vld [vmem:[%s3431 + $0x148] sm:$0xff]
    %v3474 = vld [vmem:[%s3431 + $0x150] sm:$0xff]
    %v3475 = vld [vmem:[%s3431 + $0x158] sm:$0xff]
    %v3476 = vld [vmem:[%s3431 + $0x160] sm:$0xff]
    %v3477 = vld [vmem:[%s3431 + $0x168] sm:$0xff]
    %v3478 = vld [vmem:[%s3431 + $0x170] sm:$0xff]
    %v3479 = vld [vmem:[%s3431 + $0x178] sm:$0xff]
    %v3480 = vld [vmem:[%s3431 + $0x180] sm:$0xff]
    %v3481 = vld [vmem:[%s3431 + $0x188] sm:$0xff]
    %v3482 = vld [vmem:[%s3431 + $0x190] sm:$0xff]
    %v3483 = vld [vmem:[%s3431 + $0x198] sm:$0xff]
    %v3484 = vld [vmem:[%s3431 + $0x1a0] sm:$0xff]
    %v3485 = vld [vmem:[%s3431 + $0x1a8] sm:$0xff]
    %v3486 = vld [vmem:[%s3431 + $0x1b0] sm:$0xff]
    %v3487 = vld [vmem:[%s3431 + $0x1b8] sm:$0xff]
    %v3488 = vld [vmem:[%s3431 + $0x1c0] sm:$0xff]
    %v3489 = vld [vmem:[%s3431 + $0x1c8] sm:$0xff]
    %v3490 = vld [vmem:[%s3431 + $0x1d0] sm:$0xff]
    %v3491 = vld [vmem:[%s3431 + $0x1d8] sm:$0xff]
    %v3492 = vld [vmem:[%s3431 + $0x1e0] sm:$0xff]
    %v3493 = vld [vmem:[%s3431 + $0x1e8] sm:$0xff]
    %v3494 = vld [vmem:[%s3431 + $0x1f0] sm:$0xff]
    %v3495 = vld [vmem:[%s3431 + $0x1f8] sm:$0xff]
    %v3496 = vpack.c.bf16 %v3353, %v3353
    %v3497 = vpack.c.bf16 %v3354, %v3354
    %v3498 = vpack.c.bf16 %v3359, %v3359
    %v3499 = vpack.c.bf16 %v3360, %v3360
    %v3504 = vunpack.c.l.b16 %v3496
    %v3505 = vunpack.c.l.b16 %v3497
    %v3506 = vunpack.c.l.b16 %v3498
    %v3507 = vunpack.c.l.b16 %v3499
    %v3508 = vrot.slane %v3506, 7
    %v3509 = vsel %vm1944, %v3508, %v3504
    %v3510 = vrot.slane %v3507, 7
    %v3511 = vsel %vm1944, %v3510, %v3505
    %v3512 = vpack.c.b16 %v3509, %v3509
    %v3513 = vpack.c.b16 %v3511, %v3511
    %v3580 = vunpack.c.l.b16 %v3432
    %v3581 = vunpack.c.h.b16 %v3432
    %v3582 = vunpack.c.l.b16 %v3433
    %v3583 = vunpack.c.h.b16 %v3433
    %v3584 = vunpack.c.l.b16 %v3434
    %v3585 = vunpack.c.h.b16 %v3434
    %v3586 = vunpack.c.l.b16 %v3435
    %v3587 = vunpack.c.h.b16 %v3435
    %v3588 = vunpack.c.l.b16 %v3436
    %v3589 = vunpack.c.h.b16 %v3436
    %v3590 = vunpack.c.l.b16 %v3437
    %v3591 = vunpack.c.h.b16 %v3437
    %v3592 = vunpack.c.l.b16 %v3438
    %v3593 = vunpack.c.h.b16 %v3438
    %v3594 = vunpack.c.l.b16 %v3439
    %v3595 = vunpack.c.h.b16 %v3439
    %v3596 = vunpack.c.l.b16 %v3440
    %v3597 = vunpack.c.h.b16 %v3440
    %v3598 = vunpack.c.l.b16 %v3441
    %v3599 = vunpack.c.h.b16 %v3441
    %v3600 = vunpack.c.l.b16 %v3442
    %v3601 = vunpack.c.h.b16 %v3442
    %v3602 = vunpack.c.l.b16 %v3443
    %v3603 = vunpack.c.h.b16 %v3443
    %v3604 = vunpack.c.l.b16 %v3444
    %v3605 = vunpack.c.h.b16 %v3444
    %v3606 = vunpack.c.l.b16 %v3445
    %v3607 = vunpack.c.h.b16 %v3445
    %v3608 = vunpack.c.l.b16 %v3446
    %v3609 = vunpack.c.h.b16 %v3446
    %v3610 = vunpack.c.l.b16 %v3447
    %v3611 = vunpack.c.h.b16 %v3447
    %v3612 = vunpack.c.l.b16 %v3448
    %v3613 = vunpack.c.h.b16 %v3448
    %v3614 = vunpack.c.l.b16 %v3449
    %v3615 = vunpack.c.h.b16 %v3449
    %v3616 = vunpack.c.l.b16 %v3450
    %v3617 = vunpack.c.h.b16 %v3450
    %v3618 = vunpack.c.l.b16 %v3451
    %v3619 = vunpack.c.h.b16 %v3451
    %v3620 = vunpack.c.l.b16 %v3452
    %v3621 = vunpack.c.h.b16 %v3452
    %v3622 = vunpack.c.l.b16 %v3453
    %v3623 = vunpack.c.h.b16 %v3453
    %v3624 = vunpack.c.l.b16 %v3454
    %v3625 = vunpack.c.h.b16 %v3454
    %v3626 = vunpack.c.l.b16 %v3455
    %v3627 = vunpack.c.h.b16 %v3455
    %v3628 = vunpack.c.l.b16 %v3456
    %v3629 = vunpack.c.h.b16 %v3456
    %v3630 = vunpack.c.l.b16 %v3457
    %v3631 = vunpack.c.h.b16 %v3457
    %v3632 = vunpack.c.l.b16 %v3458
    %v3633 = vunpack.c.h.b16 %v3458
    %v3634 = vunpack.c.l.b16 %v3459
    %v3635 = vunpack.c.h.b16 %v3459
    %v3636 = vunpack.c.l.b16 %v3460
    %v3637 = vunpack.c.h.b16 %v3460
    %v3638 = vunpack.c.l.b16 %v3461
    %v3639 = vunpack.c.h.b16 %v3461
    %v3640 = vunpack.c.l.b16 %v3462
    %v3641 = vunpack.c.h.b16 %v3462
    %v3642 = vunpack.c.l.b16 %v3463
    %v3643 = vunpack.c.h.b16 %v3463
    %v3644 = vunpack.c.l.b16 %v3464
    %v3645 = vunpack.c.h.b16 %v3464
    %v3646 = vunpack.c.l.b16 %v3465
    %v3647 = vunpack.c.h.b16 %v3465
    %v3648 = vunpack.c.l.b16 %v3466
    %v3649 = vunpack.c.h.b16 %v3466
    %v3650 = vunpack.c.l.b16 %v3467
    %v3651 = vunpack.c.h.b16 %v3467
    %v3652 = vunpack.c.l.b16 %v3468
    %v3653 = vunpack.c.h.b16 %v3468
    %v3654 = vunpack.c.l.b16 %v3469
    %v3655 = vunpack.c.h.b16 %v3469
    %v3656 = vunpack.c.l.b16 %v3470
    %v3657 = vunpack.c.h.b16 %v3470
    %v3658 = vunpack.c.l.b16 %v3471
    %v3659 = vunpack.c.h.b16 %v3471
    %v3660 = vunpack.c.l.b16 %v3472
    %v3661 = vunpack.c.h.b16 %v3472
    %v3662 = vunpack.c.l.b16 %v3473
    %v3663 = vunpack.c.h.b16 %v3473
    %v3664 = vunpack.c.l.b16 %v3474
    %v3665 = vunpack.c.h.b16 %v3474
    %v3666 = vunpack.c.l.b16 %v3475
    %v3667 = vunpack.c.h.b16 %v3475
    %v3668 = vunpack.c.l.b16 %v3476
    %v3669 = vunpack.c.h.b16 %v3476
    %v3670 = vunpack.c.l.b16 %v3477
    %v3671 = vunpack.c.h.b16 %v3477
    %v3672 = vunpack.c.l.b16 %v3478
    %v3673 = vunpack.c.h.b16 %v3478
    %v3674 = vunpack.c.l.b16 %v3479
    %v3675 = vunpack.c.h.b16 %v3479
    %v3676 = vunpack.c.l.b16 %v3480
    %v3677 = vunpack.c.h.b16 %v3480
    %v3678 = vunpack.c.l.b16 %v3481
    %v3679 = vunpack.c.h.b16 %v3481
    %v3680 = vunpack.c.l.b16 %v3482
    %v3681 = vunpack.c.h.b16 %v3482
    %v3682 = vunpack.c.l.b16 %v3483
    %v3683 = vunpack.c.h.b16 %v3483
    %v3684 = vunpack.c.l.b16 %v3484
    %v3685 = vunpack.c.h.b16 %v3484
    %v3686 = vunpack.c.l.b16 %v3485
    %v3687 = vunpack.c.h.b16 %v3485
    %v3688 = vunpack.c.l.b16 %v3486
    %v3689 = vunpack.c.h.b16 %v3486
    %v3690 = vunpack.c.l.b16 %v3487
    %v3691 = vunpack.c.h.b16 %v3487
    %v3692 = vunpack.c.l.b16 %v3488
    %v3693 = vunpack.c.h.b16 %v3488
    %v3694 = vunpack.c.l.b16 %v3489
    %v3695 = vunpack.c.h.b16 %v3489
    %v3696 = vunpack.c.l.b16 %v3490
    %v3697 = vunpack.c.h.b16 %v3490
    %v3698 = vunpack.c.l.b16 %v3491
    %v3699 = vunpack.c.h.b16 %v3491
    %v3700 = vunpack.c.l.b16 %v3492
    %v3701 = vunpack.c.h.b16 %v3492
    %v3702 = vunpack.c.l.b16 %v3493
    %v3703 = vunpack.c.h.b16 %v3493
    %v3704 = vunpack.c.l.b16 %v3494
    %v3705 = vunpack.c.h.b16 %v3494
    %v3706 = vunpack.c.l.b16 %v3495
    %v3707 = vunpack.c.h.b16 %v3495
    %v3708 = vpack.c.b16 %v3584, %v3580
    %v3709 = vpack.c.b16 %v3585, %v3581
    %v3710 = vpack.c.b16 %v3586, %v3582
    %v3711 = vpack.c.b16 %v3587, %v3583
    %v3712 = vpack.c.b16 %v3592, %v3588
    %v3713 = vpack.c.b16 %v3593, %v3589
    %v3714 = vpack.c.b16 %v3594, %v3590
    %v3715 = vpack.c.b16 %v3595, %v3591
    %v3716 = vpack.c.b16 %v3600, %v3596
    %v3717 = vpack.c.b16 %v3601, %v3597
    %v3718 = vpack.c.b16 %v3602, %v3598
    %v3719 = vpack.c.b16 %v3603, %v3599
    %v3720 = vpack.c.b16 %v3608, %v3604
    %v3721 = vpack.c.b16 %v3609, %v3605
    %v3722 = vpack.c.b16 %v3610, %v3606
    %v3723 = vpack.c.b16 %v3611, %v3607
    %v3724 = vpack.c.b16 %v3616, %v3612
    %v3725 = vpack.c.b16 %v3617, %v3613
    %v3726 = vpack.c.b16 %v3618, %v3614
    %v3727 = vpack.c.b16 %v3619, %v3615
    %v3728 = vpack.c.b16 %v3624, %v3620
    %v3729 = vpack.c.b16 %v3625, %v3621
    %v3730 = vpack.c.b16 %v3626, %v3622
    %v3731 = vpack.c.b16 %v3627, %v3623
    %v3732 = vpack.c.b16 %v3632, %v3628
    %v3733 = vpack.c.b16 %v3633, %v3629
    %v3734 = vpack.c.b16 %v3634, %v3630
    %v3735 = vpack.c.b16 %v3635, %v3631
    %v3736 = vpack.c.b16 %v3640, %v3636
    %v3737 = vpack.c.b16 %v3641, %v3637
    %v3738 = vpack.c.b16 %v3642, %v3638
    %v3739 = vpack.c.b16 %v3643, %v3639
    %v3740 = vpack.c.b16 %v3648, %v3644
    %v3741 = vpack.c.b16 %v3649, %v3645
    %v3742 = vpack.c.b16 %v3650, %v3646
    %v3743 = vpack.c.b16 %v3651, %v3647
    %v3744 = vpack.c.b16 %v3656, %v3652
    %v3745 = vpack.c.b16 %v3657, %v3653
    %v3746 = vpack.c.b16 %v3658, %v3654
    %v3747 = vpack.c.b16 %v3659, %v3655
    %v3748 = vpack.c.b16 %v3664, %v3660
    %v3749 = vpack.c.b16 %v3665, %v3661
    %v3750 = vpack.c.b16 %v3666, %v3662
    %v3751 = vpack.c.b16 %v3667, %v3663
    %v3752 = vpack.c.b16 %v3672, %v3668
    %v3753 = vpack.c.b16 %v3673, %v3669
    %v3754 = vpack.c.b16 %v3674, %v3670
    %v3755 = vpack.c.b16 %v3675, %v3671
    %v3756 = vpack.c.b16 %v3680, %v3676
    %v3757 = vpack.c.b16 %v3681, %v3677
    %v3758 = vpack.c.b16 %v3682, %v3678
    %v3759 = vpack.c.b16 %v3683, %v3679
    %v3760 = vpack.c.b16 %v3688, %v3684
    %v3761 = vpack.c.b16 %v3689, %v3685
    %v3762 = vpack.c.b16 %v3690, %v3686
    %v3763 = vpack.c.b16 %v3691, %v3687
    %v3764 = vpack.c.b16 %v3696, %v3692
    %v3765 = vpack.c.b16 %v3697, %v3693
    %v3766 = vpack.c.b16 %v3698, %v3694
    %v3767 = vpack.c.b16 %v3699, %v3695
    %v3768 = vpack.c.b16 %v3704, %v3700
    %v3769 = vpack.c.b16 %v3705, %v3701
    %v3770 = vpack.c.b16 %v3706, %v3702
    %v3771 = vpack.c.b16 %v3707, %v3703
    %3836 = vmatprep.subr.bf16.mxu0 %v3709
    %3837 = vmatpush1.bf16.msra.mxu0 %v3708
    %3838 = vmatprep.subr.bf16.mxu0 %v3713
    %3839 = vmatpush1.bf16.msra.mxu0 %v3712
    %3840 = vmatprep.subr.bf16.mxu0 %v3717
    %3841 = vmatpush1.bf16.msra.mxu0 %v3716
    %3842 = vmatprep.subr.bf16.mxu0 %v3721
    %3843 = vmatpush1.bf16.msra.mxu0 %v3720
    %3844 = vmatprep.subr.bf16.mxu0 %v3725
    %3845 = vmatpush1.bf16.msra.mxu0 %v3724
    %3846 = vmatprep.subr.bf16.mxu0 %v3729
    %3847 = vmatpush1.bf16.msra.mxu0 %v3728
    %3848 = vmatprep.subr.bf16.mxu0 %v3733
    %3849 = vmatpush1.bf16.msra.mxu0 %v3732
    %3850 = vmatprep.subr.bf16.mxu0 %v3737
    %3851 = vmatpush1.bf16.msra.mxu0 %v3736
    %3852 = vmatprep.subr.bf16.mxu0 %v3741
    %3853 = vmatpush1.bf16.msra.mxu0 %v3740
    %3854 = vmatprep.subr.bf16.mxu0 %v3745
    %3855 = vmatpush1.bf16.msra.mxu0 %v3744
    %3856 = vmatprep.subr.bf16.mxu0 %v3749
    %3857 = vmatpush1.bf16.msra.mxu0 %v3748
    %3858 = vmatprep.subr.bf16.mxu0 %v3753
    %3859 = vmatpush1.bf16.msra.mxu0 %v3752
    %3860 = vmatprep.subr.bf16.mxu0 %v3757
    %3861 = vmatpush1.bf16.msra.mxu0 %v3756
    %3862 = vmatprep.subr.bf16.mxu0 %v3761
    %3863 = vmatpush1.bf16.msra.mxu0 %v3760
    %3864 = vmatprep.subr.bf16.mxu0 %v3765
    %3865 = vmatpush1.bf16.msra.mxu0 %v3764
    %3866 = vmatprep.subr.bf16.mxu0 %v3769
    %3867 = vmatpush1.bf16.msra.mxu0 %v3768
    %3868 = vmatprep.mubr.bf16.mxu0 %v3513
    %3869 = vmatmul.mubr.bf16.gmra.mrb[0].mxu0 %v3512
    %v3870 = vpop.f32.mrb[0].mxu0
    %v3871 = vadd.f32 0.0, %v3870
    %v3872 = vpop.f32.mrb[0].mxu0
    %v3873 = vadd.f32 0.0, %v3872
    %v3874 = vpop.f32.mrb[0].mxu0
    %v3875 = vpop.f32.mrb[0].mxu0
    %3876 = vdwg.mxu0
    %3877 = vmatprep.subr.bf16.mxu0 %v3711
    %3878 = vmatpush1.bf16.msra.mxu0 %v3710
    %3879 = vmatprep.subr.bf16.mxu0 %v3715
    %3880 = vmatpush1.bf16.msra.mxu0 %v3714
    %3881 = vmatprep.subr.bf16.mxu0 %v3719
    %3882 = vmatpush1.bf16.msra.mxu0 %v3718
    %3883 = vmatprep.subr.bf16.mxu0 %v3723
    %3884 = vmatpush1.bf16.msra.mxu0 %v3722
    %3885 = vmatprep.subr.bf16.mxu0 %v3727
    %3886 = vmatpush1.bf16.msra.mxu0 %v3726
    %3887 = vmatprep.subr.bf16.mxu0 %v3731
    %3888 = vmatpush1.bf16.msra.mxu0 %v3730
    %3889 = vmatprep.subr.bf16.mxu0 %v3735
    %3890 = vmatpush1.bf16.msra.mxu0 %v3734
    %3891 = vmatprep.subr.bf16.mxu0 %v3739
    %3892 = vmatpush1.bf16.msra.mxu0 %v3738
    %3893 = vmatprep.subr.bf16.mxu0 %v3743
    %3894 = vmatpush1.bf16.msra.mxu0 %v3742
    %3895 = vmatprep.subr.bf16.mxu0 %v3747
    %3896 = vmatpush1.bf16.msra.mxu0 %v3746
    %3897 = vmatprep.subr.bf16.mxu0 %v3751
    %3898 = vmatpush1.bf16.msra.mxu0 %v3750
    %3899 = vmatprep.subr.bf16.mxu0 %v3755
    %3900 = vmatpush1.bf16.msra.mxu0 %v3754
    %3901 = vmatprep.subr.bf16.mxu0 %v3759
    %3902 = vmatpush1.bf16.msra.mxu0 %v3758
    %3903 = vmatprep.subr.bf16.mxu0 %v3763
    %3904 = vmatpush1.bf16.msra.mxu0 %v3762
    %3905 = vmatprep.subr.bf16.mxu0 %v3767
    %3906 = vmatpush1.bf16.msra.mxu0 %v3766
    %3907 = vmatprep.subr.bf16.mxu0 %v3771
    %3908 = vmatpush1.bf16.msra.mxu0 %v3770
    %3909 = vmatprep.mubr.bf16.mxu0 %v3513
    %3910 = vmatmul.mubr.bf16.gmra.mrb[0].mxu0 %v3512
    %v3911 = vpop.f32.mrb[0].mxu0
    %v3912 = vadd.f32 0.0, %v3911
    %v3913 = vpop.f32.mrb[0].mxu0
    %v3914 = vadd.f32 0.0, %v3913
    %v3915 = vpop.f32.mrb[0].mxu0
    %v3916 = vpop.f32.mrb[0].mxu0
    %3917 = vdwg.mxu0
    %v3922 = vunpack.c.l.b16 %v3427
    %v3923 = vunpack.c.l.b16 %v3428
    %v3924 = vunpack.c.l.b16 %v3429
    %v3925 = vunpack.c.l.b16 %v3430
    %v3926 = vrot.slane %v3924, 7
    %v3927 = vsel %vm1944, %v3926, %v3922
    %v3928 = vrot.slane %v3925, 7
    %v3929 = vsel %vm1944, %v3928, %v3923
    %v3930 = vpack.c.b16 %v3927, %v3927
    %v3931 = vpack.c.b16 %v3929, %v3929
    %v3998 = vunpack.c.l.b16 %v3363
    %v3999 = vunpack.c.h.b16 %v3363
    %v4000 = vunpack.c.l.b16 %v3364
    %v4001 = vunpack.c.h.b16 %v3364
    %v4002 = vunpack.c.l.b16 %v3365
    %v4003 = vunpack.c.h.b16 %v3365
    %v4004 = vunpack.c.l.b16 %v3366
    %v4005 = vunpack.c.h.b16 %v3366
    %v4006 = vunpack.c.l.b16 %v3367
    %v4007 = vunpack.c.h.b16 %v3367
    %v4008 = vunpack.c.l.b16 %v3368
    %v4009 = vunpack.c.h.b16 %v3368
    %v4010 = vunpack.c.l.b16 %v3369
    %v4011 = vunpack.c.h.b16 %v3369
    %v4012 = vunpack.c.l.b16 %v3370
    %v4013 = vunpack.c.h.b16 %v3370
    %v4014 = vunpack.c.l.b16 %v3371
    %v4015 = vunpack.c.h.b16 %v3371
    %v4016 = vunpack.c.l.b16 %v3372
    %v4017 = vunpack.c.h.b16 %v3372
    %v4018 = vunpack.c.l.b16 %v3373
    %v4019 = vunpack.c.h.b16 %v3373
    %v4020 = vunpack.c.l.b16 %v3374
    %v4021 = vunpack.c.h.b16 %v3374
    %v4022 = vunpack.c.l.b16 %v3375
    %v4023 = vunpack.c.h.b16 %v3375
    %v4024 = vunpack.c.l.b16 %v3376
    %v4025 = vunpack.c.h.b16 %v3376
    %v4026 = vunpack.c.l.b16 %v3377
    %v4027 = vunpack.c.h.b16 %v3377
    %v4028 = vunpack.c.l.b16 %v3378
    %v4029 = vunpack.c.h.b16 %v3378
    %v4030 = vunpack.c.l.b16 %v3379
    %v4031 = vunpack.c.h.b16 %v3379
    %v4032 = vunpack.c.l.b16 %v3380
    %v4033 = vunpack.c.h.b16 %v3380
    %v4034 = vunpack.c.l.b16 %v3381
    %v4035 = vunpack.c.h.b16 %v3381
    %v4036 = vunpack.c.l.b16 %v3382
    %v4037 = vunpack.c.h.b16 %v3382
    %v4038 = vunpack.c.l.b16 %v3383
    %v4039 = vunpack.c.h.b16 %v3383
    %v4040 = vunpack.c.l.b16 %v3384
    %v4041 = vunpack.c.h.b16 %v3384
    %v4042 = vunpack.c.l.b16 %v3385
    %v4043 = vunpack.c.h.b16 %v3385
    %v4044 = vunpack.c.l.b16 %v3386
    %v4045 = vunpack.c.h.b16 %v3386
    %v4046 = vunpack.c.l.b16 %v3387
    %v4047 = vunpack.c.h.b16 %v3387
    %v4048 = vunpack.c.l.b16 %v3388
    %v4049 = vunpack.c.h.b16 %v3388
    %v4050 = vunpack.c.l.b16 %v3389
    %v4051 = vunpack.c.h.b16 %v3389
    %v4052 = vunpack.c.l.b16 %v3390
    %v4053 = vunpack.c.h.b16 %v3390
    %v4054 = vunpack.c.l.b16 %v3391
    %v4055 = vunpack.c.h.b16 %v3391
    %v4056 = vunpack.c.l.b16 %v3392
    %v4057 = vunpack.c.h.b16 %v3392
    %v4058 = vunpack.c.l.b16 %v3393
    %v4059 = vunpack.c.h.b16 %v3393
    %v4060 = vunpack.c.l.b16 %v3394
    %v4061 = vunpack.c.h.b16 %v3394
    %v4062 = vunpack.c.l.b16 %v3395
    %v4063 = vunpack.c.h.b16 %v3395
    %v4064 = vunpack.c.l.b16 %v3396
    %v4065 = vunpack.c.h.b16 %v3396
    %v4066 = vunpack.c.l.b16 %v3397
    %v4067 = vunpack.c.h.b16 %v3397
    %v4068 = vunpack.c.l.b16 %v3398
    %v4069 = vunpack.c.h.b16 %v3398
    %v4070 = vunpack.c.l.b16 %v3399
    %v4071 = vunpack.c.h.b16 %v3399
    %v4072 = vunpack.c.l.b16 %v3400
    %v4073 = vunpack.c.h.b16 %v3400
    %v4074 = vunpack.c.l.b16 %v3401
    %v4075 = vunpack.c.h.b16 %v3401
    %v4076 = vunpack.c.l.b16 %v3402
    %v4077 = vunpack.c.h.b16 %v3402
    %v4078 = vunpack.c.l.b16 %v3403
    %v4079 = vunpack.c.h.b16 %v3403
    %v4080 = vunpack.c.l.b16 %v3404
    %v4081 = vunpack.c.h.b16 %v3404
    %v4082 = vunpack.c.l.b16 %v3405
    %v4083 = vunpack.c.h.b16 %v3405
    %v4084 = vunpack.c.l.b16 %v3406
    %v4085 = vunpack.c.h.b16 %v3406
    %v4086 = vunpack.c.l.b16 %v3407
    %v4087 = vunpack.c.h.b16 %v3407
    %v4088 = vunpack.c.l.b16 %v3408
    %v4089 = vunpack.c.h.b16 %v3408
    %v4090 = vunpack.c.l.b16 %v3409
    %v4091 = vunpack.c.h.b16 %v3409
    %v4092 = vunpack.c.l.b16 %v3410
    %v4093 = vunpack.c.h.b16 %v3410
    %v4094 = vunpack.c.l.b16 %v3411
    %v4095 = vunpack.c.h.b16 %v3411
    %v4096 = vunpack.c.l.b16 %v3412
    %v4097 = vunpack.c.h.b16 %v3412
    %v4098 = vunpack.c.l.b16 %v3413
    %v4099 = vunpack.c.h.b16 %v3413
    %v4100 = vunpack.c.l.b16 %v3414
    %v4101 = vunpack.c.h.b16 %v3414
    %v4102 = vunpack.c.l.b16 %v3415
    %v4103 = vunpack.c.h.b16 %v3415
    %v4104 = vunpack.c.l.b16 %v3416
    %v4105 = vunpack.c.h.b16 %v3416
    %v4106 = vunpack.c.l.b16 %v3417
    %v4107 = vunpack.c.h.b16 %v3417
    %v4108 = vunpack.c.l.b16 %v3418
    %v4109 = vunpack.c.h.b16 %v3418
    %v4110 = vunpack.c.l.b16 %v3419
    %v4111 = vunpack.c.h.b16 %v3419
    %v4112 = vunpack.c.l.b16 %v3420
    %v4113 = vunpack.c.h.b16 %v3420
    %v4114 = vunpack.c.l.b16 %v3421
    %v4115 = vunpack.c.h.b16 %v3421
    %v4116 = vunpack.c.l.b16 %v3422
    %v4117 = vunpack.c.h.b16 %v3422
    %v4118 = vunpack.c.l.b16 %v3423
    %v4119 = vunpack.c.h.b16 %v3423
    %v4120 = vunpack.c.l.b16 %v3424
    %v4121 = vunpack.c.h.b16 %v3424
    %v4122 = vunpack.c.l.b16 %v3425
    %v4123 = vunpack.c.h.b16 %v3425
    %v4124 = vunpack.c.l.b16 %v3426
    %v4125 = vunpack.c.h.b16 %v3426
    %v4126 = vpack.c.b16 %v4002, %v3998
    %v4127 = vpack.c.b16 %v4003, %v3999
    %v4128 = vpack.c.b16 %v4004, %v4000
    %v4129 = vpack.c.b16 %v4005, %v4001
    %v4130 = vpack.c.b16 %v4010, %v4006
    %v4131 = vpack.c.b16 %v4011, %v4007
    %v4132 = vpack.c.b16 %v4012, %v4008
    %v4133 = vpack.c.b16 %v4013, %v4009
    %v4134 = vpack.c.b16 %v4018, %v4014
    %v4135 = vpack.c.b16 %v4019, %v4015
    %v4136 = vpack.c.b16 %v4020, %v4016
    %v4137 = vpack.c.b16 %v4021, %v4017
    %v4138 = vpack.c.b16 %v4026, %v4022
    %v4139 = vpack.c.b16 %v4027, %v4023
    %v4140 = vpack.c.b16 %v4028, %v4024
    %v4141 = vpack.c.b16 %v4029, %v4025
    %v4142 = vpack.c.b16 %v4034, %v4030
    %v4143 = vpack.c.b16 %v4035, %v4031
    %v4144 = vpack.c.b16 %v4036, %v4032
    %v4145 = vpack.c.b16 %v4037, %v4033
    %v4146 = vpack.c.b16 %v4042, %v4038
    %v4147 = vpack.c.b16 %v4043, %v4039
    %v4148 = vpack.c.b16 %v4044, %v4040
    %v4149 = vpack.c.b16 %v4045, %v4041
    %v4150 = vpack.c.b16 %v4050, %v4046
    %v4151 = vpack.c.b16 %v4051, %v4047
    %v4152 = vpack.c.b16 %v4052, %v4048
    %v4153 = vpack.c.b16 %v4053, %v4049
    %v4154 = vpack.c.b16 %v4058, %v4054
    %v4155 = vpack.c.b16 %v4059, %v4055
    %v4156 = vpack.c.b16 %v4060, %v4056
    %v4157 = vpack.c.b16 %v4061, %v4057
    %v4158 = vpack.c.b16 %v4066, %v4062
    %v4159 = vpack.c.b16 %v4067, %v4063
    %v4160 = vpack.c.b16 %v4068, %v4064
    %v4161 = vpack.c.b16 %v4069, %v4065
    %v4162 = vpack.c.b16 %v4074, %v4070
    %v4163 = vpack.c.b16 %v4075, %v4071
    %v4164 = vpack.c.b16 %v4076, %v4072
    %v4165 = vpack.c.b16 %v4077, %v4073
    %v4166 = vpack.c.b16 %v4082, %v4078
    %v4167 = vpack.c.b16 %v4083, %v4079
    %v4168 = vpack.c.b16 %v4084, %v4080
    %v4169 = vpack.c.b16 %v4085, %v4081
    %v4170 = vpack.c.b16 %v4090, %v4086
    %v4171 = vpack.c.b16 %v4091, %v4087
    %v4172 = vpack.c.b16 %v4092, %v4088
    %v4173 = vpack.c.b16 %v4093, %v4089
    %v4174 = vpack.c.b16 %v4098, %v4094
    %v4175 = vpack.c.b16 %v4099, %v4095
    %v4176 = vpack.c.b16 %v4100, %v4096
    %v4177 = vpack.c.b16 %v4101, %v4097
    %v4178 = vpack.c.b16 %v4106, %v4102
    %v4179 = vpack.c.b16 %v4107, %v4103
    %v4180 = vpack.c.b16 %v4108, %v4104
    %v4181 = vpack.c.b16 %v4109, %v4105
    %v4182 = vpack.c.b16 %v4114, %v4110
    %v4183 = vpack.c.b16 %v4115, %v4111
    %v4184 = vpack.c.b16 %v4116, %v4112
    %v4185 = vpack.c.b16 %v4117, %v4113
    %v4186 = vpack.c.b16 %v4122, %v4118
    %v4187 = vpack.c.b16 %v4123, %v4119
    %v4188 = vpack.c.b16 %v4124, %v4120
    %v4189 = vpack.c.b16 %v4125, %v4121
    %4254 = vmatprep.subr.bf16.mxu0 %v4127
    %4255 = vmatpush1.bf16.msra.mxu0 %v4126
    %4256 = vmatprep.subr.bf16.mxu0 %v4131
    %4257 = vmatpush1.bf16.msra.mxu0 %v4130
    %4258 = vmatprep.subr.bf16.mxu0 %v4135
    %4259 = vmatpush1.bf16.msra.mxu0 %v4134
    %4260 = vmatprep.subr.bf16.mxu0 %v4139
    %4261 = vmatpush1.bf16.msra.mxu0 %v4138
    %4262 = vmatprep.subr.bf16.mxu0 %v4143
    %4263 = vmatpush1.bf16.msra.mxu0 %v4142
    %4264 = vmatprep.subr.bf16.mxu0 %v4147
    %4265 = vmatpush1.bf16.msra.mxu0 %v4146
    %4266 = vmatprep.subr.bf16.mxu0 %v4151
    %4267 = vmatpush1.bf16.msra.mxu0 %v4150
    %4268 = vmatprep.subr.bf16.mxu0 %v4155
    %4269 = vmatpush1.bf16.msra.mxu0 %v4154
    %4270 = vmatprep.subr.bf16.mxu0 %v4159
    %4271 = vmatpush1.bf16.msra.mxu0 %v4158
    %4272 = vmatprep.subr.bf16.mxu0 %v4163
    %4273 = vmatpush1.bf16.msra.mxu0 %v4162
    %4274 = vmatprep.subr.bf16.mxu0 %v4167
    %4275 = vmatpush1.bf16.msra.mxu0 %v4166
    %4276 = vmatprep.subr.bf16.mxu0 %v4171
    %4277 = vmatpush1.bf16.msra.mxu0 %v4170
    %4278 = vmatprep.subr.bf16.mxu0 %v4175
    %4279 = vmatpush1.bf16.msra.mxu0 %v4174
    %4280 = vmatprep.subr.bf16.mxu0 %v4179
    %4281 = vmatpush1.bf16.msra.mxu0 %v4178
    %4282 = vmatprep.subr.bf16.mxu0 %v4183
    %4283 = vmatpush1.bf16.msra.mxu0 %v4182
    %4284 = vmatprep.subr.bf16.mxu0 %v4187
    %4285 = vmatpush1.bf16.msra.mxu0 %v4186
    %4286 = vmatprep.mubr.bf16.mxu0 %v3931
    %4287 = vmatmul.mubr.bf16.gmra.mrb[0].mxu0 %v3930
    %v4288 = vpop.f32.mrb[0].mxu0
    %v4289 = vadd.f32 %v3871, %v4288
    %v4290 = vpop.f32.mrb[0].mxu0
    %v4291 = vadd.f32 %v3873, %v4290
    %v4292 = vpop.f32.mrb[0].mxu0
    %v4293 = vpop.f32.mrb[0].mxu0
    %4294 = vdwg.mxu0
    %4295 = vmatprep.subr.bf16.mxu0 %v4129
    %4296 = vmatpush1.bf16.msra.mxu0 %v4128
    %4297 = vmatprep.subr.bf16.mxu0 %v4133
    %4298 = vmatpush1.bf16.msra.mxu0 %v4132
    %4299 = vmatprep.subr.bf16.mxu0 %v4137
    %4300 = vmatpush1.bf16.msra.mxu0 %v4136
    %4301 = vmatprep.subr.bf16.mxu0 %v4141
    %4302 = vmatpush1.bf16.msra.mxu0 %v4140
    %4303 = vmatprep.subr.bf16.mxu0 %v4145
    %4304 = vmatpush1.bf16.msra.mxu0 %v4144
    %4305 = vmatprep.subr.bf16.mxu0 %v4149
    %4306 = vmatpush1.bf16.msra.mxu0 %v4148
    %4307 = vmatprep.subr.bf16.mxu0 %v4153
    %4308 = vmatpush1.bf16.msra.mxu0 %v4152
    %4309 = vmatprep.subr.bf16.mxu0 %v4157
    %4310 = vmatpush1.bf16.msra.mxu0 %v4156
    %4311 = vmatprep.subr.bf16.mxu0 %v4161
    %4312 = vmatpush1.bf16.msra.mxu0 %v4160
    %4313 = vmatprep.subr.bf16.mxu0 %v4165
    %4314 = vmatpush1.bf16.msra.mxu0 %v4164
    %4315 = vmatprep.subr.bf16.mxu0 %v4169
    %4316 = vmatpush1.bf16.msra.mxu0 %v4168
    %4317 = vmatprep.subr.bf16.mxu0 %v4173
    %4318 = vmatpush1.bf16.msra.mxu0 %v4172
    %4319 = vmatprep.subr.bf16.mxu0 %v4177
    %4320 = vmatpush1.bf16.msra.mxu0 %v4176
    %4321 = vmatprep.subr.bf16.mxu0 %v4181
    %4322 = vmatpush1.bf16.msra.mxu0 %v4180
    %4323 = vmatprep.subr.bf16.mxu0 %v4185
    %4324 = vmatpush1.bf16.msra.mxu0 %v4184
    %4325 = vmatprep.subr.bf16.mxu0 %v4189
    %4326 = vmatpush1.bf16.msra.mxu0 %v4188
    %4327 = vmatprep.mubr.bf16.mxu0 %v3931
    %4328 = vmatmul.mubr.bf16.gmra.mrb[0].mxu0 %v3930
    %v4329 = vpop.f32.mrb[0].mxu0
    %v4330 = vadd.f32 %v3912, %v4329
    %v4331 = vpop.f32.mrb[0].mxu0
    %v4332 = vadd.f32 %v3914, %v4331
    %v4333 = vpop.f32.mrb[0].mxu0
    %v4334 = vpop.f32.mrb[0].mxu0
    %4335 = vdwg.mxu0
    %s4336 = scalar_lea.vmem %s7, 1024
    %v4337 = vld [vmem:[%s4336] sm:$0xff]
    %v4338 = vld [vmem:[%s4336 + $0x8] sm:$0xff]
    %v4339 = vld [vmem:[%s4336 + $0x10] sm:$0xff]
    %v4340 = vld [vmem:[%s4336 + $0x18] sm:$0xff]
    %v4341 = vld [vmem:[%s4336 + $0x20] sm:$0xff]
    %v4342 = vld [vmem:[%s4336 + $0x28] sm:$0xff]
    %v4343 = vld [vmem:[%s4336 + $0x30] sm:$0xff]
    %v4344 = vld [vmem:[%s4336 + $0x38] sm:$0xff]
    %v4345 = vld [vmem:[%s4336 + $0x40] sm:$0xff]
    %v4346 = vld [vmem:[%s4336 + $0x48] sm:$0xff]
    %v4347 = vld [vmem:[%s4336 + $0x50] sm:$0xff]
    %v4348 = vld [vmem:[%s4336 + $0x58] sm:$0xff]
    %v4349 = vld [vmem:[%s4336 + $0x60] sm:$0xff]
    %v4350 = vld [vmem:[%s4336 + $0x68] sm:$0xff]
    %v4351 = vld [vmem:[%s4336 + $0x70] sm:$0xff]
    %v4352 = vld [vmem:[%s4336 + $0x78] sm:$0xff]
    %v4353 = vld [vmem:[%s4336 + $0x80] sm:$0xff]
    %v4354 = vld [vmem:[%s4336 + $0x88] sm:$0xff]
    %v4355 = vld [vmem:[%s4336 + $0x90] sm:$0xff]
    %v4356 = vld [vmem:[%s4336 + $0x98] sm:$0xff]
    %v4357 = vld [vmem:[%s4336 + $0xa0] sm:$0xff]
    %v4358 = vld [vmem:[%s4336 + $0xa8] sm:$0xff]
    %v4359 = vld [vmem:[%s4336 + $0xb0] sm:$0xff]
    %v4360 = vld [vmem:[%s4336 + $0xb8] sm:$0xff]
    %v4361 = vld [vmem:[%s4336 + $0xc0] sm:$0xff]
    %v4362 = vld [vmem:[%s4336 + $0xc8] sm:$0xff]
    %v4363 = vld [vmem:[%s4336 + $0xd0] sm:$0xff]
    %v4364 = vld [vmem:[%s4336 + $0xd8] sm:$0xff]
    %v4365 = vld [vmem:[%s4336 + $0xe0] sm:$0xff]
    %v4366 = vld [vmem:[%s4336 + $0xe8] sm:$0xff]
    %v4367 = vld [vmem:[%s4336 + $0xf0] sm:$0xff]
    %v4368 = vld [vmem:[%s4336 + $0xf8] sm:$0xff]
    %v4369 = vld [vmem:[%s4336 + $0x100] sm:$0xff]
    %v4370 = vld [vmem:[%s4336 + $0x108] sm:$0xff]
    %v4371 = vld [vmem:[%s4336 + $0x110] sm:$0xff]
    %v4372 = vld [vmem:[%s4336 + $0x118] sm:$0xff]
    %v4373 = vld [vmem:[%s4336 + $0x120] sm:$0xff]
    %v4374 = vld [vmem:[%s4336 + $0x128] sm:$0xff]
    %v4375 = vld [vmem:[%s4336 + $0x130] sm:$0xff]
    %v4376 = vld [vmem:[%s4336 + $0x138] sm:$0xff]
    %v4377 = vld [vmem:[%s4336 + $0x140] sm:$0xff]
    %v4378 = vld [vmem:[%s4336 + $0x148] sm:$0xff]
    %v4379 = vld [vmem:[%s4336 + $0x150] sm:$0xff]
    %v4380 = vld [vmem:[%s4336 + $0x158] sm:$0xff]
    %v4381 = vld [vmem:[%s4336 + $0x160] sm:$0xff]
    %v4382 = vld [vmem:[%s4336 + $0x168] sm:$0xff]
    %v4383 = vld [vmem:[%s4336 + $0x170] sm:$0xff]
    %v4384 = vld [vmem:[%s4336 + $0x178] sm:$0xff]
    %v4385 = vld [vmem:[%s4336 + $0x180] sm:$0xff]
    %v4386 = vld [vmem:[%s4336 + $0x188] sm:$0xff]
    %v4387 = vld [vmem:[%s4336 + $0x190] sm:$0xff]
    %v4388 = vld [vmem:[%s4336 + $0x198] sm:$0xff]
    %v4389 = vld [vmem:[%s4336 + $0x1a0] sm:$0xff]
    %v4390 = vld [vmem:[%s4336 + $0x1a8] sm:$0xff]
    %v4391 = vld [vmem:[%s4336 + $0x1b0] sm:$0xff]
    %v4392 = vld [vmem:[%s4336 + $0x1b8] sm:$0xff]
    %v4393 = vld [vmem:[%s4336 + $0x1c0] sm:$0xff]
    %v4394 = vld [vmem:[%s4336 + $0x1c8] sm:$0xff]
    %v4395 = vld [vmem:[%s4336 + $0x1d0] sm:$0xff]
    %v4396 = vld [vmem:[%s4336 + $0x1d8] sm:$0xff]
    %v4397 = vld [vmem:[%s4336 + $0x1e0] sm:$0xff]
    %v4398 = vld [vmem:[%s4336 + $0x1e8] sm:$0xff]
    %v4399 = vld [vmem:[%s4336 + $0x1f0] sm:$0xff]
    %v4400 = vld [vmem:[%s4336 + $0x1f8] sm:$0xff]
    %v4401 = vpack.c.bf16 %v3355, %v3355
    %v4402 = vpack.c.bf16 %v3356, %v3356
    %v4403 = vpack.c.bf16 %v3361, %v3361
    %v4404 = vpack.c.bf16 %v3362, %v3362
    %v4409 = vunpack.c.l.b16 %v4401
    %v4410 = vunpack.c.l.b16 %v4402
    %v4411 = vunpack.c.l.b16 %v4403
    %v4412 = vunpack.c.l.b16 %v4404
    %v4413 = vrot.slane %v4411, 7
    %v4414 = vsel %vm1944, %v4413, %v4409
    %v4415 = vrot.slane %v4412, 7
    %v4416 = vsel %vm1944, %v4415, %v4410
    %v4417 = vpack.c.b16 %v4414, %v4414
    %v4418 = vpack.c.b16 %v4416, %v4416
    %v4485 = vunpack.c.l.b16 %v4337
    %v4486 = vunpack.c.h.b16 %v4337
    %v4487 = vunpack.c.l.b16 %v4338
    %v4488 = vunpack.c.h.b16 %v4338
    %v4489 = vunpack.c.l.b16 %v4339
    %v4490 = vunpack.c.h.b16 %v4339
    %v4491 = vunpack.c.l.b16 %v4340
    %v4492 = vunpack.c.h.b16 %v4340
    %v4493 = vunpack.c.l.b16 %v4341
    %v4494 = vunpack.c.h.b16 %v4341
    %v4495 = vunpack.c.l.b16 %v4342
    %v4496 = vunpack.c.h.b16 %v4342
    %v4497 = vunpack.c.l.b16 %v4343
    %v4498 = vunpack.c.h.b16 %v4343
    %v4499 = vunpack.c.l.b16 %v4344
    %v4500 = vunpack.c.h.b16 %v4344
    %v4501 = vunpack.c.l.b16 %v4345
    %v4502 = vunpack.c.h.b16 %v4345
    %v4503 = vunpack.c.l.b16 %v4346
    %v4504 = vunpack.c.h.b16 %v4346
    %v4505 = vunpack.c.l.b16 %v4347
    %v4506 = vunpack.c.h.b16 %v4347
    %v4507 = vunpack.c.l.b16 %v4348
    %v4508 = vunpack.c.h.b16 %v4348
    %v4509 = vunpack.c.l.b16 %v4349
    %v4510 = vunpack.c.h.b16 %v4349
    %v4511 = vunpack.c.l.b16 %v4350
    %v4512 = vunpack.c.h.b16 %v4350
    %v4513 = vunpack.c.l.b16 %v4351
    %v4514 = vunpack.c.h.b16 %v4351
    %v4515 = vunpack.c.l.b16 %v4352
    %v4516 = vunpack.c.h.b16 %v4352
    %v4517 = vunpack.c.l.b16 %v4353
    %v4518 = vunpack.c.h.b16 %v4353
    %v4519 = vunpack.c.l.b16 %v4354
    %v4520 = vunpack.c.h.b16 %v4354
    %v4521 = vunpack.c.l.b16 %v4355
    %v4522 = vunpack.c.h.b16 %v4355
    %v4523 = vunpack.c.l.b16 %v4356
    %v4524 = vunpack.c.h.b16 %v4356
    %v4525 = vunpack.c.l.b16 %v4357
    %v4526 = vunpack.c.h.b16 %v4357
    %v4527 = vunpack.c.l.b16 %v4358
    %v4528 = vunpack.c.h.b16 %v4358
    %v4529 = vunpack.c.l.b16 %v4359
    %v4530 = vunpack.c.h.b16 %v4359
    %v4531 = vunpack.c.l.b16 %v4360
    %v4532 = vunpack.c.h.b16 %v4360
    %v4533 = vunpack.c.l.b16 %v4361
    %v4534 = vunpack.c.h.b16 %v4361
    %v4535 = vunpack.c.l.b16 %v4362
    %v4536 = vunpack.c.h.b16 %v4362
    %v4537 = vunpack.c.l.b16 %v4363
    %v4538 = vunpack.c.h.b16 %v4363
    %v4539 = vunpack.c.l.b16 %v4364
    %v4540 = vunpack.c.h.b16 %v4364
    %v4541 = vunpack.c.l.b16 %v4365
    %v4542 = vunpack.c.h.b16 %v4365
    %v4543 = vunpack.c.l.b16 %v4366
    %v4544 = vunpack.c.h.b16 %v4366
    %v4545 = vunpack.c.l.b16 %v4367
    %v4546 = vunpack.c.h.b16 %v4367
    %v4547 = vunpack.c.l.b16 %v4368
    %v4548 = vunpack.c.h.b16 %v4368
    %v4549 = vunpack.c.l.b16 %v4369
    %v4550 = vunpack.c.h.b16 %v4369
    %v4551 = vunpack.c.l.b16 %v4370
    %v4552 = vunpack.c.h.b16 %v4370
    %v4553 = vunpack.c.l.b16 %v4371
    %v4554 = vunpack.c.h.b16 %v4371
    %v4555 = vunpack.c.l.b16 %v4372
    %v4556 = vunpack.c.h.b16 %v4372
    %v4557 = vunpack.c.l.b16 %v4373
    %v4558 = vunpack.c.h.b16 %v4373
    %v4559 = vunpack.c.l.b16 %v4374
    %v4560 = vunpack.c.h.b16 %v4374
    %v4561 = vunpack.c.l.b16 %v4375
    %v4562 = vunpack.c.h.b16 %v4375
    %v4563 = vunpack.c.l.b16 %v4376
    %v4564 = vunpack.c.h.b16 %v4376
    %v4565 = vunpack.c.l.b16 %v4377
    %v4566 = vunpack.c.h.b16 %v4377
    %v4567 = vunpack.c.l.b16 %v4378
    %v4568 = vunpack.c.h.b16 %v4378
    %v4569 = vunpack.c.l.b16 %v4379
    %v4570 = vunpack.c.h.b16 %v4379
    %v4571 = vunpack.c.l.b16 %v4380
    %v4572 = vunpack.c.h.b16 %v4380
    %v4573 = vunpack.c.l.b16 %v4381
    %v4574 = vunpack.c.h.b16 %v4381
    %v4575 = vunpack.c.l.b16 %v4382
    %v4576 = vunpack.c.h.b16 %v4382
    %v4577 = vunpack.c.l.b16 %v4383
    %v4578 = vunpack.c.h.b16 %v4383
    %v4579 = vunpack.c.l.b16 %v4384
    %v4580 = vunpack.c.h.b16 %v4384
    %v4581 = vunpack.c.l.b16 %v4385
    %v4582 = vunpack.c.h.b16 %v4385
    %v4583 = vunpack.c.l.b16 %v4386
    %v4584 = vunpack.c.h.b16 %v4386
    %v4585 = vunpack.c.l.b16 %v4387
    %v4586 = vunpack.c.h.b16 %v4387
    %v4587 = vunpack.c.l.b16 %v4388
    %v4588 = vunpack.c.h.b16 %v4388
    %v4589 = vunpack.c.l.b16 %v4389
    %v4590 = vunpack.c.h.b16 %v4389
    %v4591 = vunpack.c.l.b16 %v4390
    %v4592 = vunpack.c.h.b16 %v4390
    %v4593 = vunpack.c.l.b16 %v4391
    %v4594 = vunpack.c.h.b16 %v4391
    %v4595 = vunpack.c.l.b16 %v4392
    %v4596 = vunpack.c.h.b16 %v4392
    %v4597 = vunpack.c.l.b16 %v4393
    %v4598 = vunpack.c.h.b16 %v4393
    %v4599 = vunpack.c.l.b16 %v4394
    %v4600 = vunpack.c.h.b16 %v4394
    %v4601 = vunpack.c.l.b16 %v4395
    %v4602 = vunpack.c.h.b16 %v4395
    %v4603 = vunpack.c.l.b16 %v4396
    %v4604 = vunpack.c.h.b16 %v4396
    %v4605 = vunpack.c.l.b16 %v4397
    %v4606 = vunpack.c.h.b16 %v4397
    %v4607 = vunpack.c.l.b16 %v4398
    %v4608 = vunpack.c.h.b16 %v4398
    %v4609 = vunpack.c.l.b16 %v4399
    %v4610 = vunpack.c.h.b16 %v4399
    %v4611 = vunpack.c.l.b16 %v4400
    %v4612 = vunpack.c.h.b16 %v4400
    %v4613 = vpack.c.b16 %v4489, %v4485
    %v4614 = vpack.c.b16 %v4490, %v4486
    %v4615 = vpack.c.b16 %v4491, %v4487
    %v4616 = vpack.c.b16 %v4492, %v4488
    %v4617 = vpack.c.b16 %v4497, %v4493
    %v4618 = vpack.c.b16 %v4498, %v4494
    %v4619 = vpack.c.b16 %v4499, %v4495
    %v4620 = vpack.c.b16 %v4500, %v4496
    %v4621 = vpack.c.b16 %v4505, %v4501
    %v4622 = vpack.c.b16 %v4506, %v4502
    %v4623 = vpack.c.b16 %v4507, %v4503
    %v4624 = vpack.c.b16 %v4508, %v4504
    %v4625 = vpack.c.b16 %v4513, %v4509
    %v4626 = vpack.c.b16 %v4514, %v4510
    %v4627 = vpack.c.b16 %v4515, %v4511
    %v4628 = vpack.c.b16 %v4516, %v4512
    %v4629 = vpack.c.b16 %v4521, %v4517
    %v4630 = vpack.c.b16 %v4522, %v4518
    %v4631 = vpack.c.b16 %v4523, %v4519
    %v4632 = vpack.c.b16 %v4524, %v4520
    %v4633 = vpack.c.b16 %v4529, %v4525
    %v4634 = vpack.c.b16 %v4530, %v4526
    %v4635 = vpack.c.b16 %v4531, %v4527
    %v4636 = vpack.c.b16 %v4532, %v4528
    %v4637 = vpack.c.b16 %v4537, %v4533
    %v4638 = vpack.c.b16 %v4538, %v4534
    %v4639 = vpack.c.b16 %v4539, %v4535
    %v4640 = vpack.c.b16 %v4540, %v4536
    %v4641 = vpack.c.b16 %v4545, %v4541
    %v4642 = vpack.c.b16 %v4546, %v4542
    %v4643 = vpack.c.b16 %v4547, %v4543
    %v4644 = vpack.c.b16 %v4548, %v4544
    %v4645 = vpack.c.b16 %v4553, %v4549
    %v4646 = vpack.c.b16 %v4554, %v4550
    %v4647 = vpack.c.b16 %v4555, %v4551
    %v4648 = vpack.c.b16 %v4556, %v4552
    %v4649 = vpack.c.b16 %v4561, %v4557
    %v4650 = vpack.c.b16 %v4562, %v4558
    %v4651 = vpack.c.b16 %v4563, %v4559
    %v4652 = vpack.c.b16 %v4564, %v4560
    %v4653 = vpack.c.b16 %v4569, %v4565
    %v4654 = vpack.c.b16 %v4570, %v4566
    %v4655 = vpack.c.b16 %v4571, %v4567
    %v4656 = vpack.c.b16 %v4572, %v4568
    %v4657 = vpack.c.b16 %v4577, %v4573
    %v4658 = vpack.c.b16 %v4578, %v4574
    %v4659 = vpack.c.b16 %v4579, %v4575
    %v4660 = vpack.c.b16 %v4580, %v4576
    %v4661 = vpack.c.b16 %v4585, %v4581
    %v4662 = vpack.c.b16 %v4586, %v4582
    %v4663 = vpack.c.b16 %v4587, %v4583
    %v4664 = vpack.c.b16 %v4588, %v4584
    %v4665 = vpack.c.b16 %v4593, %v4589
    %v4666 = vpack.c.b16 %v4594, %v4590
    %v4667 = vpack.c.b16 %v4595, %v4591
    %v4668 = vpack.c.b16 %v4596, %v4592
    %v4669 = vpack.c.b16 %v4601, %v4597
    %v4670 = vpack.c.b16 %v4602, %v4598
    %v4671 = vpack.c.b16 %v4603, %v4599
    %v4672 = vpack.c.b16 %v4604, %v4600
    %v4673 = vpack.c.b16 %v4609, %v4605
    %v4674 = vpack.c.b16 %v4610, %v4606
    %v4675 = vpack.c.b16 %v4611, %v4607
    %v4676 = vpack.c.b16 %v4612, %v4608
    %4741 = vmatprep.subr.bf16.mxu0 %v4614
    %4742 = vmatpush1.bf16.msra.mxu0 %v4613
    %4743 = vmatprep.subr.bf16.mxu0 %v4618
    %4744 = vmatpush1.bf16.msra.mxu0 %v4617
    %4745 = vmatprep.subr.bf16.mxu0 %v4622
    %4746 = vmatpush1.bf16.msra.mxu0 %v4621
    %4747 = vmatprep.subr.bf16.mxu0 %v4626
    %4748 = vmatpush1.bf16.msra.mxu0 %v4625
    %4749 = vmatprep.subr.bf16.mxu0 %v4630
    %4750 = vmatpush1.bf16.msra.mxu0 %v4629
    %4751 = vmatprep.subr.bf16.mxu0 %v4634
    %4752 = vmatpush1.bf16.msra.mxu0 %v4633
    %4753 = vmatprep.subr.bf16.mxu0 %v4638
    %4754 = vmatpush1.bf16.msra.mxu0 %v4637
    %4755 = vmatprep.subr.bf16.mxu0 %v4642
    %4756 = vmatpush1.bf16.msra.mxu0 %v4641
    %4757 = vmatprep.subr.bf16.mxu0 %v4646
    %4758 = vmatpush1.bf16.msra.mxu0 %v4645
    %4759 = vmatprep.subr.bf16.mxu0 %v4650
    %4760 = vmatpush1.bf16.msra.mxu0 %v4649
    %4761 = vmatprep.subr.bf16.mxu0 %v4654
    %4762 = vmatpush1.bf16.msra.mxu0 %v4653
    %4763 = vmatprep.subr.bf16.mxu0 %v4658
    %4764 = vmatpush1.bf16.msra.mxu0 %v4657
    %4765 = vmatprep.subr.bf16.mxu0 %v4662
    %4766 = vmatpush1.bf16.msra.mxu0 %v4661
    %4767 = vmatprep.subr.bf16.mxu0 %v4666
    %4768 = vmatpush1.bf16.msra.mxu0 %v4665
    %4769 = vmatprep.subr.bf16.mxu0 %v4670
    %4770 = vmatpush1.bf16.msra.mxu0 %v4669
    %4771 = vmatprep.subr.bf16.mxu0 %v4674
    %4772 = vmatpush1.bf16.msra.mxu0 %v4673
    %4773 = vmatprep.mubr.bf16.mxu0 %v4418
    %4774 = vmatmul.mubr.bf16.gmra.mrb[0].mxu0 %v4417
    %v4775 = vpop.f32.mrb[0].mxu0
    %v4776 = vadd.f32 0.0, %v4775
    %v4777 = vpop.f32.mrb[0].mxu0
    %v4778 = vadd.f32 0.0, %v4777
    %v4779 = vpop.f32.mrb[0].mxu0
    %v4780 = vpop.f32.mrb[0].mxu0
    %4781 = vdwg.mxu0
    %4782 = vmatprep.subr.bf16.mxu0 %v4616
    %4783 = vmatpush1.bf16.msra.mxu0 %v4615
    %4784 = vmatprep.subr.bf16.mxu0 %v4620
    %4785 = vmatpush1.bf16.msra.mxu0 %v4619
    %4786 = vmatprep.subr.bf16.mxu0 %v4624
    %4787 = vmatpush1.bf16.msra.mxu0 %v4623
    %4788 = vmatprep.subr.bf16.mxu0 %v4628
    %4789 = vmatpush1.bf16.msra.mxu0 %v4627
    %4790 = vmatprep.subr.bf16.mxu0 %v4632
    %4791 = vmatpush1.bf16.msra.mxu0 %v4631
    %4792 = vmatprep.subr.bf16.mxu0 %v4636
    %4793 = vmatpush1.bf16.msra.mxu0 %v4635
    %4794 = vmatprep.subr.bf16.mxu0 %v4640
    %4795 = vmatpush1.bf16.msra.mxu0 %v4639
    %4796 = vmatprep.subr.bf16.mxu0 %v4644
    %4797 = vmatpush1.bf16.msra.mxu0 %v4643
    %4798 = vmatprep.subr.bf16.mxu0 %v4648
    %4799 = vmatpush1.bf16.msra.mxu0 %v4647
    %4800 = vmatprep.subr.bf16.mxu0 %v4652
    %4801 = vmatpush1.bf16.msra.mxu0 %v4651
    %4802 = vmatprep.subr.bf16.mxu0 %v4656
    %4803 = vmatpush1.bf16.msra.mxu0 %v4655
    %4804 = vmatprep.subr.bf16.mxu0 %v4660
    %4805 = vmatpush1.bf16.msra.mxu0 %v4659
    %4806 = vmatprep.subr.bf16.mxu0 %v4664
    %4807 = vmatpush1.bf16.msra.mxu0 %v4663
    %4808 = vmatprep.subr.bf16.mxu0 %v4668
    %4809 = vmatpush1.bf16.msra.mxu0 %v4667
    %4810 = vmatprep.subr.bf16.mxu0 %v4672
    %4811 = vmatpush1.bf16.msra.mxu0 %v4671
    %4812 = vmatprep.subr.bf16.mxu0 %v4676
    %4813 = vmatpush1.bf16.msra.mxu0 %v4675
    %4814 = vmatprep.mubr.bf16.mxu0 %v4418
    %4815 = vmatmul.mubr.bf16.gmra.mrb[0].mxu0 %v4417
    %v4816 = vpop.f32.mrb[0].mxu0
    %v4817 = vadd.f32 0.0, %v4816
    %v4818 = vpop.f32.mrb[0].mxu0
    %v4819 = vadd.f32 0.0, %v4818
    %v4820 = vpop.f32.mrb[0].mxu0
    %v4821 = vpop.f32.mrb[0].mxu0
    %4822 = vdwg.mxu0
    %v4823 = vadd.f32 %v4289, %v4776
    %v4824 = vadd.f32 %v4291, %v4778
    %v4825 = vadd.f32 %v4330, %v4817
    %v4826 = vadd.f32 %v4332, %v4819
    %v4827 = vld [vmem:[%s8] sm:$0xf]
    %v4829 = vlaneseq
    %v4830 = vshrl.u32 %v4829, 7
    %v4831 = vsub.s32 0, %v4830
    %v4832 = vrot.slane %v4827, %v4831
    %v4833 = vlaneseq
    %v4834 = vshrl.u32 %v4833, 7
    %v4835 = vsub.s32 1, %v4834
    %v4836 = vrot.slane %v4827, %v4835
    %v4837 = vlaneseq
    %v4838 = vshrl.u32 %v4837, 7
    %v4839 = vsub.s32 2, %v4838
    %v4840 = vrot.slane %v4827, %v4839
    %v4841 = vlaneseq
    %v4842 = vshrl.u32 %v4841, 7
    %v4843 = vsub.s32 3, %v4842
    %v4844 = vrot.slane %v4827, %v4843
    %v4849 = vadd.f32 %v4823, %v4832
    %v4850 = vadd.f32 %v4824, %v4836
    %v4851 = vadd.f32 %v4825, %v4840
    %v4852 = vadd.f32 %v4826, %v4844
    %v4853 = vmax.f32 %v4849, 0.0
    %v4854 = vmax.f32 %v4850, 0.0
    %v4855 = vmax.f32 %v4851, 0.0
    %v4856 = vmax.f32 %v4852, 0.0
    %v4857 = vld [vmem:[%s9] sm:$0xf]
    %v4858 = vld [vmem:[%s9 + $0x4] sm:$0xf]
    %v4859 = vld [vmem:[%s9 + $0x8] sm:$0xf]
    %v4860 = vld [vmem:[%s9 + $0xc] sm:$0xf]
    %v4861 = vld [vmem:[%s9 + $0x10] sm:$0xf]
    %v4862 = vld [vmem:[%s9 + $0x14] sm:$0xf]
    %v4863 = vld [vmem:[%s9 + $0x18] sm:$0xf]
    %v4864 = vld [vmem:[%s9 + $0x1c] sm:$0xf]
    %v4865 = vld [vmem:[%s9 + $0x20] sm:$0xf]
    %v4866 = vld [vmem:[%s9 + $0x24] sm:$0xf]
    %v4867 = vld [vmem:[%s9 + $0x28] sm:$0xf]
    %v4868 = vld [vmem:[%s9 + $0x2c] sm:$0xf]
    %v4869 = vld [vmem:[%s9 + $0x30] sm:$0xf]
    %v4870 = vld [vmem:[%s9 + $0x34] sm:$0xf]
    %v4871 = vld [vmem:[%s9 + $0x38] sm:$0xf]
    %v4872 = vld [vmem:[%s9 + $0x3c] sm:$0xf]
    %v4873 = vld [vmem:[%s9 + $0x40] sm:$0xf]
    %v4874 = vld [vmem:[%s9 + $0x44] sm:$0xf]
    %v4875 = vld [vmem:[%s9 + $0x48] sm:$0xf]
    %v4876 = vld [vmem:[%s9 + $0x4c] sm:$0xf]
    %v4877 = vld [vmem:[%s9 + $0x50] sm:$0xf]
    %v4878 = vld [vmem:[%s9 + $0x54] sm:$0xf]
    %v4879 = vld [vmem:[%s9 + $0x58] sm:$0xf]
    %v4880 = vld [vmem:[%s9 + $0x5c] sm:$0xf]
    %v4881 = vld [vmem:[%s9 + $0x60] sm:$0xf]
    %v4882 = vld [vmem:[%s9 + $0x64] sm:$0xf]
    %v4883 = vld [vmem:[%s9 + $0x68] sm:$0xf]
    %v4884 = vld [vmem:[%s9 + $0x6c] sm:$0xf]
    %v4885 = vld [vmem:[%s9 + $0x70] sm:$0xf]
    %v4886 = vld [vmem:[%s9 + $0x74] sm:$0xf]
    %v4887 = vld [vmem:[%s9 + $0x78] sm:$0xf]
    %v4888 = vld [vmem:[%s9 + $0x7c] sm:$0xf]
    %v4889 = vld [vmem:[%s9 + $0x80] sm:$0xf]
    %v4890 = vld [vmem:[%s9 + $0x84] sm:$0xf]
    %v4891 = vld [vmem:[%s9 + $0x88] sm:$0xf]
    %v4892 = vld [vmem:[%s9 + $0x8c] sm:$0xf]
    %v4893 = vld [vmem:[%s9 + $0x90] sm:$0xf]
    %v4894 = vld [vmem:[%s9 + $0x94] sm:$0xf]
    %v4895 = vld [vmem:[%s9 + $0x98] sm:$0xf]
    %v4896 = vld [vmem:[%s9 + $0x9c] sm:$0xf]
    %v4897 = vld [vmem:[%s9 + $0xa0] sm:$0xf]
    %v4898 = vld [vmem:[%s9 + $0xa4] sm:$0xf]
    %v4899 = vld [vmem:[%s9 + $0xa8] sm:$0xf]
    %v4900 = vld [vmem:[%s9 + $0xac] sm:$0xf]
    %v4901 = vld [vmem:[%s9 + $0xb0] sm:$0xf]
    %v4902 = vld [vmem:[%s9 + $0xb4] sm:$0xf]
    %v4903 = vld [vmem:[%s9 + $0xb8] sm:$0xf]
    %v4904 = vld [vmem:[%s9 + $0xbc] sm:$0xf]
    %v4905 = vld [vmem:[%s9 + $0xc0] sm:$0xf]
    %v4906 = vld [vmem:[%s9 + $0xc4] sm:$0xf]
    %v4907 = vld [vmem:[%s9 + $0xc8] sm:$0xf]
    %v4908 = vld [vmem:[%s9 + $0xcc] sm:$0xf]
    %v4909 = vld [vmem:[%s9 + $0xd0] sm:$0xf]
    %v4910 = vld [vmem:[%s9 + $0xd4] sm:$0xf]
    %v4911 = vld [vmem:[%s9 + $0xd8] sm:$0xf]
    %v4912 = vld [vmem:[%s9 + $0xdc] sm:$0xf]
    %v4913 = vld [vmem:[%s9 + $0xe0] sm:$0xf]
    %v4914 = vld [vmem:[%s9 + $0xe4] sm:$0xf]
    %v4915 = vld [vmem:[%s9 + $0xe8] sm:$0xf]
    %v4916 = vld [vmem:[%s9 + $0xec] sm:$0xf]
    %v4917 = vld [vmem:[%s9 + $0xf0] sm:$0xf]
    %v4918 = vld [vmem:[%s9 + $0xf4] sm:$0xf]
    %v4919 = vld [vmem:[%s9 + $0xf8] sm:$0xf]
    %v4920 = vld [vmem:[%s9 + $0xfc] sm:$0xf]
    %v4921 = vpack.c.bf16 %v4853, %v4853
    %v4922 = vpack.c.bf16 %v4854, %v4854
    %v4923 = vpack.c.bf16 %v4855, %v4855
    %v4924 = vpack.c.bf16 %v4856, %v4856
    %v4925 = vld [vmem:[%s10] sm:$0x1]
    %v4927 = vlaneseq
    %v4928 = vshrl.u32 %v4927, 7
    %v4929 = vsub.s32 0, %v4928
    %v4930 = vrot.slane %v4925, %v4929
    %v4996 = vunpack.c.l.b16 %v4857
    %v4997 = vunpack.c.l.b16 %v4858
    %v4998 = vunpack.c.l.b16 %v4859
    %v4999 = vunpack.c.l.b16 %v4860
    %v5000 = vunpack.c.l.b16 %v4861
    %v5001 = vunpack.c.l.b16 %v4862
    %v5002 = vunpack.c.l.b16 %v4863
    %v5003 = vunpack.c.l.b16 %v4864
    %v5004 = vunpack.c.l.b16 %v4865
    %v5005 = vunpack.c.l.b16 %v4866
    %v5006 = vunpack.c.l.b16 %v4867
    %v5007 = vunpack.c.l.b16 %v4868
    %v5008 = vunpack.c.l.b16 %v4869
    %v5009 = vunpack.c.l.b16 %v4870
    %v5010 = vunpack.c.l.b16 %v4871
    %v5011 = vunpack.c.l.b16 %v4872
    %v5012 = vunpack.c.l.b16 %v4873
    %v5013 = vunpack.c.l.b16 %v4874
    %v5014 = vunpack.c.l.b16 %v4875
    %v5015 = vunpack.c.l.b16 %v4876
    %v5016 = vunpack.c.l.b16 %v4877
    %v5017 = vunpack.c.l.b16 %v4878
    %v5018 = vunpack.c.l.b16 %v4879
    %v5019 = vunpack.c.l.b16 %v4880
    %v5020 = vunpack.c.l.b16 %v4881
    %v5021 = vunpack.c.l.b16 %v4882
    %v5022 = vunpack.c.l.b16 %v4883
    %v5023 = vunpack.c.l.b16 %v4884
    %v5024 = vunpack.c.l.b16 %v4885
    %v5025 = vunpack.c.l.b16 %v4886
    %v5026 = vunpack.c.l.b16 %v4887
    %v5027 = vunpack.c.l.b16 %v4888
    %v5028 = vunpack.c.l.b16 %v4889
    %v5029 = vunpack.c.l.b16 %v4890
    %v5030 = vunpack.c.l.b16 %v4891
    %v5031 = vunpack.c.l.b16 %v4892
    %v5032 = vunpack.c.l.b16 %v4893
    %v5033 = vunpack.c.l.b16 %v4894
    %v5034 = vunpack.c.l.b16 %v4895
    %v5035 = vunpack.c.l.b16 %v4896
    %v5036 = vunpack.c.l.b16 %v4897
    %v5037 = vunpack.c.l.b16 %v4898
    %v5038 = vunpack.c.l.b16 %v4899
    %v5039 = vunpack.c.l.b16 %v4900
    %v5040 = vunpack.c.l.b16 %v4901
    %v5041 = vunpack.c.l.b16 %v4902
    %v5042 = vunpack.c.l.b16 %v4903
    %v5043 = vunpack.c.l.b16 %v4904
    %v5044 = vunpack.c.l.b16 %v4905
    %v5045 = vunpack.c.l.b16 %v4906
    %v5046 = vunpack.c.l.b16 %v4907
    %v5047 = vunpack.c.l.b16 %v4908
    %v5048 = vunpack.c.l.b16 %v4909
    %v5049 = vunpack.c.l.b16 %v4910
    %v5050 = vunpack.c.l.b16 %v4911
    %v5051 = vunpack.c.l.b16 %v4912
    %v5052 = vunpack.c.l.b16 %v4913
    %v5053 = vunpack.c.l.b16 %v4914
    %v5054 = vunpack.c.l.b16 %v4915
    %v5055 = vunpack.c.l.b16 %v4916
    %v5056 = vunpack.c.l.b16 %v4917
    %v5057 = vunpack.c.l.b16 %v4918
    %v5058 = vunpack.c.l.b16 %v4919
    %v5059 = vunpack.c.l.b16 %v4920
    %v5060 = vpack.c.b16 %v4997, %v4996
    %v5061 = vpack.c.b16 %v4999, %v4998
    %v5062 = vpack.c.b16 %v5001, %v5000
    %v5063 = vpack.c.b16 %v5003, %v5002
    %v5064 = vpack.c.b16 %v5005, %v5004
    %v5065 = vpack.c.b16 %v5007, %v5006
    %v5066 = vpack.c.b16 %v5009, %v5008
    %v5067 = vpack.c.b16 %v5011, %v5010
    %v5068 = vpack.c.b16 %v5013, %v5012
    %v5069 = vpack.c.b16 %v5015, %v5014
    %v5070 = vpack.c.b16 %v5017, %v5016
    %v5071 = vpack.c.b16 %v5019, %v5018
    %v5072 = vpack.c.b16 %v5021, %v5020
    %v5073 = vpack.c.b16 %v5023, %v5022
    %v5074 = vpack.c.b16 %v5025, %v5024
    %v5075 = vpack.c.b16 %v5027, %v5026
    %v5076 = vpack.c.b16 %v5029, %v5028
    %v5077 = vpack.c.b16 %v5031, %v5030
    %v5078 = vpack.c.b16 %v5033, %v5032
    %v5079 = vpack.c.b16 %v5035, %v5034
    %v5080 = vpack.c.b16 %v5037, %v5036
    %v5081 = vpack.c.b16 %v5039, %v5038
    %v5082 = vpack.c.b16 %v5041, %v5040
    %v5083 = vpack.c.b16 %v5043, %v5042
    %v5084 = vpack.c.b16 %v5045, %v5044
    %v5085 = vpack.c.b16 %v5047, %v5046
    %v5086 = vpack.c.b16 %v5049, %v5048
    %v5087 = vpack.c.b16 %v5051, %v5050
    %v5088 = vpack.c.b16 %v5053, %v5052
    %v5089 = vpack.c.b16 %v5055, %v5054
    %v5090 = vpack.c.b16 %v5057, %v5056
    %v5091 = vpack.c.b16 %v5059, %v5058
    %5124 = vmatprep.subr.bf16.mxu0 0
    %5125 = vmatpush1.bf16.msra.mxu0 %v5060
    %5126 = vmatprep.subr.bf16.mxu0 0
    %5127 = vmatpush1.bf16.msra.mxu0 %v5061
    %5128 = vmatprep.subr.bf16.mxu0 0
    %5129 = vmatpush1.bf16.msra.mxu0 %v5062
    %5130 = vmatprep.subr.bf16.mxu0 0
    %5131 = vmatpush1.bf16.msra.mxu0 %v5063
    %5132 = vmatprep.subr.bf16.mxu0 0
    %5133 = vmatpush1.bf16.msra.mxu0 %v5064
    %5134 = vmatprep.subr.bf16.mxu0 0
    %5135 = vmatpush1.bf16.msra.mxu0 %v5065
    %5136 = vmatprep.subr.bf16.mxu0 0
    %5137 = vmatpush1.bf16.msra.mxu0 %v5066
    %5138 = vmatprep.subr.bf16.mxu0 0
    %5139 = vmatpush1.bf16.msra.mxu0 %v5067
    %5140 = vmatprep.subr.bf16.mxu0 0
    %5141 = vmatpush1.bf16.msra.mxu0 %v5068
    %5142 = vmatprep.subr.bf16.mxu0 0
    %5143 = vmatpush1.bf16.msra.mxu0 %v5069
    %5144 = vmatprep.subr.bf16.mxu0 0
    %5145 = vmatpush1.bf16.msra.mxu0 %v5070
    %5146 = vmatprep.subr.bf16.mxu0 0
    %5147 = vmatpush1.bf16.msra.mxu0 %v5071
    %5148 = vmatprep.subr.bf16.mxu0 0
    %5149 = vmatpush1.bf16.msra.mxu0 %v5072
    %5150 = vmatprep.subr.bf16.mxu0 0
    %5151 = vmatpush1.bf16.msra.mxu0 %v5073
    %5152 = vmatprep.subr.bf16.mxu0 0
    %5153 = vmatpush1.bf16.msra.mxu0 %v5074
    %5154 = vmatprep.subr.bf16.mxu0 0
    %5155 = vmatpush1.bf16.msra.mxu0 %v5075
    %5156 = vmatprep.mubr.bf16.mxu0 %v4922
    %5157 = vmatmul.mubr.bf16.gmra.mrb[0].mxu0 %v4921
    %v5158 = vpop.f32.mrb[0].mxu0
    %v5159 = vadd.f32 %v4930, %v5158
    %v5160 = vpop.f32.mrb[0].mxu0
    %v5161 = vpop.f32.mrb[0].mxu0
    %v5162 = vpop.f32.mrb[0].mxu0
    %5163 = vdwg.mxu0
    %5164 = vmatprep.subr.bf16.mxu0 0
    %5165 = vmatpush1.bf16.msra.mxu0 %v5076
    %5166 = vmatprep.subr.bf16.mxu0 0
    %5167 = vmatpush1.bf16.msra.mxu0 %v5077
    %5168 = vmatprep.subr.bf16.mxu0 0
    %5169 = vmatpush1.bf16.msra.mxu0 %v5078
    %5170 = vmatprep.subr.bf16.mxu0 0
    %5171 = vmatpush1.bf16.msra.mxu0 %v5079
    %5172 = vmatprep.subr.bf16.mxu0 0
    %5173 = vmatpush1.bf16.msra.mxu0 %v5080
    %5174 = vmatprep.subr.bf16.mxu0 0
    %5175 = vmatpush1.bf16.msra.mxu0 %v5081
    %5176 = vmatprep.subr.bf16.mxu0 0
    %5177 = vmatpush1.bf16.msra.mxu0 %v5082
    %5178 = vmatprep.subr.bf16.mxu0 0
    %5179 = vmatpush1.bf16.msra.mxu0 %v5083
    %5180 = vmatprep.subr.bf16.mxu0 0
    %5181 = vmatpush1.bf16.msra.mxu0 %v5084
    %5182 = vmatprep.subr.bf16.mxu0 0
    %5183 = vmatpush1.bf16.msra.mxu0 %v5085
    %5184 = vmatprep.subr.bf16.mxu0 0
    %5185 = vmatpush1.bf16.msra.mxu0 %v5086
    %5186 = vmatprep.subr.bf16.mxu0 0
    %5187 = vmatpush1.bf16.msra.mxu0 %v5087
    %5188 = vmatprep.subr.bf16.mxu0 0
    %5189 = vmatpush1.bf16.msra.mxu0 %v5088
    %5190 = vmatprep.subr.bf16.mxu0 0
    %5191 = vmatpush1.bf16.msra.mxu0 %v5089
    %5192 = vmatprep.subr.bf16.mxu0 0
    %5193 = vmatpush1.bf16.msra.mxu0 %v5090
    %5194 = vmatprep.subr.bf16.mxu0 0
    %5195 = vmatpush1.bf16.msra.mxu0 %v5091
    %5196 = vmatprep.mubr.bf16.mxu0 %v4924
    %5197 = vmatmul.mubr.bf16.gmra.mrb[0].mxu0 %v4923
    %v5198 = vpop.f32.mrb[0].mxu0
    %v5199 = vadd.f32 %v5159, %v5198
    %v5200 = vpop.f32.mrb[0].mxu0
    %v5201 = vpop.f32.mrb[0].mxu0
    %v5202 = vpop.f32.mrb[0].mxu0
    %5203 = vdwg.mxu0
    %5204 = vst [vmem:[#allocation7] sm:$0x3] %v5199
    // Predicated region
    $region54: #{forward.1} parent=1 // pred_check
      _
    $region55: #{forward.1} parent=1 // pred_check_branch
      %5206 = sbr.rel (0) target = $region57
    $region56: #{forward.1} parent=1 // pred_region
      %s5208 = ssub.s32 32, 32
      %5209 = vsyncadd [#allocation4], %s5208
      %s5211 = sshll.u32 [#allocation7], 4
      %s5212 = int_to_ptr.vmem [resolvable:$true] %s5211
      %5214 = dma.vmem_to_hbm [thread:$0]  %s5212, 32, %s11, [#allocation4]
    $region57: #{forward.1} parent=1 // pred_fallthru
      _
    // Predicated region
    $region58: #{forward.1} parent=1 // pred_check
      _
    $region59: #{forward.1} parent=1 // pred_check_branch
      %5216 = sbr.rel (0) target = $region61
    $region60: #{forward.1} parent=1 // pred_region
      %5217 = dma.done [#allocation4], 32
    $region61: #{forward.1} parent=1 // pred_fallthru
      _
    %5218 = vsyncpa [#allocation3], 1
    %5219 = vsyncpa [#allocation6], 1
    %5220 = vsyncpa [#allocation4], 1

</llo_original>
